<compile_context>
chip_gen: v7x
topology: tpu7x:2x2x1
jax: 0.10.0
libtpu: 0.0.40
codegen_flags: <defaults>
</compile_context>

<pallas_src>
import functools

import jax
import jax.numpy as jnp
from jax import lax
from jax.experimental import pallas as pl
from jax.experimental.pallas import tpu as pltpu

# ----------------------------- configuration --------------------------------
VOCAB      = 64
EMBED      = 32
NUM_HEADS  = 4
HEAD_DIM   = EMBED // NUM_HEADS
HIDDEN     = 64
NUM_LAYERS = 2
MAX_LEN    = 64
EPS        = 1e-5
SCALE      = 1.0 / float(HEAD_DIM) ** 0.5
VOCAB_PAD  = ((VOCAB + 127) // 128) * 128        # lane-dense logits store

_QK_DIMS = (((1,), (1,)), ((), ()))              # q @ k^T without explicit .T


def _layer_norm(h, g, b):
    mu  = jnp.mean(h, axis=-1, keepdims=True)
    var = jnp.mean((h - mu) ** 2, axis=-1, keepdims=True)
    return (h - mu) * lax.rsqrt(var + EPS) * g + b


# ------------------------------ Pallas kernel --------------------------------
def decoder_kernel(ids_ref, tok_emb_ref, pos_ref,
                   wqkv_ref, bqkv_ref, wo_ref, bo_ref,
                   ln1g_ref, ln1b_ref, w1_ref, b1_ref, w2_ref, b2_ref,
                   ln2g_ref, ln2b_ref, fcw_ref, fcb_ref, o_ref,
                   *, batch, seq):
    """Fully fused decoder forward for all B*S tokens in one invocation."""
    n_tok = batch * seq

    # --- embedding: one-hot matmul gather (stays on MXU, fully in VMEM) ------
    ids    = ids_ref[...]                                             # (N,1) i32
    iota   = lax.broadcasted_iota(jnp.int32, (n_tok, VOCAB), 1)
    onehot = (iota == ids).astype(jnp.float32)                        # (N,V)
    x = jnp.dot(onehot, tok_emb_ref[...], preferred_element_type=jnp.float32)
    x = x + jnp.concatenate([pos_ref[...]] * batch, axis=0)           # (N,D)

    # --- all transformer blocks, statically unrolled; activations in vregs ---
    # NOTE: matmul inputs kept f32 (compute is not the bottleneck at this size
    # and v5e has no bf16 VPU); cast to bf16 here if D/S are scaled up on v6e+.
    for l in range(NUM_LAYERS):
        wqkv, bqkv = wqkv_ref[l], bqkv_ref[l]
        wo,   bo   = wo_ref[l],   bo_ref[l]
        ln1g, ln1b = ln1g_ref[l], ln1b_ref[l]
        w1,   b1   = w1_ref[l],   b1_ref[l]
        w2,   b2   = w2_ref[l],   b2_ref[l]
        ln2g, ln2b = ln2g_ref[l], ln2b_ref[l]

        # fused QKV projection over all tokens at once: (N,D) @ (D,3D)
        qkv = jnp.dot(x, wqkv, preferred_element_type=jnp.float32) + bqkv

        # multi-head attention; output projection folded into the head loop so
        # no lane-axis concatenate of head outputs is ever materialized.
        attn = jnp.zeros((n_tok, EMBED), jnp.float32)
        for h in range(NUM_HEADS):                     # static unroll
            qc = h * HEAD_DIM
            kc = EMBED + h * HEAD_DIM
            vc = 2 * EMBED + h * HEAD_DIM
            head_rows = []
            for b in range(batch):                     # static unroll (tiny)
                r0 = b * seq
                qh = qkv[r0:r0 + seq, qc:qc + HEAD_DIM]
                kh = qkv[r0:r0 + seq, kc:kc + HEAD_DIM]
                vh = qkv[r0:r0 + seq, vc:vc + HEAD_DIM]
                s = lax.dot_general(qh, kh, _QK_DIMS,
                                    preferred_element_type=jnp.float32) * SCALE
                s = s - jnp.max(s, axis=-1, keepdims=True)
                p = jnp.exp(s)
                p = p * pl.reciprocal(jnp.sum(p, axis=-1, keepdims=True),
                                      approx=True)
                head_rows.append(jnp.dot(p, vh,
                                         preferred_element_type=jnp.float32))
            oh = jnp.concatenate(head_rows, axis=0)    # sublane concat, (N,Dh)
            attn = attn + jnp.dot(oh, wo[qc:qc + HEAD_DIM, :],
                                  preferred_element_type=jnp.float32)
        attn = attn + bo

        # residual + LayerNorm 1
        h1 = _layer_norm(x + attn, ln1g, ln1b)

        # feed-forward over all tokens: (N,D)@(D,H) -> ReLU -> (N,H)@(H,D)
        f = jnp.maximum(jnp.dot(h1, w1, preferred_element_type=jnp.float32) + b1,
                        0.0)
        f = jnp.dot(f, w2, preferred_element_type=jnp.float32) + b2

        # residual + LayerNorm 2
        x = _layer_norm(h1 + f, ln2g, ln2b)

    # --- final vocab projection, padded to 128 lanes (unmasked stores) -------
    o_ref[...] = (jnp.dot(x, fcw_ref[...], preferred_element_type=jnp.float32)
                  + fcb_ref[...])


# ------------------------------ wrappers --------------------------------------
_LAYER_KEYS = ('wqkv', 'bqkv', 'wo', 'bo', 'ln1g', 'ln1b',
               'w1', 'b1', 'w2', 'b2', 'ln2g', 'ln2b')


def pack_params(params):
    """Stack per-layer weights on a leading layer axis; pad the vocab proj."""
    packed = {k: jnp.stack([lp[k] for lp in params['layers']], axis=0)
              for k in _LAYER_KEYS}
    packed['token_emb'] = params['token_emb']
    packed['pos_emb']   = params['pos_emb']
    packed['fc_w'] = jnp.pad(params['fc_w'], ((0, 0), (0, VOCAB_PAD - VOCAB)))
    packed['fc_b'] = jnp.pad(params['fc_b'], ((0, 0), (0, VOCAB_PAD - VOCAB)))
    return packed


@jax.jit
def decoder_forward(token_ids, packed):
    B, S = token_ids.shape
    ids  = token_ids.reshape(B * S, 1).astype(jnp.int32)
    pos  = packed['pos_emb'][:S]
    args = ([ids, packed['token_emb'], pos]
            + [packed[k] for k in _LAYER_KEYS]
            + [packed['fc_w'], packed['fc_b']])
    kernel = functools.partial(decoder_kernel, batch=B, seq=S)
    logits = pl.pallas_call(
        kernel,
        out_shape=jax.ShapeDtypeStruct((B * S, VOCAB_PAD), jnp.float32),
        in_specs=[pl.BlockSpec(memory_space=pltpu.MemorySpace.VMEM)] * len(args),
        out_specs=pl.BlockSpec(memory_space=pltpu.MemorySpace.VMEM),
    )(*args)
    return logits[:, :VOCAB].reshape(B, S, VOCAB)


# ---------------------- deterministic parameter init -------------------------
def init_params(key):
    keys = jax.random.split(key, 4 + NUM_LAYERS)
    params = {
        'token_emb': jax.random.normal(keys[0], (VOCAB, EMBED), jnp.float32) * 0.02,
        'pos_emb':   jax.random.normal(keys[1], (MAX_LEN, EMBED), jnp.float32) * 0.02,
        'fc_w':      jax.random.normal(keys[2], (EMBED, VOCAB), jnp.float32) * 0.05,
        'fc_b':      jnp.zeros((1, VOCAB), jnp.float32),
    }
    layers = []
    for l in range(NUM_LAYERS):
        lk = jax.random.split(keys[4 + l], 4)
        layers.append(dict(
            wqkv=jax.random.normal(lk[0], (EMBED, 3 * EMBED), jnp.float32) * 0.05,
            bqkv=jnp.zeros((1, 3 * EMBED), jnp.float32),
            wo=jax.random.normal(lk[1], (EMBED, EMBED), jnp.float32) * 0.05,
            bo=jnp.zeros((1, EMBED), jnp.float32),
            ln1g=jnp.ones((1, EMBED), jnp.float32),
            ln1b=jnp.zeros((1, EMBED), jnp.float32),
            w1=jax.random.normal(lk[2], (EMBED, HIDDEN), jnp.float32) * 0.05,
            b1=jnp.zeros((1, HIDDEN), jnp.float32),
            w2=jax.random.normal(lk[3], (HIDDEN, EMBED), jnp.float32) * 0.05,
            b2=jnp.zeros((1, EMBED), jnp.float32),
            ln2g=jnp.ones((1, EMBED), jnp.float32),
            ln2b=jnp.zeros((1, EMBED), jnp.float32),
        ))
    params['layers'] = layers
    return params


# ------------------------- pure-JAX reference --------------------------------
def reference_forward(token_ids, params):
    B, S = token_ids.shape
    x = params['token_emb'][token_ids] + params['pos_emb'][jnp.arange(S)][None]
    for lp in params['layers']:
        qkv = x @ lp['wqkv'] + lp['bqkv'][0]
        q, k, v = jnp.split(qkv, 3, axis=-1)
        sh = lambda t: t.reshape(B, S, NUM_HEADS, HEAD_DIM).transpose(0, 2, 1, 3)
        qh, kh, vh = sh(q), sh(k), sh(v)
        s = jnp.einsum('bhqd,bhkd->bhqk', qh, kh) * SCALE
        p = jax.nn.softmax(s, axis=-1)
        a = jnp.einsum('bhqk,bhkd->bhqd', p, vh)
        a = a.transpose(0, 2, 1, 3).reshape(B, S, EMBED)
        a = a @ lp['wo'] + lp['bo'][0]
        h1 = _layer_norm(x + a, lp['ln1g'][0], lp['ln1b'][0])
        f = jnp.maximum(h1 @ lp['w1'] + lp['b1'][0], 0.0) @ lp['w2'] + lp['b2'][0]
        x = _layer_norm(h1 + f, lp['ln2g'][0], lp['ln2b'][0])
    return x @ params['fc_w'] + params['fc_b'][0]


# --------------------------------- main ---------------------------------------
if __name__ == "__main__":
    key = jax.random.PRNGKey(0)
    pkey, xkey = jax.random.split(key)
    params = init_params(pkey)
    packed = pack_params(params)

    B, S = 2, 8
    token_ids = jax.random.randint(xkey, (B, S), 0, VOCAB, dtype=jnp.int32)

    logits = decoder_forward(token_ids, packed)
    logits = jax.block_until_ready(logits)

    ref = reference_forward(token_ids, params)
    assert logits.shape == (B, S, VOCAB), logits.shape
    assert bool(jnp.all(jnp.isfinite(logits)))
    assert bool(jnp.allclose(logits, ref, atol=2e-2, rtol=2e-2)), \
        float(jnp.max(jnp.abs(logits - ref)))

    print("KERNEL_OK")
</pallas_src>

<mosaic_0001>
module attributes {stable_mosaic.version = 11 : i64} {
  func.func @decoder_kernel(%arg0: memref<16x1xi32, #tpu.memory_space<vmem>>, %arg1: memref<64x32xf32, #tpu.memory_space<vmem>>, %arg2: memref<8x32xf32, #tpu.memory_space<vmem>>, %arg3: memref<2x32x96xf32, #tpu.memory_space<vmem>>, %arg4: memref<2x1x96xf32, #tpu.memory_space<vmem>>, %arg5: memref<2x32x32xf32, #tpu.memory_space<vmem>>, %arg6: memref<2x1x32xf32, #tpu.memory_space<vmem>>, %arg7: memref<2x1x32xf32, #tpu.memory_space<vmem>>, %arg8: memref<2x1x32xf32, #tpu.memory_space<vmem>>, %arg9: memref<2x32x64xf32, #tpu.memory_space<vmem>>, %arg10: memref<2x1x64xf32, #tpu.memory_space<vmem>>, %arg11: memref<2x64x32xf32, #tpu.memory_space<vmem>>, %arg12: memref<2x1x32xf32, #tpu.memory_space<vmem>>, %arg13: memref<2x1x32xf32, #tpu.memory_space<vmem>>, %arg14: memref<2x1x32xf32, #tpu.memory_space<vmem>>, %arg15: memref<32x128xf32, #tpu.memory_space<vmem>>, %arg16: memref<1x128xf32, #tpu.memory_space<vmem>>, %arg17: memref<16x128xf32, #tpu.memory_space<vmem>>) attributes {dimension_semantics = [], scalar_prefetch = 0 : i64, scratch_operands = 0 : i64, tpu.core_type = #tpu.core_type<tc>} {
    %c0 = arith.constant 0 : index
    %c0_0 = arith.constant 0 : index
    %0 = vector.load %arg0[%c0, %c0_0] : memref<16x1xi32, #tpu.memory_space<vmem>>, vector<16x1xi32>
    %1 = tpu.iota {dimensions = array<i32: 1>} : vector<16x64xi32>
    %2 = vector.broadcast %0 : vector<16x1xi32> to vector<16x64xi32>
    %3 = arith.cmpi eq, %1, %2 : vector<16x64xi32>
    %4 = arith.extui %3 : vector<16x64xi1> to vector<16x64xi32>
    %5 = arith.sitofp %4 : vector<16x64xi32> to vector<16x64xf32>
    %c0_1 = arith.constant 0 : index
    %c0_2 = arith.constant 0 : index
    %6 = vector.load %arg1[%c0_1, %c0_2] : memref<64x32xf32, #tpu.memory_space<vmem>>, vector<64x32xf32>
    %cst = arith.constant dense<0.000000e+00> : vector<16x32xf32>
    %7 = tpu.matmul %5, %6, %cst {dimension_numbers = #tpu.dot_dimension_numbers<[1], [0], [0], [1], [0, 0, 1, 1], [], []>} : vector<16x64xf32>, vector<64x32xf32>, vector<16x32xf32> -> vector<16x32xf32>
    %c0_3 = arith.constant 0 : index
    %c0_4 = arith.constant 0 : index
    %8 = vector.load %arg2[%c0_3, %c0_4] : memref<8x32xf32, #tpu.memory_space<vmem>>, vector<8x32xf32>
    %9 = tpu.concatenate %8, %8 in 0 : vector<8x32xf32>, vector<8x32xf32> -> vector<16x32xf32>
    %10 = arith.addf %7, %9 : vector<16x32xf32>
    %c0_5 = arith.constant 0 : index
    %c0_6 = arith.constant 0 : index
    %c0_7 = arith.constant 0 : index
    %11 = vector.load %arg3[%c0_5, %c0_6, %c0_7] : memref<2x32x96xf32, #tpu.memory_space<vmem>>, vector<1x32x96xf32>
    %12 = vector.shape_cast %11 : vector<1x32x96xf32> to vector<32x96xf32>
    %c0_8 = arith.constant 0 : index
    %c0_9 = arith.constant 0 : index
    %c0_10 = arith.constant 0 : index
    %13 = vector.load %arg4[%c0_8, %c0_9, %c0_10] : memref<2x1x96xf32, #tpu.memory_space<vmem>>, vector<1x1x96xf32>
    %14 = vector.shape_cast %13 : vector<1x1x96xf32> to vector<1x96xf32>
    %c0_11 = arith.constant 0 : index
    %c0_12 = arith.constant 0 : index
    %c0_13 = arith.constant 0 : index
    %15 = vector.load %arg5[%c0_11, %c0_12, %c0_13] : memref<2x32x32xf32, #tpu.memory_space<vmem>>, vector<1x32x32xf32>
    %16 = vector.shape_cast %15 : vector<1x32x32xf32> to vector<32x32xf32>
    %c0_14 = arith.constant 0 : index
    %c0_15 = arith.constant 0 : index
    %c0_16 = arith.constant 0 : index
    %17 = vector.load %arg6[%c0_14, %c0_15, %c0_16] : memref<2x1x32xf32, #tpu.memory_space<vmem>>, vector<1x1x32xf32>
    %18 = vector.shape_cast %17 : vector<1x1x32xf32> to vector<1x32xf32>
    %c0_17 = arith.constant 0 : index
    %c0_18 = arith.constant 0 : index
    %c0_19 = arith.constant 0 : index
    %19 = vector.load %arg7[%c0_17, %c0_18, %c0_19] : memref<2x1x32xf32, #tpu.memory_space<vmem>>, vector<1x1x32xf32>
    %20 = vector.shape_cast %19 : vector<1x1x32xf32> to vector<1x32xf32>
    %c0_20 = arith.constant 0 : index
    %c0_21 = arith.constant 0 : index
    %c0_22 = arith.constant 0 : index
    %21 = vector.load %arg8[%c0_20, %c0_21, %c0_22] : memref<2x1x32xf32, #tpu.memory_space<vmem>>, vector<1x1x32xf32>
    %22 = vector.shape_cast %21 : vector<1x1x32xf32> to vector<1x32xf32>
    %c0_23 = arith.constant 0 : index
    %c0_24 = arith.constant 0 : index
    %c0_25 = arith.constant 0 : index
    %23 = vector.load %arg9[%c0_23, %c0_24, %c0_25] : memref<2x32x64xf32, #tpu.memory_space<vmem>>, vector<1x32x64xf32>
    %24 = vector.shape_cast %23 : vector<1x32x64xf32> to vector<32x64xf32>
    %c0_26 = arith.constant 0 : index
    %c0_27 = arith.constant 0 : index
    %c0_28 = arith.constant 0 : index
    %25 = vector.load %arg10[%c0_26, %c0_27, %c0_28] : memref<2x1x64xf32, #tpu.memory_space<vmem>>, vector<1x1x64xf32>
    %26 = vector.shape_cast %25 : vector<1x1x64xf32> to vector<1x64xf32>
    %c0_29 = arith.constant 0 : index
    %c0_30 = arith.constant 0 : index
    %c0_31 = arith.constant 0 : index
    %27 = vector.load %arg11[%c0_29, %c0_30, %c0_31] : memref<2x64x32xf32, #tpu.memory_space<vmem>>, vector<1x64x32xf32>
    %28 = vector.shape_cast %27 : vector<1x64x32xf32> to vector<64x32xf32>
    %c0_32 = arith.constant 0 : index
    %c0_33 = arith.constant 0 : index
    %c0_34 = arith.constant 0 : index
    %29 = vector.load %arg12[%c0_32, %c0_33, %c0_34] : memref<2x1x32xf32, #tpu.memory_space<vmem>>, vector<1x1x32xf32>
    %30 = vector.shape_cast %29 : vector<1x1x32xf32> to vector<1x32xf32>
    %c0_35 = arith.constant 0 : index
    %c0_36 = arith.constant 0 : index
    %c0_37 = arith.constant 0 : index
    %31 = vector.load %arg13[%c0_35, %c0_36, %c0_37] : memref<2x1x32xf32, #tpu.memory_space<vmem>>, vector<1x1x32xf32>
    %32 = vector.shape_cast %31 : vector<1x1x32xf32> to vector<1x32xf32>
    %c0_38 = arith.constant 0 : index
    %c0_39 = arith.constant 0 : index
    %c0_40 = arith.constant 0 : index
    %33 = vector.load %arg14[%c0_38, %c0_39, %c0_40] : memref<2x1x32xf32, #tpu.memory_space<vmem>>, vector<1x1x32xf32>
    %34 = vector.shape_cast %33 : vector<1x1x32xf32> to vector<1x32xf32>
    %cst_41 = arith.constant dense<0.000000e+00> : vector<16x96xf32>
    %35 = tpu.matmul %10, %12, %cst_41 {dimension_numbers = #tpu.dot_dimension_numbers<[1], [0], [0], [1], [0, 0, 1, 1], [], []>} : vector<16x32xf32>, vector<32x96xf32>, vector<16x96xf32> -> vector<16x96xf32>
    %36 = vector.broadcast %14 : vector<1x96xf32> to vector<16x96xf32>
    %37 = arith.addf %35, %36 : vector<16x96xf32>
    %cst_42 = arith.constant 0.000000e+00 : f32
    %38 = vector.broadcast %cst_42 : f32 to vector<16x32xf32>
    %39 = vector.extract_strided_slice %37 {offsets = [0, 0], sizes = [8, 8], strides = [1, 1]} : vector<16x96xf32> to vector<8x8xf32>
    %40 = vector.extract_strided_slice %37 {offsets = [0, 32], sizes = [8, 8], strides = [1, 1]} : vector<16x96xf32> to vector<8x8xf32>
    %41 = vector.extract_strided_slice %37 {offsets = [0, 64], sizes = [8, 8], strides = [1, 1]} : vector<16x96xf32> to vector<8x8xf32>
    %cst_43 = arith.constant dense<0.000000e+00> : vector<8x8xf32>
    %42 = tpu.matmul %39, %40, %cst_43 {dimension_numbers = #tpu.dot_dimension_numbers<[1], [1], [0], [0], [0, 0, 1, 0], [], []>} : vector<8x8xf32>, vector<8x8xf32>, vector<8x8xf32> -> vector<8x8xf32>
    %cst_44 = arith.constant 0.353553385 : f32
    %43 = vector.broadcast %cst_44 : f32 to vector<8x8xf32>
    %44 = arith.mulf %42, %43 : vector<8x8xf32>
    %cst_45 = arith.constant dense<0xFF800000> : vector<8xf32>
    %45 = vector.multi_reduction <maximumf>, %44, %cst_45 [1] : vector<8x8xf32> to vector<8xf32>
    %46 = vector.shape_cast %45 : vector<8xf32> to vector<8x1xf32>
    %47 = vector.broadcast %46 : vector<8x1xf32> to vector<8x8xf32>
    %48 = arith.subf %44, %47 : vector<8x8xf32>
    %49 = math.exp %48 : vector<8x8xf32>
    %cst_46 = arith.constant dense<0.000000e+00> : vector<8xf32>
    %50 = vector.multi_reduction <add>, %49, %cst_46 [1] : vector<8x8xf32> to vector<8xf32>
    %51 = vector.shape_cast %50 : vector<8xf32> to vector<8x1xf32>
    %52 = tpu.reciprocal %51 {approx = true} : vector<8x1xf32> -> vector<8x1xf32>
    %53 = vector.broadcast %52 : vector<8x1xf32> to vector<8x8xf32>
    %54 = arith.mulf %49, %53 : vector<8x8xf32>
    %cst_47 = arith.constant dense<0.000000e+00> : vector<8x8xf32>
    %55 = tpu.matmul %54, %41, %cst_47 {dimension_numbers = #tpu.dot_dimension_numbers<[1], [0], [0], [1], [0, 0, 1, 1], [], []>} : vector<8x8xf32>, vector<8x8xf32>, vector<8x8xf32> -> vector<8x8xf32>
    %56 = vector.extract_strided_slice %37 {offsets = [8, 0], sizes = [8, 8], strides = [1, 1]} : vector<16x96xf32> to vector<8x8xf32>
    %57 = vector.extract_strided_slice %37 {offsets = [8, 32], sizes = [8, 8], strides = [1, 1]} : vector<16x96xf32> to vector<8x8xf32>
    %58 = vector.extract_strided_slice %37 {offsets = [8, 64], sizes = [8, 8], strides = [1, 1]} : vector<16x96xf32> to vector<8x8xf32>
    %cst_48 = arith.constant dense<0.000000e+00> : vector<8x8xf32>
    %59 = tpu.matmul %56, %57, %cst_48 {dimension_numbers = #tpu.dot_dimension_numbers<[1], [1], [0], [0], [0, 0, 1, 0], [], []>} : vector<8x8xf32>, vector<8x8xf32>, vector<8x8xf32> -> vector<8x8xf32>
    %cst_49 = arith.constant 0.353553385 : f32
    %60 = vector.broadcast %cst_49 : f32 to vector<8x8xf32>
    %61 = arith.mulf %59, %60 : vector<8x8xf32>
    %cst_50 = arith.constant dense<0xFF800000> : vector<8xf32>
    %62 = vector.multi_reduction <maximumf>, %61, %cst_50 [1] : vector<8x8xf32> to vector<8xf32>
    %63 = vector.shape_cast %62 : vector<8xf32> to vector<8x1xf32>
    %64 = vector.broadcast %63 : vector<8x1xf32> to vector<8x8xf32>
    %65 = arith.subf %61, %64 : vector<8x8xf32>
    %66 = math.exp %65 : vector<8x8xf32>
    %cst_51 = arith.constant dense<0.000000e+00> : vector<8xf32>
    %67 = vector.multi_reduction <add>, %66, %cst_51 [1] : vector<8x8xf32> to vector<8xf32>
    %68 = vector.shape_cast %67 : vector<8xf32> to vector<8x1xf32>
    %69 = tpu.reciprocal %68 {approx = true} : vector<8x1xf32> -> vector<8x1xf32>
    %70 = vector.broadcast %69 : vector<8x1xf32> to vector<8x8xf32>
    %71 = arith.mulf %66, %70 : vector<8x8xf32>
    %cst_52 = arith.constant dense<0.000000e+00> : vector<8x8xf32>
    %72 = tpu.matmul %71, %58, %cst_52 {dimension_numbers = #tpu.dot_dimension_numbers<[1], [0], [0], [1], [0, 0, 1, 1], [], []>} : vector<8x8xf32>, vector<8x8xf32>, vector<8x8xf32> -> vector<8x8xf32>
    %73 = tpu.concatenate %55, %72 in 0 : vector<8x8xf32>, vector<8x8xf32> -> vector<16x8xf32>
    %74 = vector.extract_strided_slice %16 {offsets = [0, 0], sizes = [8, 32], strides = [1, 1]} : vector<32x32xf32> to vector<8x32xf32>
    %cst_53 = arith.constant dense<0.000000e+00> : vector<16x32xf32>
    %75 = tpu.matmul %73, %74, %cst_53 {dimension_numbers = #tpu.dot_dimension_numbers<[1], [0], [0], [1], [0, 0, 1, 1], [], []>} : vector<16x8xf32>, vector<8x32xf32>, vector<16x32xf32> -> vector<16x32xf32>
    %76 = arith.addf %38, %75 : vector<16x32xf32>
    %77 = vector.extract_strided_slice %37 {offsets = [0, 8], sizes = [8, 8], strides = [1, 1]} : vector<16x96xf32> to vector<8x8xf32>
    %78 = vector.extract_strided_slice %37 {offsets = [0, 40], sizes = [8, 8], strides = [1, 1]} : vector<16x96xf32> to vector<8x8xf32>
    %79 = vector.extract_strided_slice %37 {offsets = [0, 72], sizes = [8, 8], strides = [1, 1]} : vector<16x96xf32> to vector<8x8xf32>
    %cst_54 = arith.constant dense<0.000000e+00> : vector<8x8xf32>
    %80 = tpu.matmul %77, %78, %cst_54 {dimension_numbers = #tpu.dot_dimension_numbers<[1], [1], [0], [0], [0, 0, 1, 0], [], []>} : vector<8x8xf32>, vector<8x8xf32>, vector<8x8xf32> -> vector<8x8xf32>
    %cst_55 = arith.constant 0.353553385 : f32
    %81 = vector.broadcast %cst_55 : f32 to vector<8x8xf32>
    %82 = arith.mulf %80, %81 : vector<8x8xf32>
    %cst_56 = arith.constant dense<0xFF800000> : vector<8xf32>
    %83 = vector.multi_reduction <maximumf>, %82, %cst_56 [1] : vector<8x8xf32> to vector<8xf32>
    %84 = vector.shape_cast %83 : vector<8xf32> to vector<8x1xf32>
    %85 = vector.broadcast %84 : vector<8x1xf32> to vector<8x8xf32>
    %86 = arith.subf %82, %85 : vector<8x8xf32>
    %87 = math.exp %86 : vector<8x8xf32>
    %cst_57 = arith.constant dense<0.000000e+00> : vector<8xf32>
    %88 = vector.multi_reduction <add>, %87, %cst_57 [1] : vector<8x8xf32> to vector<8xf32>
    %89 = vector.shape_cast %88 : vector<8xf32> to vector<8x1xf32>
    %90 = tpu.reciprocal %89 {approx = true} : vector<8x1xf32> -> vector<8x1xf32>
    %91 = vector.broadcast %90 : vector<8x1xf32> to vector<8x8xf32>
    %92 = arith.mulf %87, %91 : vector<8x8xf32>
    %cst_58 = arith.constant dense<0.000000e+00> : vector<8x8xf32>
    %93 = tpu.matmul %92, %79, %cst_58 {dimension_numbers = #tpu.dot_dimension_numbers<[1], [0], [0], [1], [0, 0, 1, 1], [], []>} : vector<8x8xf32>, vector<8x8xf32>, vector<8x8xf32> -> vector<8x8xf32>
    %94 = vector.extract_strided_slice %37 {offsets = [8, 8], sizes = [8, 8], strides = [1, 1]} : vector<16x96xf32> to vector<8x8xf32>
    %95 = vector.extract_strided_slice %37 {offsets = [8, 40], sizes = [8, 8], strides = [1, 1]} : vector<16x96xf32> to vector<8x8xf32>
    %96 = vector.extract_strided_slice %37 {offsets = [8, 72], sizes = [8, 8], strides = [1, 1]} : vector<16x96xf32> to vector<8x8xf32>
    %cst_59 = arith.constant dense<0.000000e+00> : vector<8x8xf32>
    %97 = tpu.matmul %94, %95, %cst_59 {dimension_numbers = #tpu.dot_dimension_numbers<[1], [1], [0], [0], [0, 0, 1, 0], [], []>} : vector<8x8xf32>, vector<8x8xf32>, vector<8x8xf32> -> vector<8x8xf32>
    %cst_60 = arith.constant 0.353553385 : f32
    %98 = vector.broadcast %cst_60 : f32 to vector<8x8xf32>
    %99 = arith.mulf %97, %98 : vector<8x8xf32>
    %cst_61 = arith.constant dense<0xFF800000> : vector<8xf32>
    %100 = vector.multi_reduction <maximumf>, %99, %cst_61 [1] : vector<8x8xf32> to vector<8xf32>
    %101 = vector.shape_cast %100 : vector<8xf32> to vector<8x1xf32>
    %102 = vector.broadcast %101 : vector<8x1xf32> to vector<8x8xf32>
    %103 = arith.subf %99, %102 : vector<8x8xf32>
    %104 = math.exp %103 : vector<8x8xf32>
    %cst_62 = arith.constant dense<0.000000e+00> : vector<8xf32>
    %105 = vector.multi_reduction <add>, %104, %cst_62 [1] : vector<8x8xf32> to vector<8xf32>
    %106 = vector.shape_cast %105 : vector<8xf32> to vector<8x1xf32>
    %107 = tpu.reciprocal %106 {approx = true} : vector<8x1xf32> -> vector<8x1xf32>
    %108 = vector.broadcast %107 : vector<8x1xf32> to vector<8x8xf32>
    %109 = arith.mulf %104, %108 : vector<8x8xf32>
    %cst_63 = arith.constant dense<0.000000e+00> : vector<8x8xf32>
    %110 = tpu.matmul %109, %96, %cst_63 {dimension_numbers = #tpu.dot_dimension_numbers<[1], [0], [0], [1], [0, 0, 1, 1], [], []>} : vector<8x8xf32>, vector<8x8xf32>, vector<8x8xf32> -> vector<8x8xf32>
    %111 = tpu.concatenate %93, %110 in 0 : vector<8x8xf32>, vector<8x8xf32> -> vector<16x8xf32>
    %112 = vector.extract_strided_slice %16 {offsets = [8, 0], sizes = [8, 32], strides = [1, 1]} : vector<32x32xf32> to vector<8x32xf32>
    %cst_64 = arith.constant dense<0.000000e+00> : vector<16x32xf32>
    %113 = tpu.matmul %111, %112, %cst_64 {dimension_numbers = #tpu.dot_dimension_numbers<[1], [0], [0], [1], [0, 0, 1, 1], [], []>} : vector<16x8xf32>, vector<8x32xf32>, vector<16x32xf32> -> vector<16x32xf32>
    %114 = arith.addf %76, %113 : vector<16x32xf32>
    %115 = vector.extract_strided_slice %37 {offsets = [0, 16], sizes = [8, 8], strides = [1, 1]} : vector<16x96xf32> to vector<8x8xf32>
    %116 = vector.extract_strided_slice %37 {offsets = [0, 48], sizes = [8, 8], strides = [1, 1]} : vector<16x96xf32> to vector<8x8xf32>
    %117 = vector.extract_strided_slice %37 {offsets = [0, 80], sizes = [8, 8], strides = [1, 1]} : vector<16x96xf32> to vector<8x8xf32>
    %cst_65 = arith.constant dense<0.000000e+00> : vector<8x8xf32>
    %118 = tpu.matmul %115, %116, %cst_65 {dimension_numbers = #tpu.dot_dimension_numbers<[1], [1], [0], [0], [0, 0, 1, 0], [], []>} : vector<8x8xf32>, vector<8x8xf32>, vector<8x8xf32> -> vector<8x8xf32>
    %cst_66 = arith.constant 0.353553385 : f32
    %119 = vector.broadcast %cst_66 : f32 to vector<8x8xf32>
    %120 = arith.mulf %118, %119 : vector<8x8xf32>
    %cst_67 = arith.constant dense<0xFF800000> : vector<8xf32>
    %121 = vector.multi_reduction <maximumf>, %120, %cst_67 [1] : vector<8x8xf32> to vector<8xf32>
    %122 = vector.shape_cast %121 : vector<8xf32> to vector<8x1xf32>
    %123 = vector.broadcast %122 : vector<8x1xf32> to vector<8x8xf32>
    %124 = arith.subf %120, %123 : vector<8x8xf32>
    %125 = math.exp %124 : vector<8x8xf32>
    %cst_68 = arith.constant dense<0.000000e+00> : vector<8xf32>
    %126 = vector.multi_reduction <add>, %125, %cst_68 [1] : vector<8x8xf32> to vector<8xf32>
    %127 = vector.shape_cast %126 : vector<8xf32> to vector<8x1xf32>
    %128 = tpu.reciprocal %127 {approx = true} : vector<8x1xf32> -> vector<8x1xf32>
    %129 = vector.broadcast %128 : vector<8x1xf32> to vector<8x8xf32>
    %130 = arith.mulf %125, %129 : vector<8x8xf32>
    %cst_69 = arith.constant dense<0.000000e+00> : vector<8x8xf32>
    %131 = tpu.matmul %130, %117, %cst_69 {dimension_numbers = #tpu.dot_dimension_numbers<[1], [0], [0], [1], [0, 0, 1, 1], [], []>} : vector<8x8xf32>, vector<8x8xf32>, vector<8x8xf32> -> vector<8x8xf32>
    %132 = vector.extract_strided_slice %37 {offsets = [8, 16], sizes = [8, 8], strides = [1, 1]} : vector<16x96xf32> to vector<8x8xf32>
    %133 = vector.extract_strided_slice %37 {offsets = [8, 48], sizes = [8, 8], strides = [1, 1]} : vector<16x96xf32> to vector<8x8xf32>
    %134 = vector.extract_strided_slice %37 {offsets = [8, 80], sizes = [8, 8], strides = [1, 1]} : vector<16x96xf32> to vector<8x8xf32>
    %cst_70 = arith.constant dense<0.000000e+00> : vector<8x8xf32>
    %135 = tpu.matmul %132, %133, %cst_70 {dimension_numbers = #tpu.dot_dimension_numbers<[1], [1], [0], [0], [0, 0, 1, 0], [], []>} : vector<8x8xf32>, vector<8x8xf32>, vector<8x8xf32> -> vector<8x8xf32>
    %cst_71 = arith.constant 0.353553385 : f32
    %136 = vector.broadcast %cst_71 : f32 to vector<8x8xf32>
    %137 = arith.mulf %135, %136 : vector<8x8xf32>
    %cst_72 = arith.constant dense<0xFF800000> : vector<8xf32>
    %138 = vector.multi_reduction <maximumf>, %137, %cst_72 [1] : vector<8x8xf32> to vector<8xf32>
    %139 = vector.shape_cast %138 : vector<8xf32> to vector<8x1xf32>
    %140 = vector.broadcast %139 : vector<8x1xf32> to vector<8x8xf32>
    %141 = arith.subf %137, %140 : vector<8x8xf32>
    %142 = math.exp %141 : vector<8x8xf32>
    %cst_73 = arith.constant dense<0.000000e+00> : vector<8xf32>
    %143 = vector.multi_reduction <add>, %142, %cst_73 [1] : vector<8x8xf32> to vector<8xf32>
    %144 = vector.shape_cast %143 : vector<8xf32> to vector<8x1xf32>
    %145 = tpu.reciprocal %144 {approx = true} : vector<8x1xf32> -> vector<8x1xf32>
    %146 = vector.broadcast %145 : vector<8x1xf32> to vector<8x8xf32>
    %147 = arith.mulf %142, %146 : vector<8x8xf32>
    %cst_74 = arith.constant dense<0.000000e+00> : vector<8x8xf32>
    %148 = tpu.matmul %147, %134, %cst_74 {dimension_numbers = #tpu.dot_dimension_numbers<[1], [0], [0], [1], [0, 0, 1, 1], [], []>} : vector<8x8xf32>, vector<8x8xf32>, vector<8x8xf32> -> vector<8x8xf32>
    %149 = tpu.concatenate %131, %148 in 0 : vector<8x8xf32>, vector<8x8xf32> -> vector<16x8xf32>
    %150 = vector.extract_strided_slice %16 {offsets = [16, 0], sizes = [8, 32], strides = [1, 1]} : vector<32x32xf32> to vector<8x32xf32>
    %cst_75 = arith.constant dense<0.000000e+00> : vector<16x32xf32>
    %151 = tpu.matmul %149, %150, %cst_75 {dimension_numbers = #tpu.dot_dimension_numbers<[1], [0], [0], [1], [0, 0, 1, 1], [], []>} : vector<16x8xf32>, vector<8x32xf32>, vector<16x32xf32> -> vector<16x32xf32>
    %152 = arith.addf %114, %151 : vector<16x32xf32>
    %153 = vector.extract_strided_slice %37 {offsets = [0, 24], sizes = [8, 8], strides = [1, 1]} : vector<16x96xf32> to vector<8x8xf32>
    %154 = vector.extract_strided_slice %37 {offsets = [0, 56], sizes = [8, 8], strides = [1, 1]} : vector<16x96xf32> to vector<8x8xf32>
    %155 = vector.extract_strided_slice %37 {offsets = [0, 88], sizes = [8, 8], strides = [1, 1]} : vector<16x96xf32> to vector<8x8xf32>
    %cst_76 = arith.constant dense<0.000000e+00> : vector<8x8xf32>
    %156 = tpu.matmul %153, %154, %cst_76 {dimension_numbers = #tpu.dot_dimension_numbers<[1], [1], [0], [0], [0, 0, 1, 0], [], []>} : vector<8x8xf32>, vector<8x8xf32>, vector<8x8xf32> -> vector<8x8xf32>
    %cst_77 = arith.constant 0.353553385 : f32
    %157 = vector.broadcast %cst_77 : f32 to vector<8x8xf32>
    %158 = arith.mulf %156, %157 : vector<8x8xf32>
    %cst_78 = arith.constant dense<0xFF800000> : vector<8xf32>
    %159 = vector.multi_reduction <maximumf>, %158, %cst_78 [1] : vector<8x8xf32> to vector<8xf32>
    %160 = vector.shape_cast %159 : vector<8xf32> to vector<8x1xf32>
    %161 = vector.broadcast %160 : vector<8x1xf32> to vector<8x8xf32>
    %162 = arith.subf %158, %161 : vector<8x8xf32>
    %163 = math.exp %162 : vector<8x8xf32>
    %cst_79 = arith.constant dense<0.000000e+00> : vector<8xf32>
    %164 = vector.multi_reduction <add>, %163, %cst_79 [1] : vector<8x8xf32> to vector<8xf32>
    %165 = vector.shape_cast %164 : vector<8xf32> to vector<8x1xf32>
    %166 = tpu.reciprocal %165 {approx = true} : vector<8x1xf32> -> vector<8x1xf32>
    %167 = vector.broadcast %166 : vector<8x1xf32> to vector<8x8xf32>
    %168 = arith.mulf %163, %167 : vector<8x8xf32>
    %cst_80 = arith.constant dense<0.000000e+00> : vector<8x8xf32>
    %169 = tpu.matmul %168, %155, %cst_80 {dimension_numbers = #tpu.dot_dimension_numbers<[1], [0], [0], [1], [0, 0, 1, 1], [], []>} : vector<8x8xf32>, vector<8x8xf32>, vector<8x8xf32> -> vector<8x8xf32>
    %170 = vector.extract_strided_slice %37 {offsets = [8, 24], sizes = [8, 8], strides = [1, 1]} : vector<16x96xf32> to vector<8x8xf32>
    %171 = vector.extract_strided_slice %37 {offsets = [8, 56], sizes = [8, 8], strides = [1, 1]} : vector<16x96xf32> to vector<8x8xf32>
    %172 = vector.extract_strided_slice %37 {offsets = [8, 88], sizes = [8, 8], strides = [1, 1]} : vector<16x96xf32> to vector<8x8xf32>
    %cst_81 = arith.constant dense<0.000000e+00> : vector<8x8xf32>
    %173 = tpu.matmul %170, %171, %cst_81 {dimension_numbers = #tpu.dot_dimension_numbers<[1], [1], [0], [0], [0, 0, 1, 0], [], []>} : vector<8x8xf32>, vector<8x8xf32>, vector<8x8xf32> -> vector<8x8xf32>
    %cst_82 = arith.constant 0.353553385 : f32
    %174 = vector.broadcast %cst_82 : f32 to vector<8x8xf32>
    %175 = arith.mulf %173, %174 : vector<8x8xf32>
    %cst_83 = arith.constant dense<0xFF800000> : vector<8xf32>
    %176 = vector.multi_reduction <maximumf>, %175, %cst_83 [1] : vector<8x8xf32> to vector<8xf32>
    %177 = vector.shape_cast %176 : vector<8xf32> to vector<8x1xf32>
    %178 = vector.broadcast %177 : vector<8x1xf32> to vector<8x8xf32>
    %179 = arith.subf %175, %178 : vector<8x8xf32>
    %180 = math.exp %179 : vector<8x8xf32>
    %cst_84 = arith.constant dense<0.000000e+00> : vector<8xf32>
    %181 = vector.multi_reduction <add>, %180, %cst_84 [1] : vector<8x8xf32> to vector<8xf32>
    %182 = vector.shape_cast %181 : vector<8xf32> to vector<8x1xf32>
    %183 = tpu.reciprocal %182 {approx = true} : vector<8x1xf32> -> vector<8x1xf32>
    %184 = vector.broadcast %183 : vector<8x1xf32> to vector<8x8xf32>
    %185 = arith.mulf %180, %184 : vector<8x8xf32>
    %cst_85 = arith.constant dense<0.000000e+00> : vector<8x8xf32>
    %186 = tpu.matmul %185, %172, %cst_85 {dimension_numbers = #tpu.dot_dimension_numbers<[1], [0], [0], [1], [0, 0, 1, 1], [], []>} : vector<8x8xf32>, vector<8x8xf32>, vector<8x8xf32> -> vector<8x8xf32>
    %187 = tpu.concatenate %169, %186 in 0 : vector<8x8xf32>, vector<8x8xf32> -> vector<16x8xf32>
    %188 = vector.extract_strided_slice %16 {offsets = [24, 0], sizes = [8, 32], strides = [1, 1]} : vector<32x32xf32> to vector<8x32xf32>
    %cst_86 = arith.constant dense<0.000000e+00> : vector<16x32xf32>
    %189 = tpu.matmul %187, %188, %cst_86 {dimension_numbers = #tpu.dot_dimension_numbers<[1], [0], [0], [1], [0, 0, 1, 1], [], []>} : vector<16x8xf32>, vector<8x32xf32>, vector<16x32xf32> -> vector<16x32xf32>
    %190 = arith.addf %152, %189 : vector<16x32xf32>
    %191 = vector.broadcast %18 : vector<1x32xf32> to vector<16x32xf32>
    %192 = arith.addf %190, %191 : vector<16x32xf32>
    %193 = arith.addf %10, %192 : vector<16x32xf32>
    %cst_87 = arith.constant dense<0.000000e+00> : vector<16xf32>
    %194 = vector.multi_reduction <add>, %193, %cst_87 [1] : vector<16x32xf32> to vector<16xf32>
    %195 = vector.shape_cast %194 : vector<16xf32> to vector<16x1xf32>
    %cst_88 = arith.constant 3.200000e+01 : f32
    %196 = vector.broadcast %cst_88 : f32 to vector<16x1xf32>
    %197 = arith.divf %195, %196 : vector<16x1xf32>
    %198 = vector.broadcast %197 : vector<16x1xf32> to vector<16x32xf32>
    %199 = arith.subf %193, %198 : vector<16x32xf32>
    %200 = arith.mulf %199, %199 : vector<16x32xf32>
    %cst_89 = arith.constant dense<0.000000e+00> : vector<16xf32>
    %201 = vector.multi_reduction <add>, %200, %cst_89 [1] : vector<16x32xf32> to vector<16xf32>
    %202 = vector.shape_cast %201 : vector<16xf32> to vector<16x1xf32>
    %cst_90 = arith.constant 3.200000e+01 : f32
    %203 = vector.broadcast %cst_90 : f32 to vector<16x1xf32>
    %204 = arith.divf %202, %203 : vector<16x1xf32>
    %205 = vector.broadcast %197 : vector<16x1xf32> to vector<16x32xf32>
    %206 = arith.subf %193, %205 : vector<16x32xf32>
    %cst_91 = arith.constant 9.99999974E-6 : f32
    %207 = vector.broadcast %cst_91 : f32 to vector<16x1xf32>
    %208 = arith.addf %204, %207 : vector<16x1xf32>
    %209 = math.rsqrt %208 : vector<16x1xf32>
    %210 = vector.broadcast %209 : vector<16x1xf32> to vector<16x32xf32>
    %211 = arith.mulf %206, %210 : vector<16x32xf32>
    %212 = vector.broadcast %20 : vector<1x32xf32> to vector<16x32xf32>
    %213 = arith.mulf %211, %212 : vector<16x32xf32>
    %214 = vector.broadcast %22 : vector<1x32xf32> to vector<16x32xf32>
    %215 = arith.addf %213, %214 : vector<16x32xf32>
    %cst_92 = arith.constant dense<0.000000e+00> : vector<16x64xf32>
    %216 = tpu.matmul %215, %24, %cst_92 {dimension_numbers = #tpu.dot_dimension_numbers<[1], [0], [0], [1], [0, 0, 1, 1], [], []>} : vector<16x32xf32>, vector<32x64xf32>, vector<16x64xf32> -> vector<16x64xf32>
    %217 = vector.broadcast %26 : vector<1x64xf32> to vector<16x64xf32>
    %218 = arith.addf %216, %217 : vector<16x64xf32>
    %cst_93 = arith.constant 0.000000e+00 : f32
    %219 = vector.broadcast %cst_93 : f32 to vector<16x64xf32>
    %220 = arith.maximumf %218, %219 : vector<16x64xf32>
    %cst_94 = arith.constant dense<0.000000e+00> : vector<16x32xf32>
    %221 = tpu.matmul %220, %28, %cst_94 {dimension_numbers = #tpu.dot_dimension_numbers<[1], [0], [0], [1], [0, 0, 1, 1], [], []>} : vector<16x64xf32>, vector<64x32xf32>, vector<16x32xf32> -> vector<16x32xf32>
    %222 = vector.broadcast %30 : vector<1x32xf32> to vector<16x32xf32>
    %223 = arith.addf %221, %222 : vector<16x32xf32>
    %224 = arith.addf %215, %223 : vector<16x32xf32>
    %cst_95 = arith.constant dense<0.000000e+00> : vector<16xf32>
    %225 = vector.multi_reduction <add>, %224, %cst_95 [1] : vector<16x32xf32> to vector<16xf32>
    %226 = vector.shape_cast %225 : vector<16xf32> to vector<16x1xf32>
    %cst_96 = arith.constant 3.200000e+01 : f32
    %227 = vector.broadcast %cst_96 : f32 to vector<16x1xf32>
    %228 = arith.divf %226, %227 : vector<16x1xf32>
    %229 = vector.broadcast %228 : vector<16x1xf32> to vector<16x32xf32>
    %230 = arith.subf %224, %229 : vector<16x32xf32>
    %231 = arith.mulf %230, %230 : vector<16x32xf32>
    %cst_97 = arith.constant dense<0.000000e+00> : vector<16xf32>
    %232 = vector.multi_reduction <add>, %231, %cst_97 [1] : vector<16x32xf32> to vector<16xf32>
    %233 = vector.shape_cast %232 : vector<16xf32> to vector<16x1xf32>
    %cst_98 = arith.constant 3.200000e+01 : f32
    %234 = vector.broadcast %cst_98 : f32 to vector<16x1xf32>
    %235 = arith.divf %233, %234 : vector<16x1xf32>
    %236 = vector.broadcast %228 : vector<16x1xf32> to vector<16x32xf32>
    %237 = arith.subf %224, %236 : vector<16x32xf32>
    %cst_99 = arith.constant 9.99999974E-6 : f32
    %238 = vector.broadcast %cst_99 : f32 to vector<16x1xf32>
    %239 = arith.addf %235, %238 : vector<16x1xf32>
    %240 = math.rsqrt %239 : vector<16x1xf32>
    %241 = vector.broadcast %240 : vector<16x1xf32> to vector<16x32xf32>
    %242 = arith.mulf %237, %241 : vector<16x32xf32>
    %243 = vector.broadcast %32 : vector<1x32xf32> to vector<16x32xf32>
    %244 = arith.mulf %242, %243 : vector<16x32xf32>
    %245 = vector.broadcast %34 : vector<1x32xf32> to vector<16x32xf32>
    %246 = arith.addf %244, %245 : vector<16x32xf32>
    %c1 = arith.constant 1 : index
    %c0_100 = arith.constant 0 : index
    %c0_101 = arith.constant 0 : index
    %247 = vector.load %arg3[%c1, %c0_100, %c0_101] : memref<2x32x96xf32, #tpu.memory_space<vmem>>, vector<1x32x96xf32>
    %248 = vector.shape_cast %247 : vector<1x32x96xf32> to vector<32x96xf32>
    %c1_102 = arith.constant 1 : index
    %c0_103 = arith.constant 0 : index
    %c0_104 = arith.constant 0 : index
    %249 = vector.load %arg4[%c1_102, %c0_103, %c0_104] : memref<2x1x96xf32, #tpu.memory_space<vmem>>, vector<1x1x96xf32>
    %250 = vector.shape_cast %249 : vector<1x1x96xf32> to vector<1x96xf32>
    %c1_105 = arith.constant 1 : index
    %c0_106 = arith.constant 0 : index
    %c0_107 = arith.constant 0 : index
    %251 = vector.load %arg5[%c1_105, %c0_106, %c0_107] : memref<2x32x32xf32, #tpu.memory_space<vmem>>, vector<1x32x32xf32>
    %252 = vector.shape_cast %251 : vector<1x32x32xf32> to vector<32x32xf32>
    %c1_108 = arith.constant 1 : index
    %c0_109 = arith.constant 0 : index
    %c0_110 = arith.constant 0 : index
    %253 = vector.load %arg6[%c1_108, %c0_109, %c0_110] : memref<2x1x32xf32, #tpu.memory_space<vmem>>, vector<1x1x32xf32>
    %254 = vector.shape_cast %253 : vector<1x1x32xf32> to vector<1x32xf32>
    %c1_111 = arith.constant 1 : index
    %c0_112 = arith.constant 0 : index
    %c0_113 = arith.constant 0 : index
    %255 = vector.load %arg7[%c1_111, %c0_112, %c0_113] : memref<2x1x32xf32, #tpu.memory_space<vmem>>, vector<1x1x32xf32>
    %256 = vector.shape_cast %255 : vector<1x1x32xf32> to vector<1x32xf32>
    %c1_114 = arith.constant 1 : index
    %c0_115 = arith.constant 0 : index
    %c0_116 = arith.constant 0 : index
    %257 = vector.load %arg8[%c1_114, %c0_115, %c0_116] : memref<2x1x32xf32, #tpu.memory_space<vmem>>, vector<1x1x32xf32>
    %258 = vector.shape_cast %257 : vector<1x1x32xf32> to vector<1x32xf32>
    %c1_117 = arith.constant 1 : index
    %c0_118 = arith.constant 0 : index
    %c0_119 = arith.constant 0 : index
    %259 = vector.load %arg9[%c1_117, %c0_118, %c0_119] : memref<2x32x64xf32, #tpu.memory_space<vmem>>, vector<1x32x64xf32>
    %260 = vector.shape_cast %259 : vector<1x32x64xf32> to vector<32x64xf32>
    %c1_120 = arith.constant 1 : index
    %c0_121 = arith.constant 0 : index
    %c0_122 = arith.constant 0 : index
    %261 = vector.load %arg10[%c1_120, %c0_121, %c0_122] : memref<2x1x64xf32, #tpu.memory_space<vmem>>, vector<1x1x64xf32>
    %262 = vector.shape_cast %261 : vector<1x1x64xf32> to vector<1x64xf32>
    %c1_123 = arith.constant 1 : index
    %c0_124 = arith.constant 0 : index
    %c0_125 = arith.constant 0 : index
    %263 = vector.load %arg11[%c1_123, %c0_124, %c0_125] : memref<2x64x32xf32, #tpu.memory_space<vmem>>, vector<1x64x32xf32>
    %264 = vector.shape_cast %263 : vector<1x64x32xf32> to vector<64x32xf32>
    %c1_126 = arith.constant 1 : index
    %c0_127 = arith.constant 0 : index
    %c0_128 = arith.constant 0 : index
    %265 = vector.load %arg12[%c1_126, %c0_127, %c0_128] : memref<2x1x32xf32, #tpu.memory_space<vmem>>, vector<1x1x32xf32>
    %266 = vector.shape_cast %265 : vector<1x1x32xf32> to vector<1x32xf32>
    %c1_129 = arith.constant 1 : index
    %c0_130 = arith.constant 0 : index
    %c0_131 = arith.constant 0 : index
    %267 = vector.load %arg13[%c1_129, %c0_130, %c0_131] : memref<2x1x32xf32, #tpu.memory_space<vmem>>, vector<1x1x32xf32>
    %268 = vector.shape_cast %267 : vector<1x1x32xf32> to vector<1x32xf32>
    %c1_132 = arith.constant 1 : index
    %c0_133 = arith.constant 0 : index
    %c0_134 = arith.constant 0 : index
    %269 = vector.load %arg14[%c1_132, %c0_133, %c0_134] : memref<2x1x32xf32, #tpu.memory_space<vmem>>, vector<1x1x32xf32>
    %270 = vector.shape_cast %269 : vector<1x1x32xf32> to vector<1x32xf32>
    %cst_135 = arith.constant dense<0.000000e+00> : vector<16x96xf32>
    %271 = tpu.matmul %246, %248, %cst_135 {dimension_numbers = #tpu.dot_dimension_numbers<[1], [0], [0], [1], [0, 0, 1, 1], [], []>} : vector<16x32xf32>, vector<32x96xf32>, vector<16x96xf32> -> vector<16x96xf32>
    %272 = vector.broadcast %250 : vector<1x96xf32> to vector<16x96xf32>
    %273 = arith.addf %271, %272 : vector<16x96xf32>
    %cst_136 = arith.constant 0.000000e+00 : f32
    %274 = vector.broadcast %cst_136 : f32 to vector<16x32xf32>
    %275 = vector.extract_strided_slice %273 {offsets = [0, 0], sizes = [8, 8], strides = [1, 1]} : vector<16x96xf32> to vector<8x8xf32>
    %276 = vector.extract_strided_slice %273 {offsets = [0, 32], sizes = [8, 8], strides = [1, 1]} : vector<16x96xf32> to vector<8x8xf32>
    %277 = vector.extract_strided_slice %273 {offsets = [0, 64], sizes = [8, 8], strides = [1, 1]} : vector<16x96xf32> to vector<8x8xf32>
    %cst_137 = arith.constant dense<0.000000e+00> : vector<8x8xf32>
    %278 = tpu.matmul %275, %276, %cst_137 {dimension_numbers = #tpu.dot_dimension_numbers<[1], [1], [0], [0], [0, 0, 1, 0], [], []>} : vector<8x8xf32>, vector<8x8xf32>, vector<8x8xf32> -> vector<8x8xf32>
    %cst_138 = arith.constant 0.353553385 : f32
    %279 = vector.broadcast %cst_138 : f32 to vector<8x8xf32>
    %280 = arith.mulf %278, %279 : vector<8x8xf32>
    %cst_139 = arith.constant dense<0xFF800000> : vector<8xf32>
    %281 = vector.multi_reduction <maximumf>, %280, %cst_139 [1] : vector<8x8xf32> to vector<8xf32>
    %282 = vector.shape_cast %281 : vector<8xf32> to vector<8x1xf32>
    %283 = vector.broadcast %282 : vector<8x1xf32> to vector<8x8xf32>
    %284 = arith.subf %280, %283 : vector<8x8xf32>
    %285 = math.exp %284 : vector<8x8xf32>
    %cst_140 = arith.constant dense<0.000000e+00> : vector<8xf32>
    %286 = vector.multi_reduction <add>, %285, %cst_140 [1] : vector<8x8xf32> to vector<8xf32>
    %287 = vector.shape_cast %286 : vector<8xf32> to vector<8x1xf32>
    %288 = tpu.reciprocal %287 {approx = true} : vector<8x1xf32> -> vector<8x1xf32>
    %289 = vector.broadcast %288 : vector<8x1xf32> to vector<8x8xf32>
    %290 = arith.mulf %285, %289 : vector<8x8xf32>
    %cst_141 = arith.constant dense<0.000000e+00> : vector<8x8xf32>
    %291 = tpu.matmul %290, %277, %cst_141 {dimension_numbers = #tpu.dot_dimension_numbers<[1], [0], [0], [1], [0, 0, 1, 1], [], []>} : vector<8x8xf32>, vector<8x8xf32>, vector<8x8xf32> -> vector<8x8xf32>
    %292 = vector.extract_strided_slice %273 {offsets = [8, 0], sizes = [8, 8], strides = [1, 1]} : vector<16x96xf32> to vector<8x8xf32>
    %293 = vector.extract_strided_slice %273 {offsets = [8, 32], sizes = [8, 8], strides = [1, 1]} : vector<16x96xf32> to vector<8x8xf32>
    %294 = vector.extract_strided_slice %273 {offsets = [8, 64], sizes = [8, 8], strides = [1, 1]} : vector<16x96xf32> to vector<8x8xf32>
    %cst_142 = arith.constant dense<0.000000e+00> : vector<8x8xf32>
    %295 = tpu.matmul %292, %293, %cst_142 {dimension_numbers = #tpu.dot_dimension_numbers<[1], [1], [0], [0], [0, 0, 1, 0], [], []>} : vector<8x8xf32>, vector<8x8xf32>, vector<8x8xf32> -> vector<8x8xf32>
    %cst_143 = arith.constant 0.353553385 : f32
    %296 = vector.broadcast %cst_143 : f32 to vector<8x8xf32>
    %297 = arith.mulf %295, %296 : vector<8x8xf32>
    %cst_144 = arith.constant dense<0xFF800000> : vector<8xf32>
    %298 = vector.multi_reduction <maximumf>, %297, %cst_144 [1] : vector<8x8xf32> to vector<8xf32>
    %299 = vector.shape_cast %298 : vector<8xf32> to vector<8x1xf32>
    %300 = vector.broadcast %299 : vector<8x1xf32> to vector<8x8xf32>
    %301 = arith.subf %297, %300 : vector<8x8xf32>
    %302 = math.exp %301 : vector<8x8xf32>
    %cst_145 = arith.constant dense<0.000000e+00> : vector<8xf32>
    %303 = vector.multi_reduction <add>, %302, %cst_145 [1] : vector<8x8xf32> to vector<8xf32>
    %304 = vector.shape_cast %303 : vector<8xf32> to vector<8x1xf32>
    %305 = tpu.reciprocal %304 {approx = true} : vector<8x1xf32> -> vector<8x1xf32>
    %306 = vector.broadcast %305 : vector<8x1xf32> to vector<8x8xf32>
    %307 = arith.mulf %302, %306 : vector<8x8xf32>
    %cst_146 = arith.constant dense<0.000000e+00> : vector<8x8xf32>
    %308 = tpu.matmul %307, %294, %cst_146 {dimension_numbers = #tpu.dot_dimension_numbers<[1], [0], [0], [1], [0, 0, 1, 1], [], []>} : vector<8x8xf32>, vector<8x8xf32>, vector<8x8xf32> -> vector<8x8xf32>
    %309 = tpu.concatenate %291, %308 in 0 : vector<8x8xf32>, vector<8x8xf32> -> vector<16x8xf32>
    %310 = vector.extract_strided_slice %252 {offsets = [0, 0], sizes = [8, 32], strides = [1, 1]} : vector<32x32xf32> to vector<8x32xf32>
    %cst_147 = arith.constant dense<0.000000e+00> : vector<16x32xf32>
    %311 = tpu.matmul %309, %310, %cst_147 {dimension_numbers = #tpu.dot_dimension_numbers<[1], [0], [0], [1], [0, 0, 1, 1], [], []>} : vector<16x8xf32>, vector<8x32xf32>, vector<16x32xf32> -> vector<16x32xf32>
    %312 = arith.addf %274, %311 : vector<16x32xf32>
    %313 = vector.extract_strided_slice %273 {offsets = [0, 8], sizes = [8, 8], strides = [1, 1]} : vector<16x96xf32> to vector<8x8xf32>
    %314 = vector.extract_strided_slice %273 {offsets = [0, 40], sizes = [8, 8], strides = [1, 1]} : vector<16x96xf32> to vector<8x8xf32>
    %315 = vector.extract_strided_slice %273 {offsets = [0, 72], sizes = [8, 8], strides = [1, 1]} : vector<16x96xf32> to vector<8x8xf32>
    %cst_148 = arith.constant dense<0.000000e+00> : vector<8x8xf32>
    %316 = tpu.matmul %313, %314, %cst_148 {dimension_numbers = #tpu.dot_dimension_numbers<[1], [1], [0], [0], [0, 0, 1, 0], [], []>} : vector<8x8xf32>, vector<8x8xf32>, vector<8x8xf32> -> vector<8x8xf32>
    %cst_149 = arith.constant 0.353553385 : f32
    %317 = vector.broadcast %cst_149 : f32 to vector<8x8xf32>
    %318 = arith.mulf %316, %317 : vector<8x8xf32>
    %cst_150 = arith.constant dense<0xFF800000> : vector<8xf32>
    %319 = vector.multi_reduction <maximumf>, %318, %cst_150 [1] : vector<8x8xf32> to vector<8xf32>
    %320 = vector.shape_cast %319 : vector<8xf32> to vector<8x1xf32>
    %321 = vector.broadcast %320 : vector<8x1xf32> to vector<8x8xf32>
    %322 = arith.subf %318, %321 : vector<8x8xf32>
    %323 = math.exp %322 : vector<8x8xf32>
    %cst_151 = arith.constant dense<0.000000e+00> : vector<8xf32>
    %324 = vector.multi_reduction <add>, %323, %cst_151 [1] : vector<8x8xf32> to vector<8xf32>
    %325 = vector.shape_cast %324 : vector<8xf32> to vector<8x1xf32>
    %326 = tpu.reciprocal %325 {approx = true} : vector<8x1xf32> -> vector<8x1xf32>
    %327 = vector.broadcast %326 : vector<8x1xf32> to vector<8x8xf32>
    %328 = arith.mulf %323, %327 : vector<8x8xf32>
    %cst_152 = arith.constant dense<0.000000e+00> : vector<8x8xf32>
    %329 = tpu.matmul %328, %315, %cst_152 {dimension_numbers = #tpu.dot_dimension_numbers<[1], [0], [0], [1], [0, 0, 1, 1], [], []>} : vector<8x8xf32>, vector<8x8xf32>, vector<8x8xf32> -> vector<8x8xf32>
    %330 = vector.extract_strided_slice %273 {offsets = [8, 8], sizes = [8, 8], strides = [1, 1]} : vector<16x96xf32> to vector<8x8xf32>
    %331 = vector.extract_strided_slice %273 {offsets = [8, 40], sizes = [8, 8], strides = [1, 1]} : vector<16x96xf32> to vector<8x8xf32>
    %332 = vector.extract_strided_slice %273 {offsets = [8, 72], sizes = [8, 8], strides = [1, 1]} : vector<16x96xf32> to vector<8x8xf32>
    %cst_153 = arith.constant dense<0.000000e+00> : vector<8x8xf32>
    %333 = tpu.matmul %330, %331, %cst_153 {dimension_numbers = #tpu.dot_dimension_numbers<[1], [1], [0], [0], [0, 0, 1, 0], [], []>} : vector<8x8xf32>, vector<8x8xf32>, vector<8x8xf32> -> vector<8x8xf32>
    %cst_154 = arith.constant 0.353553385 : f32
    %334 = vector.broadcast %cst_154 : f32 to vector<8x8xf32>
    %335 = arith.mulf %333, %334 : vector<8x8xf32>
    %cst_155 = arith.constant dense<0xFF800000> : vector<8xf32>
    %336 = vector.multi_reduction <maximumf>, %335, %cst_155 [1] : vector<8x8xf32> to vector<8xf32>
    %337 = vector.shape_cast %336 : vector<8xf32> to vector<8x1xf32>
    %338 = vector.broadcast %337 : vector<8x1xf32> to vector<8x8xf32>
    %339 = arith.subf %335, %338 : vector<8x8xf32>
    %340 = math.exp %339 : vector<8x8xf32>
    %cst_156 = arith.constant dense<0.000000e+00> : vector<8xf32>
    %341 = vector.multi_reduction <add>, %340, %cst_156 [1] : vector<8x8xf32> to vector<8xf32>
    %342 = vector.shape_cast %341 : vector<8xf32> to vector<8x1xf32>
    %343 = tpu.reciprocal %342 {approx = true} : vector<8x1xf32> -> vector<8x1xf32>
    %344 = vector.broadcast %343 : vector<8x1xf32> to vector<8x8xf32>
    %345 = arith.mulf %340, %344 : vector<8x8xf32>
    %cst_157 = arith.constant dense<0.000000e+00> : vector<8x8xf32>
    %346 = tpu.matmul %345, %332, %cst_157 {dimension_numbers = #tpu.dot_dimension_numbers<[1], [0], [0], [1], [0, 0, 1, 1], [], []>} : vector<8x8xf32>, vector<8x8xf32>, vector<8x8xf32> -> vector<8x8xf32>
    %347 = tpu.concatenate %329, %346 in 0 : vector<8x8xf32>, vector<8x8xf32> -> vector<16x8xf32>
    %348 = vector.extract_strided_slice %252 {offsets = [8, 0], sizes = [8, 32], strides = [1, 1]} : vector<32x32xf32> to vector<8x32xf32>
    %cst_158 = arith.constant dense<0.000000e+00> : vector<16x32xf32>
    %349 = tpu.matmul %347, %348, %cst_158 {dimension_numbers = #tpu.dot_dimension_numbers<[1], [0], [0], [1], [0, 0, 1, 1], [], []>} : vector<16x8xf32>, vector<8x32xf32>, vector<16x32xf32> -> vector<16x32xf32>
    %350 = arith.addf %312, %349 : vector<16x32xf32>
    %351 = vector.extract_strided_slice %273 {offsets = [0, 16], sizes = [8, 8], strides = [1, 1]} : vector<16x96xf32> to vector<8x8xf32>
    %352 = vector.extract_strided_slice %273 {offsets = [0, 48], sizes = [8, 8], strides = [1, 1]} : vector<16x96xf32> to vector<8x8xf32>
    %353 = vector.extract_strided_slice %273 {offsets = [0, 80], sizes = [8, 8], strides = [1, 1]} : vector<16x96xf32> to vector<8x8xf32>
    %cst_159 = arith.constant dense<0.000000e+00> : vector<8x8xf32>
    %354 = tpu.matmul %351, %352, %cst_159 {dimension_numbers = #tpu.dot_dimension_numbers<[1], [1], [0], [0], [0, 0, 1, 0], [], []>} : vector<8x8xf32>, vector<8x8xf32>, vector<8x8xf32> -> vector<8x8xf32>
    %cst_160 = arith.constant 0.353553385 : f32
    %355 = vector.broadcast %cst_160 : f32 to vector<8x8xf32>
    %356 = arith.mulf %354, %355 : vector<8x8xf32>
    %cst_161 = arith.constant dense<0xFF800000> : vector<8xf32>
    %357 = vector.multi_reduction <maximumf>, %356, %cst_161 [1] : vector<8x8xf32> to vector<8xf32>
    %358 = vector.shape_cast %357 : vector<8xf32> to vector<8x1xf32>
    %359 = vector.broadcast %358 : vector<8x1xf32> to vector<8x8xf32>
    %360 = arith.subf %356, %359 : vector<8x8xf32>
    %361 = math.exp %360 : vector<8x8xf32>
    %cst_162 = arith.constant dense<0.000000e+00> : vector<8xf32>
    %362 = vector.multi_reduction <add>, %361, %cst_162 [1] : vector<8x8xf32> to vector<8xf32>
    %363 = vector.shape_cast %362 : vector<8xf32> to vector<8x1xf32>
    %364 = tpu.reciprocal %363 {approx = true} : vector<8x1xf32> -> vector<8x1xf32>
    %365 = vector.broadcast %364 : vector<8x1xf32> to vector<8x8xf32>
    %366 = arith.mulf %361, %365 : vector<8x8xf32>
    %cst_163 = arith.constant dense<0.000000e+00> : vector<8x8xf32>
    %367 = tpu.matmul %366, %353, %cst_163 {dimension_numbers = #tpu.dot_dimension_numbers<[1], [0], [0], [1], [0, 0, 1, 1], [], []>} : vector<8x8xf32>, vector<8x8xf32>, vector<8x8xf32> -> vector<8x8xf32>
    %368 = vector.extract_strided_slice %273 {offsets = [8, 16], sizes = [8, 8], strides = [1, 1]} : vector<16x96xf32> to vector<8x8xf32>
    %369 = vector.extract_strided_slice %273 {offsets = [8, 48], sizes = [8, 8], strides = [1, 1]} : vector<16x96xf32> to vector<8x8xf32>
    %370 = vector.extract_strided_slice %273 {offsets = [8, 80], sizes = [8, 8], strides = [1, 1]} : vector<16x96xf32> to vector<8x8xf32>
    %cst_164 = arith.constant dense<0.000000e+00> : vector<8x8xf32>
    %371 = tpu.matmul %368, %369, %cst_164 {dimension_numbers = #tpu.dot_dimension_numbers<[1], [1], [0], [0], [0, 0, 1, 0], [], []>} : vector<8x8xf32>, vector<8x8xf32>, vector<8x8xf32> -> vector<8x8xf32>
    %cst_165 = arith.constant 0.353553385 : f32
    %372 = vector.broadcast %cst_165 : f32 to vector<8x8xf32>
    %373 = arith.mulf %371, %372 : vector<8x8xf32>
    %cst_166 = arith.constant dense<0xFF800000> : vector<8xf32>
    %374 = vector.multi_reduction <maximumf>, %373, %cst_166 [1] : vector<8x8xf32> to vector<8xf32>
    %375 = vector.shape_cast %374 : vector<8xf32> to vector<8x1xf32>
    %376 = vector.broadcast %375 : vector<8x1xf32> to vector<8x8xf32>
    %377 = arith.subf %373, %376 : vector<8x8xf32>
    %378 = math.exp %377 : vector<8x8xf32>
    %cst_167 = arith.constant dense<0.000000e+00> : vector<8xf32>
    %379 = vector.multi_reduction <add>, %378, %cst_167 [1] : vector<8x8xf32> to vector<8xf32>
    %380 = vector.shape_cast %379 : vector<8xf32> to vector<8x1xf32>
    %381 = tpu.reciprocal %380 {approx = true} : vector<8x1xf32> -> vector<8x1xf32>
    %382 = vector.broadcast %381 : vector<8x1xf32> to vector<8x8xf32>
    %383 = arith.mulf %378, %382 : vector<8x8xf32>
    %cst_168 = arith.constant dense<0.000000e+00> : vector<8x8xf32>
    %384 = tpu.matmul %383, %370, %cst_168 {dimension_numbers = #tpu.dot_dimension_numbers<[1], [0], [0], [1], [0, 0, 1, 1], [], []>} : vector<8x8xf32>, vector<8x8xf32>, vector<8x8xf32> -> vector<8x8xf32>
    %385 = tpu.concatenate %367, %384 in 0 : vector<8x8xf32>, vector<8x8xf32> -> vector<16x8xf32>
    %386 = vector.extract_strided_slice %252 {offsets = [16, 0], sizes = [8, 32], strides = [1, 1]} : vector<32x32xf32> to vector<8x32xf32>
    %cst_169 = arith.constant dense<0.000000e+00> : vector<16x32xf32>
    %387 = tpu.matmul %385, %386, %cst_169 {dimension_numbers = #tpu.dot_dimension_numbers<[1], [0], [0], [1], [0, 0, 1, 1], [], []>} : vector<16x8xf32>, vector<8x32xf32>, vector<16x32xf32> -> vector<16x32xf32>
    %388 = arith.addf %350, %387 : vector<16x32xf32>
    %389 = vector.extract_strided_slice %273 {offsets = [0, 24], sizes = [8, 8], strides = [1, 1]} : vector<16x96xf32> to vector<8x8xf32>
    %390 = vector.extract_strided_slice %273 {offsets = [0, 56], sizes = [8, 8], strides = [1, 1]} : vector<16x96xf32> to vector<8x8xf32>
    %391 = vector.extract_strided_slice %273 {offsets = [0, 88], sizes = [8, 8], strides = [1, 1]} : vector<16x96xf32> to vector<8x8xf32>
    %cst_170 = arith.constant dense<0.000000e+00> : vector<8x8xf32>
    %392 = tpu.matmul %389, %390, %cst_170 {dimension_numbers = #tpu.dot_dimension_numbers<[1], [1], [0], [0], [0, 0, 1, 0], [], []>} : vector<8x8xf32>, vector<8x8xf32>, vector<8x8xf32> -> vector<8x8xf32>
    %cst_171 = arith.constant 0.353553385 : f32
    %393 = vector.broadcast %cst_171 : f32 to vector<8x8xf32>
    %394 = arith.mulf %392, %393 : vector<8x8xf32>
    %cst_172 = arith.constant dense<0xFF800000> : vector<8xf32>
    %395 = vector.multi_reduction <maximumf>, %394, %cst_172 [1] : vector<8x8xf32> to vector<8xf32>
    %396 = vector.shape_cast %395 : vector<8xf32> to vector<8x1xf32>
    %397 = vector.broadcast %396 : vector<8x1xf32> to vector<8x8xf32>
    %398 = arith.subf %394, %397 : vector<8x8xf32>
    %399 = math.exp %398 : vector<8x8xf32>
    %cst_173 = arith.constant dense<0.000000e+00> : vector<8xf32>
    %400 = vector.multi_reduction <add>, %399, %cst_173 [1] : vector<8x8xf32> to vector<8xf32>
    %401 = vector.shape_cast %400 : vector<8xf32> to vector<8x1xf32>
    %402 = tpu.reciprocal %401 {approx = true} : vector<8x1xf32> -> vector<8x1xf32>
    %403 = vector.broadcast %402 : vector<8x1xf32> to vector<8x8xf32>
    %404 = arith.mulf %399, %403 : vector<8x8xf32>
    %cst_174 = arith.constant dense<0.000000e+00> : vector<8x8xf32>
    %405 = tpu.matmul %404, %391, %cst_174 {dimension_numbers = #tpu.dot_dimension_numbers<[1], [0], [0], [1], [0, 0, 1, 1], [], []>} : vector<8x8xf32>, vector<8x8xf32>, vector<8x8xf32> -> vector<8x8xf32>
    %406 = vector.extract_strided_slice %273 {offsets = [8, 24], sizes = [8, 8], strides = [1, 1]} : vector<16x96xf32> to vector<8x8xf32>
    %407 = vector.extract_strided_slice %273 {offsets = [8, 56], sizes = [8, 8], strides = [1, 1]} : vector<16x96xf32> to vector<8x8xf32>
    %408 = vector.extract_strided_slice %273 {offsets = [8, 88], sizes = [8, 8], strides = [1, 1]} : vector<16x96xf32> to vector<8x8xf32>
    %cst_175 = arith.constant dense<0.000000e+00> : vector<8x8xf32>
    %409 = tpu.matmul %406, %407, %cst_175 {dimension_numbers = #tpu.dot_dimension_numbers<[1], [1], [0], [0], [0, 0, 1, 0], [], []>} : vector<8x8xf32>, vector<8x8xf32>, vector<8x8xf32> -> vector<8x8xf32>
    %cst_176 = arith.constant 0.353553385 : f32
    %410 = vector.broadcast %cst_176 : f32 to vector<8x8xf32>
    %411 = arith.mulf %409, %410 : vector<8x8xf32>
    %cst_177 = arith.constant dense<0xFF800000> : vector<8xf32>
    %412 = vector.multi_reduction <maximumf>, %411, %cst_177 [1] : vector<8x8xf32> to vector<8xf32>
    %413 = vector.shape_cast %412 : vector<8xf32> to vector<8x1xf32>
    %414 = vector.broadcast %413 : vector<8x1xf32> to vector<8x8xf32>
    %415 = arith.subf %411, %414 : vector<8x8xf32>
    %416 = math.exp %415 : vector<8x8xf32>
    %cst_178 = arith.constant dense<0.000000e+00> : vector<8xf32>
    %417 = vector.multi_reduction <add>, %416, %cst_178 [1] : vector<8x8xf32> to vector<8xf32>
    %418 = vector.shape_cast %417 : vector<8xf32> to vector<8x1xf32>
    %419 = tpu.reciprocal %418 {approx = true} : vector<8x1xf32> -> vector<8x1xf32>
    %420 = vector.broadcast %419 : vector<8x1xf32> to vector<8x8xf32>
    %421 = arith.mulf %416, %420 : vector<8x8xf32>
    %cst_179 = arith.constant dense<0.000000e+00> : vector<8x8xf32>
    %422 = tpu.matmul %421, %408, %cst_179 {dimension_numbers = #tpu.dot_dimension_numbers<[1], [0], [0], [1], [0, 0, 1, 1], [], []>} : vector<8x8xf32>, vector<8x8xf32>, vector<8x8xf32> -> vector<8x8xf32>
    %423 = tpu.concatenate %405, %422 in 0 : vector<8x8xf32>, vector<8x8xf32> -> vector<16x8xf32>
    %424 = vector.extract_strided_slice %252 {offsets = [24, 0], sizes = [8, 32], strides = [1, 1]} : vector<32x32xf32> to vector<8x32xf32>
    %cst_180 = arith.constant dense<0.000000e+00> : vector<16x32xf32>
    %425 = tpu.matmul %423, %424, %cst_180 {dimension_numbers = #tpu.dot_dimension_numbers<[1], [0], [0], [1], [0, 0, 1, 1], [], []>} : vector<16x8xf32>, vector<8x32xf32>, vector<16x32xf32> -> vector<16x32xf32>
    %426 = arith.addf %388, %425 : vector<16x32xf32>
    %427 = vector.broadcast %254 : vector<1x32xf32> to vector<16x32xf32>
    %428 = arith.addf %426, %427 : vector<16x32xf32>
    %429 = arith.addf %246, %428 : vector<16x32xf32>
    %cst_181 = arith.constant dense<0.000000e+00> : vector<16xf32>
    %430 = vector.multi_reduction <add>, %429, %cst_181 [1] : vector<16x32xf32> to vector<16xf32>
    %431 = vector.shape_cast %430 : vector<16xf32> to vector<16x1xf32>
    %cst_182 = arith.constant 3.200000e+01 : f32
    %432 = vector.broadcast %cst_182 : f32 to vector<16x1xf32>
    %433 = arith.divf %431, %432 : vector<16x1xf32>
    %434 = vector.broadcast %433 : vector<16x1xf32> to vector<16x32xf32>
    %435 = arith.subf %429, %434 : vector<16x32xf32>
    %436 = arith.mulf %435, %435 : vector<16x32xf32>
    %cst_183 = arith.constant dense<0.000000e+00> : vector<16xf32>
    %437 = vector.multi_reduction <add>, %436, %cst_183 [1] : vector<16x32xf32> to vector<16xf32>
    %438 = vector.shape_cast %437 : vector<16xf32> to vector<16x1xf32>
    %cst_184 = arith.constant 3.200000e+01 : f32
    %439 = vector.broadcast %cst_184 : f32 to vector<16x1xf32>
    %440 = arith.divf %438, %439 : vector<16x1xf32>
    %441 = vector.broadcast %433 : vector<16x1xf32> to vector<16x32xf32>
    %442 = arith.subf %429, %441 : vector<16x32xf32>
    %cst_185 = arith.constant 9.99999974E-6 : f32
    %443 = vector.broadcast %cst_185 : f32 to vector<16x1xf32>
    %444 = arith.addf %440, %443 : vector<16x1xf32>
    %445 = math.rsqrt %444 : vector<16x1xf32>
    %446 = vector.broadcast %445 : vector<16x1xf32> to vector<16x32xf32>
    %447 = arith.mulf %442, %446 : vector<16x32xf32>
    %448 = vector.broadcast %256 : vector<1x32xf32> to vector<16x32xf32>
    %449 = arith.mulf %447, %448 : vector<16x32xf32>
    %450 = vector.broadcast %258 : vector<1x32xf32> to vector<16x32xf32>
    %451 = arith.addf %449, %450 : vector<16x32xf32>
    %cst_186 = arith.constant dense<0.000000e+00> : vector<16x64xf32>
    %452 = tpu.matmul %451, %260, %cst_186 {dimension_numbers = #tpu.dot_dimension_numbers<[1], [0], [0], [1], [0, 0, 1, 1], [], []>} : vector<16x32xf32>, vector<32x64xf32>, vector<16x64xf32> -> vector<16x64xf32>
    %453 = vector.broadcast %262 : vector<1x64xf32> to vector<16x64xf32>
    %454 = arith.addf %452, %453 : vector<16x64xf32>
    %cst_187 = arith.constant 0.000000e+00 : f32
    %455 = vector.broadcast %cst_187 : f32 to vector<16x64xf32>
    %456 = arith.maximumf %454, %455 : vector<16x64xf32>
    %cst_188 = arith.constant dense<0.000000e+00> : vector<16x32xf32>
    %457 = tpu.matmul %456, %264, %cst_188 {dimension_numbers = #tpu.dot_dimension_numbers<[1], [0], [0], [1], [0, 0, 1, 1], [], []>} : vector<16x64xf32>, vector<64x32xf32>, vector<16x32xf32> -> vector<16x32xf32>
    %458 = vector.broadcast %266 : vector<1x32xf32> to vector<16x32xf32>
    %459 = arith.addf %457, %458 : vector<16x32xf32>
    %460 = arith.addf %451, %459 : vector<16x32xf32>
    %cst_189 = arith.constant dense<0.000000e+00> : vector<16xf32>
    %461 = vector.multi_reduction <add>, %460, %cst_189 [1] : vector<16x32xf32> to vector<16xf32>
    %462 = vector.shape_cast %461 : vector<16xf32> to vector<16x1xf32>
    %cst_190 = arith.constant 3.200000e+01 : f32
    %463 = vector.broadcast %cst_190 : f32 to vector<16x1xf32>
    %464 = arith.divf %462, %463 : vector<16x1xf32>
    %465 = vector.broadcast %464 : vector<16x1xf32> to vector<16x32xf32>
    %466 = arith.subf %460, %465 : vector<16x32xf32>
    %467 = arith.mulf %466, %466 : vector<16x32xf32>
    %cst_191 = arith.constant dense<0.000000e+00> : vector<16xf32>
    %468 = vector.multi_reduction <add>, %467, %cst_191 [1] : vector<16x32xf32> to vector<16xf32>
    %469 = vector.shape_cast %468 : vector<16xf32> to vector<16x1xf32>
    %cst_192 = arith.constant 3.200000e+01 : f32
    %470 = vector.broadcast %cst_192 : f32 to vector<16x1xf32>
    %471 = arith.divf %469, %470 : vector<16x1xf32>
    %472 = vector.broadcast %464 : vector<16x1xf32> to vector<16x32xf32>
    %473 = arith.subf %460, %472 : vector<16x32xf32>
    %cst_193 = arith.constant 9.99999974E-6 : f32
    %474 = vector.broadcast %cst_193 : f32 to vector<16x1xf32>
    %475 = arith.addf %471, %474 : vector<16x1xf32>
    %476 = math.rsqrt %475 : vector<16x1xf32>
    %477 = vector.broadcast %476 : vector<16x1xf32> to vector<16x32xf32>
    %478 = arith.mulf %473, %477 : vector<16x32xf32>
    %479 = vector.broadcast %268 : vector<1x32xf32> to vector<16x32xf32>
    %480 = arith.mulf %478, %479 : vector<16x32xf32>
    %481 = vector.broadcast %270 : vector<1x32xf32> to vector<16x32xf32>
    %482 = arith.addf %480, %481 : vector<16x32xf32>
    %c0_194 = arith.constant 0 : index
    %c0_195 = arith.constant 0 : index
    %483 = vector.load %arg15[%c0_194, %c0_195] : memref<32x128xf32, #tpu.memory_space<vmem>>, vector<32x128xf32>
    %cst_196 = arith.constant dense<0.000000e+00> : vector<16x128xf32>
    %484 = tpu.matmul %482, %483, %cst_196 {dimension_numbers = #tpu.dot_dimension_numbers<[1], [0], [0], [1], [0, 0, 1, 1], [], []>} : vector<16x32xf32>, vector<32x128xf32>, vector<16x128xf32> -> vector<16x128xf32>
    %c0_197 = arith.constant 0 : index
    %c0_198 = arith.constant 0 : index
    %485 = vector.load %arg16[%c0_197, %c0_198] : memref<1x128xf32, #tpu.memory_space<vmem>>, vector<1x128xf32>
    %486 = vector.broadcast %485 : vector<1x128xf32> to vector<16x128xf32>
    %487 = arith.addf %484, %486 : vector<16x128xf32>
    %c0_199 = arith.constant 0 : index
    %c0_200 = arith.constant 0 : index
    %488 = vector.load %arg17[%c0_199, %c0_200] : memref<16x128xf32, #tpu.memory_space<vmem>>, vector<16x128xf32>
    tpu.vector_store %arg17[%c0_199, %c0_200], %487 {strides = array<i32>} : memref<16x128xf32, #tpu.memory_space<vmem>>, vector<16x128xf32>,
    return
  }
}

</mosaic_0001>

<llo_original>
// kernel: decoder_forward.1
$region0: #{decoder_forward.1}
  #allocation0 [shape = 'u32[]', space=smem, size = 0x4, offset = 0x4, fixed_abs, tag = 'smem constant byte address 0x4 - core index']
  #allocation1 [shape = 'u32[144,128]{1,0:T(1,128)}', space=vmem, size = 0x12000, scoped, tag = 'internal scratch']
  %s0 = inlined_call_operand.vmem [shape: s32[16,1], index: 0, kind: input, shape index: {}]
  %s1 = inlined_call_operand.vmem [shape: f32[64,32], index: 1, kind: input, shape index: {}]
  %s2 = inlined_call_operand.vmem [shape: f32[8,32], index: 2, kind: input, shape index: {}]
  %s3 = inlined_call_operand.vmem [shape: f32[2,32,96], index: 3, kind: input, shape index: {}]
  %s4 = inlined_call_operand.vmem [shape: f32[2,1,96], index: 4, kind: input, shape index: {}]
  %s5 = inlined_call_operand.vmem [shape: f32[2,32,32], index: 5, kind: input, shape index: {}]
  %s6 = inlined_call_operand.vmem [shape: f32[2,1,32], index: 6, kind: input, shape index: {}]
  %s7 = inlined_call_operand.vmem [shape: f32[2,1,32], index: 7, kind: input, shape index: {}]
  %s8 = inlined_call_operand.vmem [shape: f32[2,1,32], index: 8, kind: input, shape index: {}]
  %s9 = inlined_call_operand.vmem [shape: f32[2,32,64], index: 9, kind: input, shape index: {}]
  %s10 = inlined_call_operand.vmem [shape: f32[2,1,64], index: 10, kind: input, shape index: {}]
  %s11 = inlined_call_operand.vmem [shape: f32[2,64,32], index: 11, kind: input, shape index: {}]
  %s12 = inlined_call_operand.vmem [shape: f32[2,1,32], index: 12, kind: input, shape index: {}]
  %s13 = inlined_call_operand.vmem [shape: f32[2,1,32], index: 13, kind: input, shape index: {}]
  %s14 = inlined_call_operand.vmem [shape: f32[2,1,32], index: 14, kind: input, shape index: {}]
  %s15 = inlined_call_operand.vmem [shape: f32[32,128], index: 15, kind: input, shape index: {}]
  %s16 = inlined_call_operand.vmem [shape: f32[1,128], index: 16, kind: input, shape index: {}]
  %s17 = inlined_call_operand.vmem [shape: f32[16,128], index: 17, kind: output, shape index: {}]
  %s18 = sld [smem:[#allocation0]]
  $region78: #{decoder_forward.1} parent=0
    _
  %s20 = ssub.s32 1, %s18
  %s21 = scalar_select 0, %s20, %s18
  // Predicated region
  $region2: #{decoder_forward.1} parent=0 // pred_check
    _
  $region3: #{decoder_forward.1} parent=0 // pred_check_branch
    %23 = sbr.rel (0) target = $region5
  $region4: #{decoder_forward.1} parent=0 // pred_region
    _
  $region5: #{decoder_forward.1} parent=0 // pred_fallthru
    _
  // Predicated region
  $region6: #{decoder_forward.1} parent=0 // pred_check
    _
  $region7: #{decoder_forward.1} parent=0 // pred_check_branch
    %25 = sbr.rel (0) target = $region9
  $region8: #{decoder_forward.1} parent=0 // pred_region
    _
  $region9: #{decoder_forward.1} parent=0 // pred_fallthru
    _
  // Predicated region
  $region10: #{decoder_forward.1} parent=0 // pred_check
    _
  $region11: #{decoder_forward.1} parent=0 // pred_check_branch
    %27 = sbr.rel (0) target = $region13
  $region12: #{decoder_forward.1} parent=0 // pred_region
    _
  $region13: #{decoder_forward.1} parent=0 // pred_fallthru
    _
  // Predicated region
  $region14: #{decoder_forward.1} parent=0 // pred_check
    _
  $region15: #{decoder_forward.1} parent=0 // pred_check_branch
    %29 = sbr.rel (0) target = $region17
  $region16: #{decoder_forward.1} parent=0 // pred_region
    _
  $region17: #{decoder_forward.1} parent=0 // pred_fallthru
    _
  // Predicated region
  $region18: #{decoder_forward.1} parent=0 // pred_check
    _
  $region19: #{decoder_forward.1} parent=0 // pred_check_branch
    %31 = sbr.rel (0) target = $region21
  $region20: #{decoder_forward.1} parent=0 // pred_region
    _
  $region21: #{decoder_forward.1} parent=0 // pred_fallthru
    _
  // Predicated region
  $region22: #{decoder_forward.1} parent=0 // pred_check
    _
  $region23: #{decoder_forward.1} parent=0 // pred_check_branch
    %33 = sbr.rel (0) target = $region25
  $region24: #{decoder_forward.1} parent=0 // pred_region
    _
  $region25: #{decoder_forward.1} parent=0 // pred_fallthru
    _
  // Predicated region
  $region26: #{decoder_forward.1} parent=0 // pred_check
    _
  $region27: #{decoder_forward.1} parent=0 // pred_check_branch
    %35 = sbr.rel (0) target = $region29
  $region28: #{decoder_forward.1} parent=0 // pred_region
    _
  $region29: #{decoder_forward.1} parent=0 // pred_fallthru
    _
  // Predicated region
  $region30: #{decoder_forward.1} parent=0 // pred_check
    _
  $region31: #{decoder_forward.1} parent=0 // pred_check_branch
    %37 = sbr.rel (0) target = $region33
  $region32: #{decoder_forward.1} parent=0 // pred_region
    _
  $region33: #{decoder_forward.1} parent=0 // pred_fallthru
    _
  // Predicated region
  $region34: #{decoder_forward.1} parent=0 // pred_check
    _
  $region35: #{decoder_forward.1} parent=0 // pred_check_branch
    %39 = sbr.rel (0) target = $region37
  $region36: #{decoder_forward.1} parent=0 // pred_region
    _
  $region37: #{decoder_forward.1} parent=0 // pred_fallthru
    _
  // Predicated region
  $region38: #{decoder_forward.1} parent=0 // pred_check
    _
  $region39: #{decoder_forward.1} parent=0 // pred_check_branch
    %41 = sbr.rel (0) target = $region41
  $region40: #{decoder_forward.1} parent=0 // pred_region
    _
  $region41: #{decoder_forward.1} parent=0 // pred_fallthru
    _
  // Predicated region
  $region42: #{decoder_forward.1} parent=0 // pred_check
    _
  $region43: #{decoder_forward.1} parent=0 // pred_check_branch
    %43 = sbr.rel (0) target = $region45
  $region44: #{decoder_forward.1} parent=0 // pred_region
    _
  $region45: #{decoder_forward.1} parent=0 // pred_fallthru
    _
  // Predicated region
  $region46: #{decoder_forward.1} parent=0 // pred_check
    _
  $region47: #{decoder_forward.1} parent=0 // pred_check_branch
    %45 = sbr.rel (0) target = $region49
  $region48: #{decoder_forward.1} parent=0 // pred_region
    _
  $region49: #{decoder_forward.1} parent=0 // pred_fallthru
    _
  // Predicated region
  $region50: #{decoder_forward.1} parent=0 // pred_check
    _
  $region51: #{decoder_forward.1} parent=0 // pred_check_branch
    %47 = sbr.rel (0) target = $region53
  $region52: #{decoder_forward.1} parent=0 // pred_region
    _
  $region53: #{decoder_forward.1} parent=0 // pred_fallthru
    _
  // Predicated region
  $region54: #{decoder_forward.1} parent=0 // pred_check
    _
  $region55: #{decoder_forward.1} parent=0 // pred_check_branch
    %49 = sbr.rel (0) target = $region57
  $region56: #{decoder_forward.1} parent=0 // pred_region
    _
  $region57: #{decoder_forward.1} parent=0 // pred_fallthru
    _
  // Predicated region
  $region58: #{decoder_forward.1} parent=0 // pred_check
    _
  $region59: #{decoder_forward.1} parent=0 // pred_check_branch
    %51 = sbr.rel (0) target = $region61
  $region60: #{decoder_forward.1} parent=0 // pred_region
    _
  $region61: #{decoder_forward.1} parent=0 // pred_fallthru
    _
  // Predicated region
  $region62: #{decoder_forward.1} parent=0 // pred_check
    _
  $region63: #{decoder_forward.1} parent=0 // pred_check_branch
    %53 = sbr.rel (0) target = $region65
  $region64: #{decoder_forward.1} parent=0 // pred_region
    _
  $region65: #{decoder_forward.1} parent=0 // pred_fallthru
    _
  // Predicated region
  $region66: #{decoder_forward.1} parent=0 // pred_check
    _
  $region67: #{decoder_forward.1} parent=0 // pred_check_branch
    %55 = sbr.rel (0) target = $region69
  $region68: #{decoder_forward.1} parent=0 // pred_region
    _
  $region69: #{decoder_forward.1} parent=0 // pred_fallthru
    _
  %v56 = vld [vmem:[%s0] sm:$0xff]
  %v57 = vld [vmem:[%s0 + $0x8] sm:$0xff]
  %v58 = vlaneseq
  %v59 = vand.u32 %v58, 127
  %60 = vset.pattern.permute.xlu0 0
  %61 = vperm.xlu0 %60, %v56
  %v62 = vpop.permute.xlu0 %61
  %63 = vset.pattern.permute.xlu0 0
  %64 = vperm.xlu0 %63, %v57
  %v65 = vpop.permute.xlu0 %64
  %vm66 = vcmp.eq.s32.totalorder %v59, %v62
  %vm67 = vcmp.eq.s32.totalorder %v59, %v65
  %v68 = vsel %vm66, 1, 0
  %v69 = vsel %vm67, 1, 0
  %v70 = vcvt.s32.f32 %v68
  %v71 = vcvt.s32.f32 %v69
  %v72 = vld [vmem:[%s1] sm:$0xff]
  %v73 = vld [vmem:[%s1 + $0x8] sm:$0xff]
  %v74 = vld [vmem:[%s1 + $0x10] sm:$0xff]
  %v75 = vld [vmem:[%s1 + $0x18] sm:$0xff]
  %v76 = vld [vmem:[%s1 + $0x20] sm:$0xff]
  %v77 = vld [vmem:[%s1 + $0x28] sm:$0xff]
  %v78 = vld [vmem:[%s1 + $0x30] sm:$0xff]
  %v79 = vld [vmem:[%s1 + $0x38] sm:$0xff]
  %v80 = vld [vmem:[%s2] sm:$0xff]
  %vm81 = vcmask 523264
  %v83 = vsel %vm81, %v70, 0
  %v86 = vsel %vm81, %v71, 0
  %88 = vmatprep.subr.mxu0 0.0
  %89 = vmatpush1.msra.mxu0 %v72
  %90 = vmatprep.subr.mxu0 0.0
  %91 = vmatpush1.msra.mxu0 %v73
  %92 = vmatprep.subr.mxu0 0.0
  %93 = vmatpush1.msra.mxu0 %v74
  %94 = vmatprep.subr.mxu0 0.0
  %95 = vmatpush1.msra.mxu0 %v75
  %96 = vmatprep.subr.mxu0 0.0
  %97 = vmatpush1.msra.mxu0 %v76
  %98 = vmatprep.subr.mxu0 0.0
  %99 = vmatpush1.msra.mxu0 %v77
  %100 = vmatprep.subr.mxu0 0.0
  %101 = vmatpush1.msra.mxu0 %v78
  %102 = vmatprep.subr.mxu0 0.0
  %103 = vmatpush1.msra.mxu0 %v79
  %104 = vmatprep.subr.mxu0 0.0
  %105 = vmatpush1.msra.mxu0 0.0
  %106 = vmatprep.subr.mxu0 0.0
  %107 = vmatpush1.msra.mxu0 0.0
  %108 = vmatprep.subr.mxu0 0.0
  %109 = vmatpush1.msra.mxu0 0.0
  %110 = vmatprep.subr.mxu0 0.0
  %111 = vmatpush1.msra.mxu0 0.0
  %112 = vmatprep.subr.mxu0 0.0
  %113 = vmatpush1.msra.mxu0 0.0
  %114 = vmatprep.subr.mxu0 0.0
  %115 = vmatpush1.msra.mxu0 0.0
  %116 = vmatprep.subr.mxu0 0.0
  %117 = vmatpush1.msra.mxu0 0.0
  %118 = vmatprep.subr.mxu0 0.0
  %119 = vmatpush1.msra.mxu0 0.0
  %120 = vmatprep.subr.mxu0 0.0
  %121 = vmatpush1.msra.mxu0 0.0
  %122 = vmatprep.subr.mxu0 0.0
  %123 = vmatpush1.msra.mxu0 0.0
  %124 = vmatprep.subr.mxu0 0.0
  %125 = vmatpush1.msra.mxu0 0.0
  %126 = vmatprep.subr.mxu0 0.0
  %127 = vmatpush1.msra.mxu0 0.0
  %128 = vmatprep.subr.mxu0 0.0
  %129 = vmatpush1.msra.mxu0 0.0
  %130 = vmatprep.subr.mxu0 0.0
  %131 = vmatpush1.msra.mxu0 0.0
  %132 = vmatprep.subr.mxu0 0.0
  %133 = vmatpush1.msra.mxu0 0.0
  %134 = vmatprep.subr.mxu0 0.0
  %135 = vmatpush1.msra.mxu0 0.0
  %136 = vmatprep.subr.mxu0 0.0
  %137 = vmatpush1.msra.mxu0 0.0
  %138 = vmatprep.subr.mxu0 0.0
  %139 = vmatpush1.msra.mxu0 0.0
  %140 = vmatprep.subr.mxu0 0.0
  %141 = vmatpush1.msra.mxu0 0.0
  %142 = vmatprep.subr.mxu0 0.0
  %143 = vmatpush1.msra.mxu0 0.0
  %144 = vmatprep.subr.mxu0 0.0
  %145 = vmatpush1.msra.mxu0 0.0
  %146 = vmatprep.subr.mxu0 0.0
  %147 = vmatpush1.msra.mxu0 0.0
  %148 = vmatprep.subr.mxu0 0.0
  %149 = vmatpush1.msra.mxu0 0.0
  %150 = vmatprep.subr.mxu0 0.0
  %151 = vmatpush1.msra.mxu0 0.0
  %152 = vmatprep.mubr.f32.mxu0 0.0
  %153 = vmatmul.mubr.f32.gmra.mrb[0].mxu0 %v83
  %v154 = vpop.f32.mrb[0].mxu0
  %v155 = vadd.f32 %v80, %v154
  %v156 = vpop.f32.mrb[0].mxu0
  %157 = vmatprep.mubr.f32.mxu0 0.0
  %158 = vmatmul.mubr.f32.gmra.mrb[0].mxu0 %v86
  %v159 = vpop.f32.mrb[0].mxu0
  %v160 = vadd.f32 %v80, %v159
  %v161 = vpop.f32.mrb[0].mxu0
  %162 = vdwg.mxu0
  %v163 = vld [vmem:[%s3] sm:$0xff]
  %v164 = vld [vmem:[%s3 + $0x8] sm:$0xff]
  %v165 = vld [vmem:[%s3 + $0x10] sm:$0xff]
  %v166 = vld [vmem:[%s3 + $0x18] sm:$0xff]
  %v167 = vld [vmem:[%s4] sm:$0x1]
  %v168 = vld [vmem:[%s5] sm:$0xff]
  %v169 = vld [vmem:[%s5 + $0x8] sm:$0xff]
  %v170 = vld [vmem:[%s5 + $0x10] sm:$0xff]
  %v171 = vld [vmem:[%s5 + $0x18] sm:$0xff]
  %v172 = vld [vmem:[%s6] sm:$0x1]
  %v173 = vld [vmem:[%s7] sm:$0x1]
  %v174 = vld [vmem:[%s8] sm:$0x1]
  %v175 = vld [vmem:[%s9] sm:$0xff]
  %v176 = vld [vmem:[%s9 + $0x8] sm:$0xff]
  %v177 = vld [vmem:[%s9 + $0x10] sm:$0xff]
  %v178 = vld [vmem:[%s9 + $0x18] sm:$0xff]
  %v179 = vld [vmem:[%s10] sm:$0x1]
  %v180 = vld [vmem:[%s11] sm:$0xff]
  %v181 = vld [vmem:[%s11 + $0x8] sm:$0xff]
  %v182 = vld [vmem:[%s11 + $0x10] sm:$0xff]
  %v183 = vld [vmem:[%s11 + $0x18] sm:$0xff]
  %v184 = vld [vmem:[%s11 + $0x20] sm:$0xff]
  %v185 = vld [vmem:[%s11 + $0x28] sm:$0xff]
  %v186 = vld [vmem:[%s11 + $0x30] sm:$0xff]
  %v187 = vld [vmem:[%s11 + $0x38] sm:$0xff]
  %v188 = vld [vmem:[%s12] sm:$0x1]
  %v189 = vld [vmem:[%s13] sm:$0x1]
  %v190 = vld [vmem:[%s14] sm:$0x1]
  %v192 = vlaneseq
  %v193 = vshrl.u32 %v192, 7
  %v194 = vsub.s32 0, %v193
  %v195 = vrot.slane %v167, %v194
  %vm197 = vcmask 261120
  %v199 = vsel %vm197, %v155, 0
  %v202 = vsel %vm197, %v160, 0
  %204 = vmatprep.subr.mxu0 0.0
  %205 = vmatpush1.msra.mxu0 %v163
  %206 = vmatprep.subr.mxu0 0.0
  %207 = vmatpush1.msra.mxu0 %v164
  %208 = vmatprep.subr.mxu0 0.0
  %209 = vmatpush1.msra.mxu0 %v165
  %210 = vmatprep.subr.mxu0 0.0
  %211 = vmatpush1.msra.mxu0 %v166
  %212 = vmatprep.subr.mxu0 0.0
  %213 = vmatpush1.msra.mxu0 0.0
  %214 = vmatprep.subr.mxu0 0.0
  %215 = vmatpush1.msra.mxu0 0.0
  %216 = vmatprep.subr.mxu0 0.0
  %217 = vmatpush1.msra.mxu0 0.0
  %218 = vmatprep.subr.mxu0 0.0
  %219 = vmatpush1.msra.mxu0 0.0
  %220 = vmatprep.subr.mxu0 0.0
  %221 = vmatpush1.msra.mxu0 0.0
  %222 = vmatprep.subr.mxu0 0.0
  %223 = vmatpush1.msra.mxu0 0.0
  %224 = vmatprep.subr.mxu0 0.0
  %225 = vmatpush1.msra.mxu0 0.0
  %226 = vmatprep.subr.mxu0 0.0
  %227 = vmatpush1.msra.mxu0 0.0
  %228 = vmatprep.subr.mxu0 0.0
  %229 = vmatpush1.msra.mxu0 0.0
  %230 = vmatprep.subr.mxu0 0.0
  %231 = vmatpush1.msra.mxu0 0.0
  %232 = vmatprep.subr.mxu0 0.0
  %233 = vmatpush1.msra.mxu0 0.0
  %234 = vmatprep.subr.mxu0 0.0
  %235 = vmatpush1.msra.mxu0 0.0
  %236 = vmatprep.subr.mxu0 0.0
  %237 = vmatpush1.msra.mxu0 0.0
  %238 = vmatprep.subr.mxu0 0.0
  %239 = vmatpush1.msra.mxu0 0.0
  %240 = vmatprep.subr.mxu0 0.0
  %241 = vmatpush1.msra.mxu0 0.0
  %242 = vmatprep.subr.mxu0 0.0
  %243 = vmatpush1.msra.mxu0 0.0
  %244 = vmatprep.subr.mxu0 0.0
  %245 = vmatpush1.msra.mxu0 0.0
  %246 = vmatprep.subr.mxu0 0.0
  %247 = vmatpush1.msra.mxu0 0.0
  %248 = vmatprep.subr.mxu0 0.0
  %249 = vmatpush1.msra.mxu0 0.0
  %250 = vmatprep.subr.mxu0 0.0
  %251 = vmatpush1.msra.mxu0 0.0
  %252 = vmatprep.subr.mxu0 0.0
  %253 = vmatpush1.msra.mxu0 0.0
  %254 = vmatprep.subr.mxu0 0.0
  %255 = vmatpush1.msra.mxu0 0.0
  %256 = vmatprep.subr.mxu0 0.0
  %257 = vmatpush1.msra.mxu0 0.0
  %258 = vmatprep.subr.mxu0 0.0
  %259 = vmatpush1.msra.mxu0 0.0
  %260 = vmatprep.subr.mxu0 0.0
  %261 = vmatpush1.msra.mxu0 0.0
  %262 = vmatprep.subr.mxu0 0.0
  %263 = vmatpush1.msra.mxu0 0.0
  %264 = vmatprep.subr.mxu0 0.0
  %265 = vmatpush1.msra.mxu0 0.0
  %266 = vmatprep.subr.mxu0 0.0
  %267 = vmatpush1.msra.mxu0 0.0
  %268 = vmatprep.mubr.f32.mxu0 0.0
  %269 = vmatmul.mubr.f32.gmra.mrb[0].mxu0 %v199
  %v270 = vpop.f32.mrb[0].mxu0
  %v271 = vadd.f32 %v195, %v270
  %v272 = vpop.f32.mrb[0].mxu0
  %273 = vmatprep.mubr.f32.mxu0 0.0
  %274 = vmatmul.mubr.f32.gmra.mrb[0].mxu0 %v202
  %v275 = vpop.f32.mrb[0].mxu0
  %v276 = vadd.f32 %v195, %v275
  %v277 = vpop.f32.mrb[0].mxu0
  %278 = vdwg.mxu0
  %280 = vrot.lane.b32.xlu0 %v271, 96
  %v281 = vpop.permute.xlu0 %280
  %vm282 = vcmask 64512
  %v283 = vsel %vm282, %v271, 0
  %v285 = vsel %vm282, %v281, 0
  %287 = vmatprep.subr.mxu0 0.0
  %288 = vmatpush1.xpose.msra.mxu0 %v285
  %289 = vmatprep.subr.mxu0 0.0
  %290 = vmatpush1.xpose.msra.mxu0 0.0
  %291 = vmatprep.subr.mxu0 0.0
  %292 = vmatpush1.xpose.msra.mxu0 0.0
  %293 = vmatprep.subr.mxu0 0.0
  %294 = vmatpush1.xpose.msra.mxu0 0.0
  %295 = vmatprep.subr.mxu0 0.0
  %296 = vmatpush1.xpose.msra.mxu0 0.0
  %297 = vmatprep.subr.mxu0 0.0
  %298 = vmatpush1.xpose.msra.mxu0 0.0
  %299 = vmatprep.subr.mxu0 0.0
  %300 = vmatpush1.xpose.msra.mxu0 0.0
  %301 = vmatprep.subr.mxu0 0.0
  %302 = vmatpush1.xpose.msra.mxu0 0.0
  %303 = vmatprep.subr.mxu0 0.0
  %304 = vmatpush1.xpose.msra.mxu0 0.0
  %305 = vmatprep.subr.mxu0 0.0
  %306 = vmatpush1.xpose.msra.mxu0 0.0
  %307 = vmatprep.subr.mxu0 0.0
  %308 = vmatpush1.xpose.msra.mxu0 0.0
  %309 = vmatprep.subr.mxu0 0.0
  %310 = vmatpush1.xpose.msra.mxu0 0.0
  %311 = vmatprep.subr.mxu0 0.0
  %312 = vmatpush1.xpose.msra.mxu0 0.0
  %313 = vmatprep.subr.mxu0 0.0
  %314 = vmatpush1.xpose.msra.mxu0 0.0
  %315 = vmatprep.subr.mxu0 0.0
  %316 = vmatpush1.xpose.msra.mxu0 0.0
  %317 = vmatprep.subr.mxu0 0.0
  %318 = vmatpush1.xpose.msra.mxu0 0.0
  %319 = vmatprep.subr.mxu0 0.0
  %320 = vmatpush1.xpose.msra.mxu0 0.0
  %321 = vmatprep.subr.mxu0 0.0
  %322 = vmatpush1.xpose.msra.mxu0 0.0
  %323 = vmatprep.subr.mxu0 0.0
  %324 = vmatpush1.xpose.msra.mxu0 0.0
  %325 = vmatprep.subr.mxu0 0.0
  %326 = vmatpush1.xpose.msra.mxu0 0.0
  %327 = vmatprep.subr.mxu0 0.0
  %328 = vmatpush1.xpose.msra.mxu0 0.0
  %329 = vmatprep.subr.mxu0 0.0
  %330 = vmatpush1.xpose.msra.mxu0 0.0
  %331 = vmatprep.subr.mxu0 0.0
  %332 = vmatpush1.xpose.msra.mxu0 0.0
  %333 = vmatprep.subr.mxu0 0.0
  %334 = vmatpush1.xpose.msra.mxu0 0.0
  %335 = vmatprep.subr.mxu0 0.0
  %336 = vmatpush1.xpose.msra.mxu0 0.0
  %337 = vmatprep.subr.mxu0 0.0
  %338 = vmatpush1.xpose.msra.mxu0 0.0
  %339 = vmatprep.subr.mxu0 0.0
  %340 = vmatpush1.xpose.msra.mxu0 0.0
  %341 = vmatprep.subr.mxu0 0.0
  %342 = vmatpush1.xpose.msra.mxu0 0.0
  %343 = vmatprep.subr.mxu0 0.0
  %344 = vmatpush1.xpose.msra.mxu0 0.0
  %345 = vmatprep.subr.mxu0 0.0
  %346 = vmatpush1.xpose.msra.mxu0 0.0
  %347 = vmatprep.subr.mxu0 0.0
  %348 = vmatpush1.xpose.msra.mxu0 0.0
  %349 = vmatprep.subr.mxu0 0.0
  %350 = vmatpush1.xpose.msra.mxu0 0.0
  %351 = vmatprep.mubr.f32.mxu0 0.0
  %352 = vmatmul.mubr.f32.gmra.mrb[0].mxu0 %v283
  %v353 = vpop.f32.mrb[0].mxu0
  %v354 = vadd.f32 0.0, %v353
  %v355 = vpop.f32.mrb[0].mxu0
  %356 = vdwg.mxu0
  %v357 = vmul.f32 %v354, 0.35355338
  %v358 = vsel %vm282, %v357, -inf
  %359 = vmax.xlane.f32.xlu0 %v358
  %v360 = vpop.xlane.xlu0 %359
  %v361 = vsub.f32 %v357, %v360
  %v362 = vmul.f32 %v361, 1.442695
  %v363 = vpow.pop %v362
  %v364 = vsel %vm282, %v363, 0.0
  %365 = vadd.xlane.f32.xlu0 %v364
  %v366 = vpop.xlane.xlu0 %365
  %v367 = vrcp.pop %v366
  %v368 = vmul.f32 %v363, %v367
  %369 = vrot.lane.b32.xlu0 %v271, 64
  %v370 = vpop.permute.xlu0 %369
  %v373 = vsel %vm282, %v368, 0
  %375 = vmatprep.subr.mxu0 0.0
  %376 = vmatpush1.msra.mxu0 %v370
  %377 = vmatprep.subr.mxu0 0.0
  %378 = vmatpush1.msra.mxu0 0.0
  %379 = vmatprep.subr.mxu0 0.0
  %380 = vmatpush1.msra.mxu0 0.0
  %381 = vmatprep.subr.mxu0 0.0
  %382 = vmatpush1.msra.mxu0 0.0
  %383 = vmatprep.subr.mxu0 0.0
  %384 = vmatpush1.msra.mxu0 0.0
  %385 = vmatprep.subr.mxu0 0.0
  %386 = vmatpush1.msra.mxu0 0.0
  %387 = vmatprep.subr.mxu0 0.0
  %388 = vmatpush1.msra.mxu0 0.0
  %389 = vmatprep.subr.mxu0 0.0
  %390 = vmatpush1.msra.mxu0 0.0
  %391 = vmatprep.subr.mxu0 0.0
  %392 = vmatpush1.msra.mxu0 0.0
  %393 = vmatprep.subr.mxu0 0.0
  %394 = vmatpush1.msra.mxu0 0.0
  %395 = vmatprep.subr.mxu0 0.0
  %396 = vmatpush1.msra.mxu0 0.0
  %397 = vmatprep.subr.mxu0 0.0
  %398 = vmatpush1.msra.mxu0 0.0
  %399 = vmatprep.subr.mxu0 0.0
  %400 = vmatpush1.msra.mxu0 0.0
  %401 = vmatprep.subr.mxu0 0.0
  %402 = vmatpush1.msra.mxu0 0.0
  %403 = vmatprep.subr.mxu0 0.0
  %404 = vmatpush1.msra.mxu0 0.0
  %405 = vmatprep.subr.mxu0 0.0
  %406 = vmatpush1.msra.mxu0 0.0
  %407 = vmatprep.subr.mxu0 0.0
  %408 = vmatpush1.msra.mxu0 0.0
  %409 = vmatprep.subr.mxu0 0.0
  %410 = vmatpush1.msra.mxu0 0.0
  %411 = vmatprep.subr.mxu0 0.0
  %412 = vmatpush1.msra.mxu0 0.0
  %413 = vmatprep.subr.mxu0 0.0
  %414 = vmatpush1.msra.mxu0 0.0
  %415 = vmatprep.subr.mxu0 0.0
  %416 = vmatpush1.msra.mxu0 0.0
  %417 = vmatprep.subr.mxu0 0.0
  %418 = vmatpush1.msra.mxu0 0.0
  %419 = vmatprep.subr.mxu0 0.0
  %420 = vmatpush1.msra.mxu0 0.0
  %421 = vmatprep.subr.mxu0 0.0
  %422 = vmatpush1.msra.mxu0 0.0
  %423 = vmatprep.subr.mxu0 0.0
  %424 = vmatpush1.msra.mxu0 0.0
  %425 = vmatprep.subr.mxu0 0.0
  %426 = vmatpush1.msra.mxu0 0.0
  %427 = vmatprep.subr.mxu0 0.0
  %428 = vmatpush1.msra.mxu0 0.0
  %429 = vmatprep.subr.mxu0 0.0
  %430 = vmatpush1.msra.mxu0 0.0
  %431 = vmatprep.subr.mxu0 0.0
  %432 = vmatpush1.msra.mxu0 0.0
  %433 = vmatprep.subr.mxu0 0.0
  %434 = vmatpush1.msra.mxu0 0.0
  %435 = vmatprep.subr.mxu0 0.0
  %436 = vmatpush1.msra.mxu0 0.0
  %437 = vmatprep.subr.mxu0 0.0
  %438 = vmatpush1.msra.mxu0 0.0
  %439 = vmatprep.mubr.f32.mxu0 0.0
  %440 = vmatmul.mubr.f32.gmra.mrb[0].mxu0 %v373
  %v441 = vpop.f32.mrb[0].mxu0
  %v442 = vadd.f32 0.0, %v441
  %v443 = vpop.f32.mrb[0].mxu0
  %444 = vdwg.mxu0
  %446 = vrot.lane.b32.xlu0 %v276, 96
  %v447 = vpop.permute.xlu0 %446
  %v448 = vsel %vm282, %v276, 0
  %v450 = vsel %vm282, %v447, 0
  %452 = vmatprep.subr.mxu0 0.0
  %453 = vmatpush1.xpose.msra.mxu0 %v450
  %454 = vmatprep.subr.mxu0 0.0
  %455 = vmatpush1.xpose.msra.mxu0 0.0
  %456 = vmatprep.subr.mxu0 0.0
  %457 = vmatpush1.xpose.msra.mxu0 0.0
  %458 = vmatprep.subr.mxu0 0.0
  %459 = vmatpush1.xpose.msra.mxu0 0.0
  %460 = vmatprep.subr.mxu0 0.0
  %461 = vmatpush1.xpose.msra.mxu0 0.0
  %462 = vmatprep.subr.mxu0 0.0
  %463 = vmatpush1.xpose.msra.mxu0 0.0
  %464 = vmatprep.subr.mxu0 0.0
  %465 = vmatpush1.xpose.msra.mxu0 0.0
  %466 = vmatprep.subr.mxu0 0.0
  %467 = vmatpush1.xpose.msra.mxu0 0.0
  %468 = vmatprep.subr.mxu0 0.0
  %469 = vmatpush1.xpose.msra.mxu0 0.0
  %470 = vmatprep.subr.mxu0 0.0
  %471 = vmatpush1.xpose.msra.mxu0 0.0
  %472 = vmatprep.subr.mxu0 0.0
  %473 = vmatpush1.xpose.msra.mxu0 0.0
  %474 = vmatprep.subr.mxu0 0.0
  %475 = vmatpush1.xpose.msra.mxu0 0.0
  %476 = vmatprep.subr.mxu0 0.0
  %477 = vmatpush1.xpose.msra.mxu0 0.0
  %478 = vmatprep.subr.mxu0 0.0
  %479 = vmatpush1.xpose.msra.mxu0 0.0
  %480 = vmatprep.subr.mxu0 0.0
  %481 = vmatpush1.xpose.msra.mxu0 0.0
  %482 = vmatprep.subr.mxu0 0.0
  %483 = vmatpush1.xpose.msra.mxu0 0.0
  %484 = vmatprep.subr.mxu0 0.0
  %485 = vmatpush1.xpose.msra.mxu0 0.0
  %486 = vmatprep.subr.mxu0 0.0
  %487 = vmatpush1.xpose.msra.mxu0 0.0
  %488 = vmatprep.subr.mxu0 0.0
  %489 = vmatpush1.xpose.msra.mxu0 0.0
  %490 = vmatprep.subr.mxu0 0.0
  %491 = vmatpush1.xpose.msra.mxu0 0.0
  %492 = vmatprep.subr.mxu0 0.0
  %493 = vmatpush1.xpose.msra.mxu0 0.0
  %494 = vmatprep.subr.mxu0 0.0
  %495 = vmatpush1.xpose.msra.mxu0 0.0
  %496 = vmatprep.subr.mxu0 0.0
  %497 = vmatpush1.xpose.msra.mxu0 0.0
  %498 = vmatprep.subr.mxu0 0.0
  %499 = vmatpush1.xpose.msra.mxu0 0.0
  %500 = vmatprep.subr.mxu0 0.0
  %501 = vmatpush1.xpose.msra.mxu0 0.0
  %502 = vmatprep.subr.mxu0 0.0
  %503 = vmatpush1.xpose.msra.mxu0 0.0
  %504 = vmatprep.subr.mxu0 0.0
  %505 = vmatpush1.xpose.msra.mxu0 0.0
  %506 = vmatprep.subr.mxu0 0.0
  %507 = vmatpush1.xpose.msra.mxu0 0.0
  %508 = vmatprep.subr.mxu0 0.0
  %509 = vmatpush1.xpose.msra.mxu0 0.0
  %510 = vmatprep.subr.mxu0 0.0
  %511 = vmatpush1.xpose.msra.mxu0 0.0
  %512 = vmatprep.subr.mxu0 0.0
  %513 = vmatpush1.xpose.msra.mxu0 0.0
  %514 = vmatprep.subr.mxu0 0.0
  %515 = vmatpush1.xpose.msra.mxu0 0.0
  %516 = vmatprep.mubr.f32.mxu0 0.0
  %517 = vmatmul.mubr.f32.gmra.mrb[0].mxu0 %v448
  %v518 = vpop.f32.mrb[0].mxu0
  %v519 = vadd.f32 0.0, %v518
  %v520 = vpop.f32.mrb[0].mxu0
  %521 = vdwg.mxu0
  %v522 = vmul.f32 %v519, 0.35355338
  %v523 = vsel %vm282, %v522, -inf
  %524 = vmax.xlane.f32.xlu0 %v523
  %v525 = vpop.xlane.xlu0 %524
  %v526 = vsub.f32 %v522, %v525
  %v527 = vmul.f32 %v526, 1.442695
  %v528 = vpow.pop %v527
  %v529 = vsel %vm282, %v528, 0.0
  %530 = vadd.xlane.f32.xlu0 %v529
  %v531 = vpop.xlane.xlu0 %530
  %v532 = vrcp.pop %v531
  %v533 = vmul.f32 %v528, %v532
  %534 = vrot.lane.b32.xlu0 %v276, 64
  %v535 = vpop.permute.xlu0 %534
  %v538 = vsel %vm282, %v533, 0
  %540 = vmatprep.subr.mxu0 0.0
  %541 = vmatpush1.msra.mxu0 %v535
  %542 = vmatprep.subr.mxu0 0.0
  %543 = vmatpush1.msra.mxu0 0.0
  %544 = vmatprep.subr.mxu0 0.0
  %545 = vmatpush1.msra.mxu0 0.0
  %546 = vmatprep.subr.mxu0 0.0
  %547 = vmatpush1.msra.mxu0 0.0
  %548 = vmatprep.subr.mxu0 0.0
  %549 = vmatpush1.msra.mxu0 0.0
  %550 = vmatprep.subr.mxu0 0.0
  %551 = vmatpush1.msra.mxu0 0.0
  %552 = vmatprep.subr.mxu0 0.0
  %553 = vmatpush1.msra.mxu0 0.0
  %554 = vmatprep.subr.mxu0 0.0
  %555 = vmatpush1.msra.mxu0 0.0
  %556 = vmatprep.subr.mxu0 0.0
  %557 = vmatpush1.msra.mxu0 0.0
  %558 = vmatprep.subr.mxu0 0.0
  %559 = vmatpush1.msra.mxu0 0.0
  %560 = vmatprep.subr.mxu0 0.0
  %561 = vmatpush1.msra.mxu0 0.0
  %562 = vmatprep.subr.mxu0 0.0
  %563 = vmatpush1.msra.mxu0 0.0
  %564 = vmatprep.subr.mxu0 0.0
  %565 = vmatpush1.msra.mxu0 0.0
  %566 = vmatprep.subr.mxu0 0.0
  %567 = vmatpush1.msra.mxu0 0.0
  %568 = vmatprep.subr.mxu0 0.0
  %569 = vmatpush1.msra.mxu0 0.0
  %570 = vmatprep.subr.mxu0 0.0
  %571 = vmatpush1.msra.mxu0 0.0
  %572 = vmatprep.subr.mxu0 0.0
  %573 = vmatpush1.msra.mxu0 0.0
  %574 = vmatprep.subr.mxu0 0.0
  %575 = vmatpush1.msra.mxu0 0.0
  %576 = vmatprep.subr.mxu0 0.0
  %577 = vmatpush1.msra.mxu0 0.0
  %578 = vmatprep.subr.mxu0 0.0
  %579 = vmatpush1.msra.mxu0 0.0
  %580 = vmatprep.subr.mxu0 0.0
  %581 = vmatpush1.msra.mxu0 0.0
  %582 = vmatprep.subr.mxu0 0.0
  %583 = vmatpush1.msra.mxu0 0.0
  %584 = vmatprep.subr.mxu0 0.0
  %585 = vmatpush1.msra.mxu0 0.0
  %586 = vmatprep.subr.mxu0 0.0
  %587 = vmatpush1.msra.mxu0 0.0
  %588 = vmatprep.subr.mxu0 0.0
  %589 = vmatpush1.msra.mxu0 0.0
  %590 = vmatprep.subr.mxu0 0.0
  %591 = vmatpush1.msra.mxu0 0.0
  %592 = vmatprep.subr.mxu0 0.0
  %593 = vmatpush1.msra.mxu0 0.0
  %594 = vmatprep.subr.mxu0 0.0
  %595 = vmatpush1.msra.mxu0 0.0
  %596 = vmatprep.subr.mxu0 0.0
  %597 = vmatpush1.msra.mxu0 0.0
  %598 = vmatprep.subr.mxu0 0.0
  %599 = vmatpush1.msra.mxu0 0.0
  %600 = vmatprep.subr.mxu0 0.0
  %601 = vmatpush1.msra.mxu0 0.0
  %602 = vmatprep.subr.mxu0 0.0
  %603 = vmatpush1.msra.mxu0 0.0
  %604 = vmatprep.mubr.f32.mxu0 0.0
  %605 = vmatmul.mubr.f32.gmra.mrb[0].mxu0 %v538
  %v606 = vpop.f32.mrb[0].mxu0
  %v607 = vadd.f32 0.0, %v606
  %v608 = vpop.f32.mrb[0].mxu0
  %609 = vdwg.mxu0
  %610 = vrot.lane.b32.xlu0 %v271, 120
  %v611 = vpop.permute.xlu0 %610
  %612 = vrot.lane.b32.xlu0 %v271, 88
  %v613 = vpop.permute.xlu0 %612
  %v614 = vsel %vm282, %v611, 0
  %v616 = vsel %vm282, %v613, 0
  %618 = vmatprep.subr.mxu0 0.0
  %619 = vmatpush1.xpose.msra.mxu0 %v616
  %620 = vmatprep.subr.mxu0 0.0
  %621 = vmatpush1.xpose.msra.mxu0 0.0
  %622 = vmatprep.subr.mxu0 0.0
  %623 = vmatpush1.xpose.msra.mxu0 0.0
  %624 = vmatprep.subr.mxu0 0.0
  %625 = vmatpush1.xpose.msra.mxu0 0.0
  %626 = vmatprep.subr.mxu0 0.0
  %627 = vmatpush1.xpose.msra.mxu0 0.0
  %628 = vmatprep.subr.mxu0 0.0
  %629 = vmatpush1.xpose.msra.mxu0 0.0
  %630 = vmatprep.subr.mxu0 0.0
  %631 = vmatpush1.xpose.msra.mxu0 0.0
  %632 = vmatprep.subr.mxu0 0.0
  %633 = vmatpush1.xpose.msra.mxu0 0.0
  %634 = vmatprep.subr.mxu0 0.0
  %635 = vmatpush1.xpose.msra.mxu0 0.0
  %636 = vmatprep.subr.mxu0 0.0
  %637 = vmatpush1.xpose.msra.mxu0 0.0
  %638 = vmatprep.subr.mxu0 0.0
  %639 = vmatpush1.xpose.msra.mxu0 0.0
  %640 = vmatprep.subr.mxu0 0.0
  %641 = vmatpush1.xpose.msra.mxu0 0.0
  %642 = vmatprep.subr.mxu0 0.0
  %643 = vmatpush1.xpose.msra.mxu0 0.0
  %644 = vmatprep.subr.mxu0 0.0
  %645 = vmatpush1.xpose.msra.mxu0 0.0
  %646 = vmatprep.subr.mxu0 0.0
  %647 = vmatpush1.xpose.msra.mxu0 0.0
  %648 = vmatprep.subr.mxu0 0.0
  %649 = vmatpush1.xpose.msra.mxu0 0.0
  %650 = vmatprep.subr.mxu0 0.0
  %651 = vmatpush1.xpose.msra.mxu0 0.0
  %652 = vmatprep.subr.mxu0 0.0
  %653 = vmatpush1.xpose.msra.mxu0 0.0
  %654 = vmatprep.subr.mxu0 0.0
  %655 = vmatpush1.xpose.msra.mxu0 0.0
  %656 = vmatprep.subr.mxu0 0.0
  %657 = vmatpush1.xpose.msra.mxu0 0.0
  %658 = vmatprep.subr.mxu0 0.0
  %659 = vmatpush1.xpose.msra.mxu0 0.0
  %660 = vmatprep.subr.mxu0 0.0
  %661 = vmatpush1.xpose.msra.mxu0 0.0
  %662 = vmatprep.subr.mxu0 0.0
  %663 = vmatpush1.xpose.msra.mxu0 0.0
  %664 = vmatprep.subr.mxu0 0.0
  %665 = vmatpush1.xpose.msra.mxu0 0.0
  %666 = vmatprep.subr.mxu0 0.0
  %667 = vmatpush1.xpose.msra.mxu0 0.0
  %668 = vmatprep.subr.mxu0 0.0
  %669 = vmatpush1.xpose.msra.mxu0 0.0
  %670 = vmatprep.subr.mxu0 0.0
  %671 = vmatpush1.xpose.msra.mxu0 0.0
  %672 = vmatprep.subr.mxu0 0.0
  %673 = vmatpush1.xpose.msra.mxu0 0.0
  %674 = vmatprep.subr.mxu0 0.0
  %675 = vmatpush1.xpose.msra.mxu0 0.0
  %676 = vmatprep.subr.mxu0 0.0
  %677 = vmatpush1.xpose.msra.mxu0 0.0
  %678 = vmatprep.subr.mxu0 0.0
  %679 = vmatpush1.xpose.msra.mxu0 0.0
  %680 = vmatprep.subr.mxu0 0.0
  %681 = vmatpush1.xpose.msra.mxu0 0.0
  %682 = vmatprep.mubr.f32.mxu0 0.0
  %683 = vmatmul.mubr.f32.gmra.mrb[0].mxu0 %v614
  %v684 = vpop.f32.mrb[0].mxu0
  %v685 = vadd.f32 0.0, %v684
  %v686 = vpop.f32.mrb[0].mxu0
  %687 = vdwg.mxu0
  %v688 = vmul.f32 %v685, 0.35355338
  %v689 = vsel %vm282, %v688, -inf
  %690 = vmax.xlane.f32.xlu0 %v689
  %v691 = vpop.xlane.xlu0 %690
  %v692 = vsub.f32 %v688, %v691
  %v693 = vmul.f32 %v692, 1.442695
  %v694 = vpow.pop %v693
  %v695 = vsel %vm282, %v694, 0.0
  %696 = vadd.xlane.f32.xlu0 %v695
  %v697 = vpop.xlane.xlu0 %696
  %v698 = vrcp.pop %v697
  %v699 = vmul.f32 %v694, %v698
  %700 = vrot.lane.b32.xlu0 %v271, 56
  %v701 = vpop.permute.xlu0 %700
  %v704 = vsel %vm282, %v699, 0
  %706 = vmatprep.subr.mxu0 0.0
  %707 = vmatpush1.msra.mxu0 %v701
  %708 = vmatprep.subr.mxu0 0.0
  %709 = vmatpush1.msra.mxu0 0.0
  %710 = vmatprep.subr.mxu0 0.0
  %711 = vmatpush1.msra.mxu0 0.0
  %712 = vmatprep.subr.mxu0 0.0
  %713 = vmatpush1.msra.mxu0 0.0
  %714 = vmatprep.subr.mxu0 0.0
  %715 = vmatpush1.msra.mxu0 0.0
  %716 = vmatprep.subr.mxu0 0.0
  %717 = vmatpush1.msra.mxu0 0.0
  %718 = vmatprep.subr.mxu0 0.0
  %719 = vmatpush1.msra.mxu0 0.0
  %720 = vmatprep.subr.mxu0 0.0
  %721 = vmatpush1.msra.mxu0 0.0
  %722 = vmatprep.subr.mxu0 0.0
  %723 = vmatpush1.msra.mxu0 0.0
  %724 = vmatprep.subr.mxu0 0.0
  %725 = vmatpush1.msra.mxu0 0.0
  %726 = vmatprep.subr.mxu0 0.0
  %727 = vmatpush1.msra.mxu0 0.0
  %728 = vmatprep.subr.mxu0 0.0
  %729 = vmatpush1.msra.mxu0 0.0
  %730 = vmatprep.subr.mxu0 0.0
  %731 = vmatpush1.msra.mxu0 0.0
  %732 = vmatprep.subr.mxu0 0.0
  %733 = vmatpush1.msra.mxu0 0.0
  %734 = vmatprep.subr.mxu0 0.0
  %735 = vmatpush1.msra.mxu0 0.0
  %736 = vmatprep.subr.mxu0 0.0
  %737 = vmatpush1.msra.mxu0 0.0
  %738 = vmatprep.subr.mxu0 0.0
  %739 = vmatpush1.msra.mxu0 0.0
  %740 = vmatprep.subr.mxu0 0.0
  %741 = vmatpush1.msra.mxu0 0.0
  %742 = vmatprep.subr.mxu0 0.0
  %743 = vmatpush1.msra.mxu0 0.0
  %744 = vmatprep.subr.mxu0 0.0
  %745 = vmatpush1.msra.mxu0 0.0
  %746 = vmatprep.subr.mxu0 0.0
  %747 = vmatpush1.msra.mxu0 0.0
  %748 = vmatprep.subr.mxu0 0.0
  %749 = vmatpush1.msra.mxu0 0.0
  %750 = vmatprep.subr.mxu0 0.0
  %751 = vmatpush1.msra.mxu0 0.0
  %752 = vmatprep.subr.mxu0 0.0
  %753 = vmatpush1.msra.mxu0 0.0
  %754 = vmatprep.subr.mxu0 0.0
  %755 = vmatpush1.msra.mxu0 0.0
  %756 = vmatprep.subr.mxu0 0.0
  %757 = vmatpush1.msra.mxu0 0.0
  %758 = vmatprep.subr.mxu0 0.0
  %759 = vmatpush1.msra.mxu0 0.0
  %760 = vmatprep.subr.mxu0 0.0
  %761 = vmatpush1.msra.mxu0 0.0
  %762 = vmatprep.subr.mxu0 0.0
  %763 = vmatpush1.msra.mxu0 0.0
  %764 = vmatprep.subr.mxu0 0.0
  %765 = vmatpush1.msra.mxu0 0.0
  %766 = vmatprep.subr.mxu0 0.0
  %767 = vmatpush1.msra.mxu0 0.0
  %768 = vmatprep.subr.mxu0 0.0
  %769 = vmatpush1.msra.mxu0 0.0
  %770 = vmatprep.mubr.f32.mxu0 0.0
  %771 = vmatmul.mubr.f32.gmra.mrb[0].mxu0 %v704
  %v772 = vpop.f32.mrb[0].mxu0
  %v773 = vadd.f32 0.0, %v772
  %v774 = vpop.f32.mrb[0].mxu0
  %775 = vdwg.mxu0
  %776 = vrot.lane.b32.xlu0 %v276, 120
  %v777 = vpop.permute.xlu0 %776
  %778 = vrot.lane.b32.xlu0 %v276, 88
  %v779 = vpop.permute.xlu0 %778
  %v780 = vsel %vm282, %v777, 0
  %v782 = vsel %vm282, %v779, 0
  %784 = vmatprep.subr.mxu0 0.0
  %785 = vmatpush1.xpose.msra.mxu0 %v782
  %786 = vmatprep.subr.mxu0 0.0
  %787 = vmatpush1.xpose.msra.mxu0 0.0
  %788 = vmatprep.subr.mxu0 0.0
  %789 = vmatpush1.xpose.msra.mxu0 0.0
  %790 = vmatprep.subr.mxu0 0.0
  %791 = vmatpush1.xpose.msra.mxu0 0.0
  %792 = vmatprep.subr.mxu0 0.0
  %793 = vmatpush1.xpose.msra.mxu0 0.0
  %794 = vmatprep.subr.mxu0 0.0
  %795 = vmatpush1.xpose.msra.mxu0 0.0
  %796 = vmatprep.subr.mxu0 0.0
  %797 = vmatpush1.xpose.msra.mxu0 0.0
  %798 = vmatprep.subr.mxu0 0.0
  %799 = vmatpush1.xpose.msra.mxu0 0.0
  %800 = vmatprep.subr.mxu0 0.0
  %801 = vmatpush1.xpose.msra.mxu0 0.0
  %802 = vmatprep.subr.mxu0 0.0
  %803 = vmatpush1.xpose.msra.mxu0 0.0
  %804 = vmatprep.subr.mxu0 0.0
  %805 = vmatpush1.xpose.msra.mxu0 0.0
  %806 = vmatprep.subr.mxu0 0.0
  %807 = vmatpush1.xpose.msra.mxu0 0.0
  %808 = vmatprep.subr.mxu0 0.0
  %809 = vmatpush1.xpose.msra.mxu0 0.0
  %810 = vmatprep.subr.mxu0 0.0
  %811 = vmatpush1.xpose.msra.mxu0 0.0
  %812 = vmatprep.subr.mxu0 0.0
  %813 = vmatpush1.xpose.msra.mxu0 0.0
  %814 = vmatprep.subr.mxu0 0.0
  %815 = vmatpush1.xpose.msra.mxu0 0.0
  %816 = vmatprep.subr.mxu0 0.0
  %817 = vmatpush1.xpose.msra.mxu0 0.0
  %818 = vmatprep.subr.mxu0 0.0
  %819 = vmatpush1.xpose.msra.mxu0 0.0
  %820 = vmatprep.subr.mxu0 0.0
  %821 = vmatpush1.xpose.msra.mxu0 0.0
  %822 = vmatprep.subr.mxu0 0.0
  %823 = vmatpush1.xpose.msra.mxu0 0.0
  %824 = vmatprep.subr.mxu0 0.0
  %825 = vmatpush1.xpose.msra.mxu0 0.0
  %826 = vmatprep.subr.mxu0 0.0
  %827 = vmatpush1.xpose.msra.mxu0 0.0
  %828 = vmatprep.subr.mxu0 0.0
  %829 = vmatpush1.xpose.msra.mxu0 0.0
  %830 = vmatprep.subr.mxu0 0.0
  %831 = vmatpush1.xpose.msra.mxu0 0.0
  %832 = vmatprep.subr.mxu0 0.0
  %833 = vmatpush1.xpose.msra.mxu0 0.0
  %834 = vmatprep.subr.mxu0 0.0
  %835 = vmatpush1.xpose.msra.mxu0 0.0
  %836 = vmatprep.subr.mxu0 0.0
  %837 = vmatpush1.xpose.msra.mxu0 0.0
  %838 = vmatprep.subr.mxu0 0.0
  %839 = vmatpush1.xpose.msra.mxu0 0.0
  %840 = vmatprep.subr.mxu0 0.0
  %841 = vmatpush1.xpose.msra.mxu0 0.0
  %842 = vmatprep.subr.mxu0 0.0
  %843 = vmatpush1.xpose.msra.mxu0 0.0
  %844 = vmatprep.subr.mxu0 0.0
  %845 = vmatpush1.xpose.msra.mxu0 0.0
  %846 = vmatprep.subr.mxu0 0.0
  %847 = vmatpush1.xpose.msra.mxu0 0.0
  %848 = vmatprep.mubr.f32.mxu0 0.0
  %849 = vmatmul.mubr.f32.gmra.mrb[0].mxu0 %v780
  %v850 = vpop.f32.mrb[0].mxu0
  %v851 = vadd.f32 0.0, %v850
  %v852 = vpop.f32.mrb[0].mxu0
  %853 = vdwg.mxu0
  %v854 = vmul.f32 %v851, 0.35355338
  %v855 = vsel %vm282, %v854, -inf
  %856 = vmax.xlane.f32.xlu0 %v855
  %v857 = vpop.xlane.xlu0 %856
  %v858 = vsub.f32 %v854, %v857
  %v859 = vmul.f32 %v858, 1.442695
  %v860 = vpow.pop %v859
  %v861 = vsel %vm282, %v860, 0.0
  %862 = vadd.xlane.f32.xlu0 %v861
  %v863 = vpop.xlane.xlu0 %862
  %v864 = vrcp.pop %v863
  %v865 = vmul.f32 %v860, %v864
  %866 = vrot.lane.b32.xlu0 %v276, 56
  %v867 = vpop.permute.xlu0 %866
  %v870 = vsel %vm282, %v865, 0
  %872 = vmatprep.subr.mxu0 0.0
  %873 = vmatpush1.msra.mxu0 %v867
  %874 = vmatprep.subr.mxu0 0.0
  %875 = vmatpush1.msra.mxu0 0.0
  %876 = vmatprep.subr.mxu0 0.0
  %877 = vmatpush1.msra.mxu0 0.0
  %878 = vmatprep.subr.mxu0 0.0
  %879 = vmatpush1.msra.mxu0 0.0
  %880 = vmatprep.subr.mxu0 0.0
  %881 = vmatpush1.msra.mxu0 0.0
  %882 = vmatprep.subr.mxu0 0.0
  %883 = vmatpush1.msra.mxu0 0.0
  %884 = vmatprep.subr.mxu0 0.0
  %885 = vmatpush1.msra.mxu0 0.0
  %886 = vmatprep.subr.mxu0 0.0
  %887 = vmatpush1.msra.mxu0 0.0
  %888 = vmatprep.subr.mxu0 0.0
  %889 = vmatpush1.msra.mxu0 0.0
  %890 = vmatprep.subr.mxu0 0.0
  %891 = vmatpush1.msra.mxu0 0.0
  %892 = vmatprep.subr.mxu0 0.0
  %893 = vmatpush1.msra.mxu0 0.0
  %894 = vmatprep.subr.mxu0 0.0
  %895 = vmatpush1.msra.mxu0 0.0
  %896 = vmatprep.subr.mxu0 0.0
  %897 = vmatpush1.msra.mxu0 0.0
  %898 = vmatprep.subr.mxu0 0.0
  %899 = vmatpush1.msra.mxu0 0.0
  %900 = vmatprep.subr.mxu0 0.0
  %901 = vmatpush1.msra.mxu0 0.0
  %902 = vmatprep.subr.mxu0 0.0
  %903 = vmatpush1.msra.mxu0 0.0
  %904 = vmatprep.subr.mxu0 0.0
  %905 = vmatpush1.msra.mxu0 0.0
  %906 = vmatprep.subr.mxu0 0.0
  %907 = vmatpush1.msra.mxu0 0.0
  %908 = vmatprep.subr.mxu0 0.0
  %909 = vmatpush1.msra.mxu0 0.0
  %910 = vmatprep.subr.mxu0 0.0
  %911 = vmatpush1.msra.mxu0 0.0
  %912 = vmatprep.subr.mxu0 0.0
  %913 = vmatpush1.msra.mxu0 0.0
  %914 = vmatprep.subr.mxu0 0.0
  %915 = vmatpush1.msra.mxu0 0.0
  %916 = vmatprep.subr.mxu0 0.0
  %917 = vmatpush1.msra.mxu0 0.0
  %918 = vmatprep.subr.mxu0 0.0
  %919 = vmatpush1.msra.mxu0 0.0
  %920 = vmatprep.subr.mxu0 0.0
  %921 = vmatpush1.msra.mxu0 0.0
  %922 = vmatprep.subr.mxu0 0.0
  %923 = vmatpush1.msra.mxu0 0.0
  %924 = vmatprep.subr.mxu0 0.0
  %925 = vmatpush1.msra.mxu0 0.0
  %926 = vmatprep.subr.mxu0 0.0
  %927 = vmatpush1.msra.mxu0 0.0
  %928 = vmatprep.subr.mxu0 0.0
  %929 = vmatpush1.msra.mxu0 0.0
  %930 = vmatprep.subr.mxu0 0.0
  %931 = vmatpush1.msra.mxu0 0.0
  %932 = vmatprep.subr.mxu0 0.0
  %933 = vmatpush1.msra.mxu0 0.0
  %934 = vmatprep.subr.mxu0 0.0
  %935 = vmatpush1.msra.mxu0 0.0
  %936 = vmatprep.mubr.f32.mxu0 0.0
  %937 = vmatmul.mubr.f32.gmra.mrb[0].mxu0 %v870
  %v938 = vpop.f32.mrb[0].mxu0
  %v939 = vadd.f32 0.0, %v938
  %v940 = vpop.f32.mrb[0].mxu0
  %941 = vdwg.mxu0
  %v943 = vsel %vm282, %v773, 0
  %v946 = vsel %vm282, %v939, 0
  %948 = vmatprep.subr.mxu0 0.0
  %949 = vmatpush1.msra.mxu0 %v169
  %950 = vmatprep.subr.mxu0 0.0
  %951 = vmatpush1.msra.mxu0 0.0
  %952 = vmatprep.subr.mxu0 0.0
  %953 = vmatpush1.msra.mxu0 0.0
  %954 = vmatprep.subr.mxu0 0.0
  %955 = vmatpush1.msra.mxu0 0.0
  %956 = vmatprep.subr.mxu0 0.0
  %957 = vmatpush1.msra.mxu0 0.0
  %958 = vmatprep.subr.mxu0 0.0
  %959 = vmatpush1.msra.mxu0 0.0
  %960 = vmatprep.subr.mxu0 0.0
  %961 = vmatpush1.msra.mxu0 0.0
  %962 = vmatprep.subr.mxu0 0.0
  %963 = vmatpush1.msra.mxu0 0.0
  %964 = vmatprep.subr.mxu0 0.0
  %965 = vmatpush1.msra.mxu0 0.0
  %966 = vmatprep.subr.mxu0 0.0
  %967 = vmatpush1.msra.mxu0 0.0
  %968 = vmatprep.subr.mxu0 0.0
  %969 = vmatpush1.msra.mxu0 0.0
  %970 = vmatprep.subr.mxu0 0.0
  %971 = vmatpush1.msra.mxu0 0.0
  %972 = vmatprep.subr.mxu0 0.0
  %973 = vmatpush1.msra.mxu0 0.0
  %974 = vmatprep.subr.mxu0 0.0
  %975 = vmatpush1.msra.mxu0 0.0
  %976 = vmatprep.subr.mxu0 0.0
  %977 = vmatpush1.msra.mxu0 0.0
  %978 = vmatprep.subr.mxu0 0.0
  %979 = vmatpush1.msra.mxu0 0.0
  %980 = vmatprep.subr.mxu0 0.0
  %981 = vmatpush1.msra.mxu0 0.0
  %982 = vmatprep.subr.mxu0 0.0
  %983 = vmatpush1.msra.mxu0 0.0
  %984 = vmatprep.subr.mxu0 0.0
  %985 = vmatpush1.msra.mxu0 0.0
  %986 = vmatprep.subr.mxu0 0.0
  %987 = vmatpush1.msra.mxu0 0.0
  %988 = vmatprep.subr.mxu0 0.0
  %989 = vmatpush1.msra.mxu0 0.0
  %990 = vmatprep.subr.mxu0 0.0
  %991 = vmatpush1.msra.mxu0 0.0
  %992 = vmatprep.subr.mxu0 0.0
  %993 = vmatpush1.msra.mxu0 0.0
  %994 = vmatprep.subr.mxu0 0.0
  %995 = vmatpush1.msra.mxu0 0.0
  %996 = vmatprep.subr.mxu0 0.0
  %997 = vmatpush1.msra.mxu0 0.0
  %998 = vmatprep.subr.mxu0 0.0
  %999 = vmatpush1.msra.mxu0 0.0
  %1000 = vmatprep.subr.mxu0 0.0
  %1001 = vmatpush1.msra.mxu0 0.0
  %1002 = vmatprep.subr.mxu0 0.0
  %1003 = vmatpush1.msra.mxu0 0.0
  %1004 = vmatprep.subr.mxu0 0.0
  %1005 = vmatpush1.msra.mxu0 0.0
  %1006 = vmatprep.subr.mxu0 0.0
  %1007 = vmatpush1.msra.mxu0 0.0
  %1008 = vmatprep.subr.mxu0 0.0
  %1009 = vmatpush1.msra.mxu0 0.0
  %1010 = vmatprep.subr.mxu0 0.0
  %1011 = vmatpush1.msra.mxu0 0.0
  %1012 = vmatprep.mubr.f32.mxu0 0.0
  %1013 = vmatmul.mubr.f32.gmra.mrb[0].mxu0 %v943
  %v1014 = vpop.f32.mrb[0].mxu0
  %v1015 = vadd.f32 0.0, %v1014
  %v1016 = vpop.f32.mrb[0].mxu0
  %1017 = vmatprep.mubr.f32.mxu0 0.0
  %1018 = vmatmul.mubr.f32.gmra.mrb[0].mxu0 %v946
  %v1019 = vpop.f32.mrb[0].mxu0
  %v1020 = vadd.f32 0.0, %v1019
  %v1021 = vpop.f32.mrb[0].mxu0
  %1022 = vdwg.mxu0
  %v1024 = vsel %vm282, %v442, 0
  %v1027 = vsel %vm282, %v607, 0
  %1029 = vmatprep.subr.mxu0 0.0
  %1030 = vmatpush1.msra.mxu0 %v168
  %1031 = vmatprep.subr.mxu0 0.0
  %1032 = vmatpush1.msra.mxu0 0.0
  %1033 = vmatprep.subr.mxu0 0.0
  %1034 = vmatpush1.msra.mxu0 0.0
  %1035 = vmatprep.subr.mxu0 0.0
  %1036 = vmatpush1.msra.mxu0 0.0
  %1037 = vmatprep.subr.mxu0 0.0
  %1038 = vmatpush1.msra.mxu0 0.0
  %1039 = vmatprep.subr.mxu0 0.0
  %1040 = vmatpush1.msra.mxu0 0.0
  %1041 = vmatprep.subr.mxu0 0.0
  %1042 = vmatpush1.msra.mxu0 0.0
  %1043 = vmatprep.subr.mxu0 0.0
  %1044 = vmatpush1.msra.mxu0 0.0
  %1045 = vmatprep.subr.mxu0 0.0
  %1046 = vmatpush1.msra.mxu0 0.0
  %1047 = vmatprep.subr.mxu0 0.0
  %1048 = vmatpush1.msra.mxu0 0.0
  %1049 = vmatprep.subr.mxu0 0.0
  %1050 = vmatpush1.msra.mxu0 0.0
  %1051 = vmatprep.subr.mxu0 0.0
  %1052 = vmatpush1.msra.mxu0 0.0
  %1053 = vmatprep.subr.mxu0 0.0
  %1054 = vmatpush1.msra.mxu0 0.0
  %1055 = vmatprep.subr.mxu0 0.0
  %1056 = vmatpush1.msra.mxu0 0.0
  %1057 = vmatprep.subr.mxu0 0.0
  %1058 = vmatpush1.msra.mxu0 0.0
  %1059 = vmatprep.subr.mxu0 0.0
  %1060 = vmatpush1.msra.mxu0 0.0
  %1061 = vmatprep.subr.mxu0 0.0
  %1062 = vmatpush1.msra.mxu0 0.0
  %1063 = vmatprep.subr.mxu0 0.0
  %1064 = vmatpush1.msra.mxu0 0.0
  %1065 = vmatprep.subr.mxu0 0.0
  %1066 = vmatpush1.msra.mxu0 0.0
  %1067 = vmatprep.subr.mxu0 0.0
  %1068 = vmatpush1.msra.mxu0 0.0
  %1069 = vmatprep.subr.mxu0 0.0
  %1070 = vmatpush1.msra.mxu0 0.0
  %1071 = vmatprep.subr.mxu0 0.0
  %1072 = vmatpush1.msra.mxu0 0.0
  %1073 = vmatprep.subr.mxu0 0.0
  %1074 = vmatpush1.msra.mxu0 0.0
  %1075 = vmatprep.subr.mxu0 0.0
  %1076 = vmatpush1.msra.mxu0 0.0
  %1077 = vmatprep.subr.mxu0 0.0
  %1078 = vmatpush1.msra.mxu0 0.0
  %1079 = vmatprep.subr.mxu0 0.0
  %1080 = vmatpush1.msra.mxu0 0.0
  %1081 = vmatprep.subr.mxu0 0.0
  %1082 = vmatpush1.msra.mxu0 0.0
  %1083 = vmatprep.subr.mxu0 0.0
  %1084 = vmatpush1.msra.mxu0 0.0
  %1085 = vmatprep.subr.mxu0 0.0
  %1086 = vmatpush1.msra.mxu0 0.0
  %1087 = vmatprep.subr.mxu0 0.0
  %1088 = vmatpush1.msra.mxu0 0.0
  %1089 = vmatprep.subr.mxu0 0.0
  %1090 = vmatpush1.msra.mxu0 0.0
  %1091 = vmatprep.subr.mxu0 0.0
  %1092 = vmatpush1.msra.mxu0 0.0
  %1093 = vmatprep.mubr.f32.mxu0 0.0
  %1094 = vmatmul.mubr.f32.gmra.mrb[0].mxu0 %v1024
  %v1095 = vpop.f32.mrb[0].mxu0
  %v1096 = vadd.f32 %v1015, %v1095
  %v1097 = vpop.f32.mrb[0].mxu0
  %1098 = vmatprep.mubr.f32.mxu0 0.0
  %1099 = vmatmul.mubr.f32.gmra.mrb[0].mxu0 %v1027
  %v1100 = vpop.f32.mrb[0].mxu0
  %v1101 = vadd.f32 %v1020, %v1100
  %v1102 = vpop.f32.mrb[0].mxu0
  %1103 = vdwg.mxu0
  %1104 = vrot.lane.b32.xlu0 %v271, 112
  %v1105 = vpop.permute.xlu0 %1104
  %1106 = vrot.lane.b32.xlu0 %v271, 80
  %v1107 = vpop.permute.xlu0 %1106
  %v1108 = vsel %vm282, %v1105, 0
  %v1110 = vsel %vm282, %v1107, 0
  %1112 = vmatprep.subr.mxu0 0.0
  %1113 = vmatpush1.xpose.msra.mxu0 %v1110
  %1114 = vmatprep.subr.mxu0 0.0
  %1115 = vmatpush1.xpose.msra.mxu0 0.0
  %1116 = vmatprep.subr.mxu0 0.0
  %1117 = vmatpush1.xpose.msra.mxu0 0.0
  %1118 = vmatprep.subr.mxu0 0.0
  %1119 = vmatpush1.xpose.msra.mxu0 0.0
  %1120 = vmatprep.subr.mxu0 0.0
  %1121 = vmatpush1.xpose.msra.mxu0 0.0
  %1122 = vmatprep.subr.mxu0 0.0
  %1123 = vmatpush1.xpose.msra.mxu0 0.0
  %1124 = vmatprep.subr.mxu0 0.0
  %1125 = vmatpush1.xpose.msra.mxu0 0.0
  %1126 = vmatprep.subr.mxu0 0.0
  %1127 = vmatpush1.xpose.msra.mxu0 0.0
  %1128 = vmatprep.subr.mxu0 0.0
  %1129 = vmatpush1.xpose.msra.mxu0 0.0
  %1130 = vmatprep.subr.mxu0 0.0
  %1131 = vmatpush1.xpose.msra.mxu0 0.0
  %1132 = vmatprep.subr.mxu0 0.0
  %1133 = vmatpush1.xpose.msra.mxu0 0.0
  %1134 = vmatprep.subr.mxu0 0.0
  %1135 = vmatpush1.xpose.msra.mxu0 0.0
  %1136 = vmatprep.subr.mxu0 0.0
  %1137 = vmatpush1.xpose.msra.mxu0 0.0
  %1138 = vmatprep.subr.mxu0 0.0
  %1139 = vmatpush1.xpose.msra.mxu0 0.0
  %1140 = vmatprep.subr.mxu0 0.0
  %1141 = vmatpush1.xpose.msra.mxu0 0.0
  %1142 = vmatprep.subr.mxu0 0.0
  %1143 = vmatpush1.xpose.msra.mxu0 0.0
  %1144 = vmatprep.subr.mxu0 0.0
  %1145 = vmatpush1.xpose.msra.mxu0 0.0
  %1146 = vmatprep.subr.mxu0 0.0
  %1147 = vmatpush1.xpose.msra.mxu0 0.0
  %1148 = vmatprep.subr.mxu0 0.0
  %1149 = vmatpush1.xpose.msra.mxu0 0.0
  %1150 = vmatprep.subr.mxu0 0.0
  %1151 = vmatpush1.xpose.msra.mxu0 0.0
  %1152 = vmatprep.subr.mxu0 0.0
  %1153 = vmatpush1.xpose.msra.mxu0 0.0
  %1154 = vmatprep.subr.mxu0 0.0
  %1155 = vmatpush1.xpose.msra.mxu0 0.0
  %1156 = vmatprep.subr.mxu0 0.0
  %1157 = vmatpush1.xpose.msra.mxu0 0.0
  %1158 = vmatprep.subr.mxu0 0.0
  %1159 = vmatpush1.xpose.msra.mxu0 0.0
  %1160 = vmatprep.subr.mxu0 0.0
  %1161 = vmatpush1.xpose.msra.mxu0 0.0
  %1162 = vmatprep.subr.mxu0 0.0
  %1163 = vmatpush1.xpose.msra.mxu0 0.0
  %1164 = vmatprep.subr.mxu0 0.0
  %1165 = vmatpush1.xpose.msra.mxu0 0.0
  %1166 = vmatprep.subr.mxu0 0.0
  %1167 = vmatpush1.xpose.msra.mxu0 0.0
  %1168 = vmatprep.subr.mxu0 0.0
  %1169 = vmatpush1.xpose.msra.mxu0 0.0
  %1170 = vmatprep.subr.mxu0 0.0
  %1171 = vmatpush1.xpose.msra.mxu0 0.0
  %1172 = vmatprep.subr.mxu0 0.0
  %1173 = vmatpush1.xpose.msra.mxu0 0.0
  %1174 = vmatprep.subr.mxu0 0.0
  %1175 = vmatpush1.xpose.msra.mxu0 0.0
  %1176 = vmatprep.mubr.f32.mxu0 0.0
  %1177 = vmatmul.mubr.f32.gmra.mrb[0].mxu0 %v1108
  %v1178 = vpop.f32.mrb[0].mxu0
  %v1179 = vadd.f32 0.0, %v1178
  %v1180 = vpop.f32.mrb[0].mxu0
  %1181 = vdwg.mxu0
  %v1182 = vmul.f32 %v1179, 0.35355338
  %v1183 = vsel %vm282, %v1182, -inf
  %1184 = vmax.xlane.f32.xlu0 %v1183
  %v1185 = vpop.xlane.xlu0 %1184
  %v1186 = vsub.f32 %v1182, %v1185
  %v1187 = vmul.f32 %v1186, 1.442695
  %v1188 = vpow.pop %v1187
  %v1189 = vsel %vm282, %v1188, 0.0
  %1190 = vadd.xlane.f32.xlu0 %v1189
  %v1191 = vpop.xlane.xlu0 %1190
  %v1192 = vrcp.pop %v1191
  %v1193 = vmul.f32 %v1188, %v1192
  %1194 = vrot.lane.b32.xlu0 %v271, 48
  %v1195 = vpop.permute.xlu0 %1194
  %v1198 = vsel %vm282, %v1193, 0
  %1200 = vmatprep.subr.mxu0 0.0
  %1201 = vmatpush1.msra.mxu0 %v1195
  %1202 = vmatprep.subr.mxu0 0.0
  %1203 = vmatpush1.msra.mxu0 0.0
  %1204 = vmatprep.subr.mxu0 0.0
  %1205 = vmatpush1.msra.mxu0 0.0
  %1206 = vmatprep.subr.mxu0 0.0
  %1207 = vmatpush1.msra.mxu0 0.0
  %1208 = vmatprep.subr.mxu0 0.0
  %1209 = vmatpush1.msra.mxu0 0.0
  %1210 = vmatprep.subr.mxu0 0.0
  %1211 = vmatpush1.msra.mxu0 0.0
  %1212 = vmatprep.subr.mxu0 0.0
  %1213 = vmatpush1.msra.mxu0 0.0
  %1214 = vmatprep.subr.mxu0 0.0
  %1215 = vmatpush1.msra.mxu0 0.0
  %1216 = vmatprep.subr.mxu0 0.0
  %1217 = vmatpush1.msra.mxu0 0.0
  %1218 = vmatprep.subr.mxu0 0.0
  %1219 = vmatpush1.msra.mxu0 0.0
  %1220 = vmatprep.subr.mxu0 0.0
  %1221 = vmatpush1.msra.mxu0 0.0
  %1222 = vmatprep.subr.mxu0 0.0
  %1223 = vmatpush1.msra.mxu0 0.0
  %1224 = vmatprep.subr.mxu0 0.0
  %1225 = vmatpush1.msra.mxu0 0.0
  %1226 = vmatprep.subr.mxu0 0.0
  %1227 = vmatpush1.msra.mxu0 0.0
  %1228 = vmatprep.subr.mxu0 0.0
  %1229 = vmatpush1.msra.mxu0 0.0
  %1230 = vmatprep.subr.mxu0 0.0
  %1231 = vmatpush1.msra.mxu0 0.0
  %1232 = vmatprep.subr.mxu0 0.0
  %1233 = vmatpush1.msra.mxu0 0.0
  %1234 = vmatprep.subr.mxu0 0.0
  %1235 = vmatpush1.msra.mxu0 0.0
  %1236 = vmatprep.subr.mxu0 0.0
  %1237 = vmatpush1.msra.mxu0 0.0
  %1238 = vmatprep.subr.mxu0 0.0
  %1239 = vmatpush1.msra.mxu0 0.0
  %1240 = vmatprep.subr.mxu0 0.0
  %1241 = vmatpush1.msra.mxu0 0.0
  %1242 = vmatprep.subr.mxu0 0.0
  %1243 = vmatpush1.msra.mxu0 0.0
  %1244 = vmatprep.subr.mxu0 0.0
  %1245 = vmatpush1.msra.mxu0 0.0
  %1246 = vmatprep.subr.mxu0 0.0
  %1247 = vmatpush1.msra.mxu0 0.0
  %1248 = vmatprep.subr.mxu0 0.0
  %1249 = vmatpush1.msra.mxu0 0.0
  %1250 = vmatprep.subr.mxu0 0.0
  %1251 = vmatpush1.msra.mxu0 0.0
  %1252 = vmatprep.subr.mxu0 0.0
  %1253 = vmatpush1.msra.mxu0 0.0
  %1254 = vmatprep.subr.mxu0 0.0
  %1255 = vmatpush1.msra.mxu0 0.0
  %1256 = vmatprep.subr.mxu0 0.0
  %1257 = vmatpush1.msra.mxu0 0.0
  %1258 = vmatprep.subr.mxu0 0.0
  %1259 = vmatpush1.msra.mxu0 0.0
  %1260 = vmatprep.subr.mxu0 0.0
  %1261 = vmatpush1.msra.mxu0 0.0
  %1262 = vmatprep.subr.mxu0 0.0
  %1263 = vmatpush1.msra.mxu0 0.0
  %1264 = vmatprep.mubr.f32.mxu0 0.0
  %1265 = vmatmul.mubr.f32.gmra.mrb[0].mxu0 %v1198
  %v1266 = vpop.f32.mrb[0].mxu0
  %v1267 = vadd.f32 0.0, %v1266
  %v1268 = vpop.f32.mrb[0].mxu0
  %1269 = vdwg.mxu0
  %1270 = vrot.lane.b32.xlu0 %v276, 112
  %v1271 = vpop.permute.xlu0 %1270
  %1272 = vrot.lane.b32.xlu0 %v276, 80
  %v1273 = vpop.permute.xlu0 %1272
  %v1274 = vsel %vm282, %v1271, 0
  %v1276 = vsel %vm282, %v1273, 0
  %1278 = vmatprep.subr.mxu0 0.0
  %1279 = vmatpush1.xpose.msra.mxu0 %v1276
  %1280 = vmatprep.subr.mxu0 0.0
  %1281 = vmatpush1.xpose.msra.mxu0 0.0
  %1282 = vmatprep.subr.mxu0 0.0
  %1283 = vmatpush1.xpose.msra.mxu0 0.0
  %1284 = vmatprep.subr.mxu0 0.0
  %1285 = vmatpush1.xpose.msra.mxu0 0.0
  %1286 = vmatprep.subr.mxu0 0.0
  %1287 = vmatpush1.xpose.msra.mxu0 0.0
  %1288 = vmatprep.subr.mxu0 0.0
  %1289 = vmatpush1.xpose.msra.mxu0 0.0
  %1290 = vmatprep.subr.mxu0 0.0
  %1291 = vmatpush1.xpose.msra.mxu0 0.0
  %1292 = vmatprep.subr.mxu0 0.0
  %1293 = vmatpush1.xpose.msra.mxu0 0.0
  %1294 = vmatprep.subr.mxu0 0.0
  %1295 = vmatpush1.xpose.msra.mxu0 0.0
  %1296 = vmatprep.subr.mxu0 0.0
  %1297 = vmatpush1.xpose.msra.mxu0 0.0
  %1298 = vmatprep.subr.mxu0 0.0
  %1299 = vmatpush1.xpose.msra.mxu0 0.0
  %1300 = vmatprep.subr.mxu0 0.0
  %1301 = vmatpush1.xpose.msra.mxu0 0.0
  %1302 = vmatprep.subr.mxu0 0.0
  %1303 = vmatpush1.xpose.msra.mxu0 0.0
  %1304 = vmatprep.subr.mxu0 0.0
  %1305 = vmatpush1.xpose.msra.mxu0 0.0
  %1306 = vmatprep.subr.mxu0 0.0
  %1307 = vmatpush1.xpose.msra.mxu0 0.0
  %1308 = vmatprep.subr.mxu0 0.0
  %1309 = vmatpush1.xpose.msra.mxu0 0.0
  %1310 = vmatprep.subr.mxu0 0.0
  %1311 = vmatpush1.xpose.msra.mxu0 0.0
  %1312 = vmatprep.subr.mxu0 0.0
  %1313 = vmatpush1.xpose.msra.mxu0 0.0
  %1314 = vmatprep.subr.mxu0 0.0
  %1315 = vmatpush1.xpose.msra.mxu0 0.0
  %1316 = vmatprep.subr.mxu0 0.0
  %1317 = vmatpush1.xpose.msra.mxu0 0.0
  %1318 = vmatprep.subr.mxu0 0.0
  %1319 = vmatpush1.xpose.msra.mxu0 0.0
  %1320 = vmatprep.subr.mxu0 0.0
  %1321 = vmatpush1.xpose.msra.mxu0 0.0
  %1322 = vmatprep.subr.mxu0 0.0
  %1323 = vmatpush1.xpose.msra.mxu0 0.0
  %1324 = vmatprep.subr.mxu0 0.0
  %1325 = vmatpush1.xpose.msra.mxu0 0.0
  %1326 = vmatprep.subr.mxu0 0.0
  %1327 = vmatpush1.xpose.msra.mxu0 0.0
  %1328 = vmatprep.subr.mxu0 0.0
  %1329 = vmatpush1.xpose.msra.mxu0 0.0
  %1330 = vmatprep.subr.mxu0 0.0
  %1331 = vmatpush1.xpose.msra.mxu0 0.0
  %1332 = vmatprep.subr.mxu0 0.0
  %1333 = vmatpush1.xpose.msra.mxu0 0.0
  %1334 = vmatprep.subr.mxu0 0.0
  %1335 = vmatpush1.xpose.msra.mxu0 0.0
  %1336 = vmatprep.subr.mxu0 0.0
  %1337 = vmatpush1.xpose.msra.mxu0 0.0
  %1338 = vmatprep.subr.mxu0 0.0
  %1339 = vmatpush1.xpose.msra.mxu0 0.0
  %1340 = vmatprep.subr.mxu0 0.0
  %1341 = vmatpush1.xpose.msra.mxu0 0.0
  %1342 = vmatprep.mubr.f32.mxu0 0.0
  %1343 = vmatmul.mubr.f32.gmra.mrb[0].mxu0 %v1274
  %v1344 = vpop.f32.mrb[0].mxu0
  %v1345 = vadd.f32 0.0, %v1344
  %v1346 = vpop.f32.mrb[0].mxu0
  %1347 = vdwg.mxu0
  %v1348 = vmul.f32 %v1345, 0.35355338
  %v1349 = vsel %vm282, %v1348, -inf
  %1350 = vmax.xlane.f32.xlu0 %v1349
  %v1351 = vpop.xlane.xlu0 %1350
  %v1352 = vsub.f32 %v1348, %v1351
  %v1353 = vmul.f32 %v1352, 1.442695
  %v1354 = vpow.pop %v1353
  %v1355 = vsel %vm282, %v1354, 0.0
  %1356 = vadd.xlane.f32.xlu0 %v1355
  %v1357 = vpop.xlane.xlu0 %1356
  %v1358 = vrcp.pop %v1357
  %v1359 = vmul.f32 %v1354, %v1358
  %1360 = vrot.lane.b32.xlu0 %v276, 48
  %v1361 = vpop.permute.xlu0 %1360
  %v1364 = vsel %vm282, %v1359, 0
  %1366 = vmatprep.subr.mxu0 0.0
  %1367 = vmatpush1.msra.mxu0 %v1361
  %1368 = vmatprep.subr.mxu0 0.0
  %1369 = vmatpush1.msra.mxu0 0.0
  %1370 = vmatprep.subr.mxu0 0.0
  %1371 = vmatpush1.msra.mxu0 0.0
  %1372 = vmatprep.subr.mxu0 0.0
  %1373 = vmatpush1.msra.mxu0 0.0
  %1374 = vmatprep.subr.mxu0 0.0
  %1375 = vmatpush1.msra.mxu0 0.0
  %1376 = vmatprep.subr.mxu0 0.0
  %1377 = vmatpush1.msra.mxu0 0.0
  %1378 = vmatprep.subr.mxu0 0.0
  %1379 = vmatpush1.msra.mxu0 0.0
  %1380 = vmatprep.subr.mxu0 0.0
  %1381 = vmatpush1.msra.mxu0 0.0
  %1382 = vmatprep.subr.mxu0 0.0
  %1383 = vmatpush1.msra.mxu0 0.0
  %1384 = vmatprep.subr.mxu0 0.0
  %1385 = vmatpush1.msra.mxu0 0.0
  %1386 = vmatprep.subr.mxu0 0.0
  %1387 = vmatpush1.msra.mxu0 0.0
  %1388 = vmatprep.subr.mxu0 0.0
  %1389 = vmatpush1.msra.mxu0 0.0
  %1390 = vmatprep.subr.mxu0 0.0
  %1391 = vmatpush1.msra.mxu0 0.0
  %1392 = vmatprep.subr.mxu0 0.0
  %1393 = vmatpush1.msra.mxu0 0.0
  %1394 = vmatprep.subr.mxu0 0.0
  %1395 = vmatpush1.msra.mxu0 0.0
  %1396 = vmatprep.subr.mxu0 0.0
  %1397 = vmatpush1.msra.mxu0 0.0
  %1398 = vmatprep.subr.mxu0 0.0
  %1399 = vmatpush1.msra.mxu0 0.0
  %1400 = vmatprep.subr.mxu0 0.0
  %1401 = vmatpush1.msra.mxu0 0.0
  %1402 = vmatprep.subr.mxu0 0.0
  %1403 = vmatpush1.msra.mxu0 0.0
  %1404 = vmatprep.subr.mxu0 0.0
  %1405 = vmatpush1.msra.mxu0 0.0
  %1406 = vmatprep.subr.mxu0 0.0
  %1407 = vmatpush1.msra.mxu0 0.0
  %1408 = vmatprep.subr.mxu0 0.0
  %1409 = vmatpush1.msra.mxu0 0.0
  %1410 = vmatprep.subr.mxu0 0.0
  %1411 = vmatpush1.msra.mxu0 0.0
  %1412 = vmatprep.subr.mxu0 0.0
  %1413 = vmatpush1.msra.mxu0 0.0
  %1414 = vmatprep.subr.mxu0 0.0
  %1415 = vmatpush1.msra.mxu0 0.0
  %1416 = vmatprep.subr.mxu0 0.0
  %1417 = vmatpush1.msra.mxu0 0.0
  %1418 = vmatprep.subr.mxu0 0.0
  %1419 = vmatpush1.msra.mxu0 0.0
  %1420 = vmatprep.subr.mxu0 0.0
  %1421 = vmatpush1.msra.mxu0 0.0
  %1422 = vmatprep.subr.mxu0 0.0
  %1423 = vmatpush1.msra.mxu0 0.0
  %1424 = vmatprep.subr.mxu0 0.0
  %1425 = vmatpush1.msra.mxu0 0.0
  %1426 = vmatprep.subr.mxu0 0.0
  %1427 = vmatpush1.msra.mxu0 0.0
  %1428 = vmatprep.subr.mxu0 0.0
  %1429 = vmatpush1.msra.mxu0 0.0
  %1430 = vmatprep.mubr.f32.mxu0 0.0
  %1431 = vmatmul.mubr.f32.gmra.mrb[0].mxu0 %v1364
  %v1432 = vpop.f32.mrb[0].mxu0
  %v1433 = vadd.f32 0.0, %v1432
  %v1434 = vpop.f32.mrb[0].mxu0
  %1435 = vdwg.mxu0
  %v1437 = vsel %vm282, %v1267, 0
  %v1440 = vsel %vm282, %v1433, 0
  %1442 = vmatprep.subr.mxu0 0.0
  %1443 = vmatpush1.msra.mxu0 %v170
  %1444 = vmatprep.subr.mxu0 0.0
  %1445 = vmatpush1.msra.mxu0 0.0
  %1446 = vmatprep.subr.mxu0 0.0
  %1447 = vmatpush1.msra.mxu0 0.0
  %1448 = vmatprep.subr.mxu0 0.0
  %1449 = vmatpush1.msra.mxu0 0.0
  %1450 = vmatprep.subr.mxu0 0.0
  %1451 = vmatpush1.msra.mxu0 0.0
  %1452 = vmatprep.subr.mxu0 0.0
  %1453 = vmatpush1.msra.mxu0 0.0
  %1454 = vmatprep.subr.mxu0 0.0
  %1455 = vmatpush1.msra.mxu0 0.0
  %1456 = vmatprep.subr.mxu0 0.0
  %1457 = vmatpush1.msra.mxu0 0.0
  %1458 = vmatprep.subr.mxu0 0.0
  %1459 = vmatpush1.msra.mxu0 0.0
  %1460 = vmatprep.subr.mxu0 0.0
  %1461 = vmatpush1.msra.mxu0 0.0
  %1462 = vmatprep.subr.mxu0 0.0
  %1463 = vmatpush1.msra.mxu0 0.0
  %1464 = vmatprep.subr.mxu0 0.0
  %1465 = vmatpush1.msra.mxu0 0.0
  %1466 = vmatprep.subr.mxu0 0.0
  %1467 = vmatpush1.msra.mxu0 0.0
  %1468 = vmatprep.subr.mxu0 0.0
  %1469 = vmatpush1.msra.mxu0 0.0
  %1470 = vmatprep.subr.mxu0 0.0
  %1471 = vmatpush1.msra.mxu0 0.0
  %1472 = vmatprep.subr.mxu0 0.0
  %1473 = vmatpush1.msra.mxu0 0.0
  %1474 = vmatprep.subr.mxu0 0.0
  %1475 = vmatpush1.msra.mxu0 0.0
  %1476 = vmatprep.subr.mxu0 0.0
  %1477 = vmatpush1.msra.mxu0 0.0
  %1478 = vmatprep.subr.mxu0 0.0
  %1479 = vmatpush1.msra.mxu0 0.0
  %1480 = vmatprep.subr.mxu0 0.0
  %1481 = vmatpush1.msra.mxu0 0.0
  %1482 = vmatprep.subr.mxu0 0.0
  %1483 = vmatpush1.msra.mxu0 0.0
  %1484 = vmatprep.subr.mxu0 0.0
  %1485 = vmatpush1.msra.mxu0 0.0
  %1486 = vmatprep.subr.mxu0 0.0
  %1487 = vmatpush1.msra.mxu0 0.0
  %1488 = vmatprep.subr.mxu0 0.0
  %1489 = vmatpush1.msra.mxu0 0.0
  %1490 = vmatprep.subr.mxu0 0.0
  %1491 = vmatpush1.msra.mxu0 0.0
  %1492 = vmatprep.subr.mxu0 0.0
  %1493 = vmatpush1.msra.mxu0 0.0
  %1494 = vmatprep.subr.mxu0 0.0
  %1495 = vmatpush1.msra.mxu0 0.0
  %1496 = vmatprep.subr.mxu0 0.0
  %1497 = vmatpush1.msra.mxu0 0.0
  %1498 = vmatprep.subr.mxu0 0.0
  %1499 = vmatpush1.msra.mxu0 0.0
  %1500 = vmatprep.subr.mxu0 0.0
  %1501 = vmatpush1.msra.mxu0 0.0
  %1502 = vmatprep.subr.mxu0 0.0
  %1503 = vmatpush1.msra.mxu0 0.0
  %1504 = vmatprep.subr.mxu0 0.0
  %1505 = vmatpush1.msra.mxu0 0.0
  %1506 = vmatprep.mubr.f32.mxu0 0.0
  %1507 = vmatmul.mubr.f32.gmra.mrb[0].mxu0 %v1437
  %v1508 = vpop.f32.mrb[0].mxu0
  %v1509 = vadd.f32 0.0, %v1508
  %v1510 = vpop.f32.mrb[0].mxu0
  %1511 = vmatprep.mubr.f32.mxu0 0.0
  %1512 = vmatmul.mubr.f32.gmra.mrb[0].mxu0 %v1440
  %v1513 = vpop.f32.mrb[0].mxu0
  %v1514 = vadd.f32 0.0, %v1513
  %v1515 = vpop.f32.mrb[0].mxu0
  %1516 = vdwg.mxu0
  %v1517 = vadd.f32 %v1096, %v1509
  %v1518 = vadd.f32 %v1101, %v1514
  %1519 = vrot.lane.b32.xlu0 %v271, 104
  %v1520 = vpop.permute.xlu0 %1519
  %1521 = vrot.lane.b32.xlu0 %v271, 72
  %v1522 = vpop.permute.xlu0 %1521
  %v1523 = vsel %vm282, %v1520, 0
  %v1525 = vsel %vm282, %v1522, 0
  %1527 = vmatprep.subr.mxu0 0.0
  %1528 = vmatpush1.xpose.msra.mxu0 %v1525
  %1529 = vmatprep.subr.mxu0 0.0
  %1530 = vmatpush1.xpose.msra.mxu0 0.0
  %1531 = vmatprep.subr.mxu0 0.0
  %1532 = vmatpush1.xpose.msra.mxu0 0.0
  %1533 = vmatprep.subr.mxu0 0.0
  %1534 = vmatpush1.xpose.msra.mxu0 0.0
  %1535 = vmatprep.subr.mxu0 0.0
  %1536 = vmatpush1.xpose.msra.mxu0 0.0
  %1537 = vmatprep.subr.mxu0 0.0
  %1538 = vmatpush1.xpose.msra.mxu0 0.0
  %1539 = vmatprep.subr.mxu0 0.0
  %1540 = vmatpush1.xpose.msra.mxu0 0.0
  %1541 = vmatprep.subr.mxu0 0.0
  %1542 = vmatpush1.xpose.msra.mxu0 0.0
  %1543 = vmatprep.subr.mxu0 0.0
  %1544 = vmatpush1.xpose.msra.mxu0 0.0
  %1545 = vmatprep.subr.mxu0 0.0
  %1546 = vmatpush1.xpose.msra.mxu0 0.0
  %1547 = vmatprep.subr.mxu0 0.0
  %1548 = vmatpush1.xpose.msra.mxu0 0.0
  %1549 = vmatprep.subr.mxu0 0.0
  %1550 = vmatpush1.xpose.msra.mxu0 0.0
  %1551 = vmatprep.subr.mxu0 0.0
  %1552 = vmatpush1.xpose.msra.mxu0 0.0
  %1553 = vmatprep.subr.mxu0 0.0
  %1554 = vmatpush1.xpose.msra.mxu0 0.0
  %1555 = vmatprep.subr.mxu0 0.0
  %1556 = vmatpush1.xpose.msra.mxu0 0.0
  %1557 = vmatprep.subr.mxu0 0.0
  %1558 = vmatpush1.xpose.msra.mxu0 0.0
  %1559 = vmatprep.subr.mxu0 0.0
  %1560 = vmatpush1.xpose.msra.mxu0 0.0
  %1561 = vmatprep.subr.mxu0 0.0
  %1562 = vmatpush1.xpose.msra.mxu0 0.0
  %1563 = vmatprep.subr.mxu0 0.0
  %1564 = vmatpush1.xpose.msra.mxu0 0.0
  %1565 = vmatprep.subr.mxu0 0.0
  %1566 = vmatpush1.xpose.msra.mxu0 0.0
  %1567 = vmatprep.subr.mxu0 0.0
  %1568 = vmatpush1.xpose.msra.mxu0 0.0
  %1569 = vmatprep.subr.mxu0 0.0
  %1570 = vmatpush1.xpose.msra.mxu0 0.0
  %1571 = vmatprep.subr.mxu0 0.0
  %1572 = vmatpush1.xpose.msra.mxu0 0.0
  %1573 = vmatprep.subr.mxu0 0.0
  %1574 = vmatpush1.xpose.msra.mxu0 0.0
  %1575 = vmatprep.subr.mxu0 0.0
  %1576 = vmatpush1.xpose.msra.mxu0 0.0
  %1577 = vmatprep.subr.mxu0 0.0
  %1578 = vmatpush1.xpose.msra.mxu0 0.0
  %1579 = vmatprep.subr.mxu0 0.0
  %1580 = vmatpush1.xpose.msra.mxu0 0.0
  %1581 = vmatprep.subr.mxu0 0.0
  %1582 = vmatpush1.xpose.msra.mxu0 0.0
  %1583 = vmatprep.subr.mxu0 0.0
  %1584 = vmatpush1.xpose.msra.mxu0 0.0
  %1585 = vmatprep.subr.mxu0 0.0
  %1586 = vmatpush1.xpose.msra.mxu0 0.0
  %1587 = vmatprep.subr.mxu0 0.0
  %1588 = vmatpush1.xpose.msra.mxu0 0.0
  %1589 = vmatprep.subr.mxu0 0.0
  %1590 = vmatpush1.xpose.msra.mxu0 0.0
  %1591 = vmatprep.mubr.f32.mxu0 0.0
  %1592 = vmatmul.mubr.f32.gmra.mrb[0].mxu0 %v1523
  %v1593 = vpop.f32.mrb[0].mxu0
  %v1594 = vadd.f32 0.0, %v1593
  %v1595 = vpop.f32.mrb[0].mxu0
  %1596 = vdwg.mxu0
  %v1597 = vmul.f32 %v1594, 0.35355338
  %v1598 = vsel %vm282, %v1597, -inf
  %1599 = vmax.xlane.f32.xlu0 %v1598
  %v1600 = vpop.xlane.xlu0 %1599
  %v1601 = vsub.f32 %v1597, %v1600
  %v1602 = vmul.f32 %v1601, 1.442695
  %v1603 = vpow.pop %v1602
  %v1604 = vsel %vm282, %v1603, 0.0
  %1605 = vadd.xlane.f32.xlu0 %v1604
  %v1606 = vpop.xlane.xlu0 %1605
  %v1607 = vrcp.pop %v1606
  %v1608 = vmul.f32 %v1603, %v1607
  %1609 = vrot.lane.b32.xlu0 %v271, 40
  %v1610 = vpop.permute.xlu0 %1609
  %v1613 = vsel %vm282, %v1608, 0
  %1615 = vmatprep.subr.mxu0 0.0
  %1616 = vmatpush1.msra.mxu0 %v1610
  %1617 = vmatprep.subr.mxu0 0.0
  %1618 = vmatpush1.msra.mxu0 0.0
  %1619 = vmatprep.subr.mxu0 0.0
  %1620 = vmatpush1.msra.mxu0 0.0
  %1621 = vmatprep.subr.mxu0 0.0
  %1622 = vmatpush1.msra.mxu0 0.0
  %1623 = vmatprep.subr.mxu0 0.0
  %1624 = vmatpush1.msra.mxu0 0.0
  %1625 = vmatprep.subr.mxu0 0.0
  %1626 = vmatpush1.msra.mxu0 0.0
  %1627 = vmatprep.subr.mxu0 0.0
  %1628 = vmatpush1.msra.mxu0 0.0
  %1629 = vmatprep.subr.mxu0 0.0
  %1630 = vmatpush1.msra.mxu0 0.0
  %1631 = vmatprep.subr.mxu0 0.0
  %1632 = vmatpush1.msra.mxu0 0.0
  %1633 = vmatprep.subr.mxu0 0.0
  %1634 = vmatpush1.msra.mxu0 0.0
  %1635 = vmatprep.subr.mxu0 0.0
  %1636 = vmatpush1.msra.mxu0 0.0
  %1637 = vmatprep.subr.mxu0 0.0
  %1638 = vmatpush1.msra.mxu0 0.0
  %1639 = vmatprep.subr.mxu0 0.0
  %1640 = vmatpush1.msra.mxu0 0.0
  %1641 = vmatprep.subr.mxu0 0.0
  %1642 = vmatpush1.msra.mxu0 0.0
  %1643 = vmatprep.subr.mxu0 0.0
  %1644 = vmatpush1.msra.mxu0 0.0
  %1645 = vmatprep.subr.mxu0 0.0
  %1646 = vmatpush1.msra.mxu0 0.0
  %1647 = vmatprep.subr.mxu0 0.0
  %1648 = vmatpush1.msra.mxu0 0.0
  %1649 = vmatprep.subr.mxu0 0.0
  %1650 = vmatpush1.msra.mxu0 0.0
  %1651 = vmatprep.subr.mxu0 0.0
  %1652 = vmatpush1.msra.mxu0 0.0
  %1653 = vmatprep.subr.mxu0 0.0
  %1654 = vmatpush1.msra.mxu0 0.0
  %1655 = vmatprep.subr.mxu0 0.0
  %1656 = vmatpush1.msra.mxu0 0.0
  %1657 = vmatprep.subr.mxu0 0.0
  %1658 = vmatpush1.msra.mxu0 0.0
  %1659 = vmatprep.subr.mxu0 0.0
  %1660 = vmatpush1.msra.mxu0 0.0
  %1661 = vmatprep.subr.mxu0 0.0
  %1662 = vmatpush1.msra.mxu0 0.0
  %1663 = vmatprep.subr.mxu0 0.0
  %1664 = vmatpush1.msra.mxu0 0.0
  %1665 = vmatprep.subr.mxu0 0.0
  %1666 = vmatpush1.msra.mxu0 0.0
  %1667 = vmatprep.subr.mxu0 0.0
  %1668 = vmatpush1.msra.mxu0 0.0
  %1669 = vmatprep.subr.mxu0 0.0
  %1670 = vmatpush1.msra.mxu0 0.0
  %1671 = vmatprep.subr.mxu0 0.0
  %1672 = vmatpush1.msra.mxu0 0.0
  %1673 = vmatprep.subr.mxu0 0.0
  %1674 = vmatpush1.msra.mxu0 0.0
  %1675 = vmatprep.subr.mxu0 0.0
  %1676 = vmatpush1.msra.mxu0 0.0
  %1677 = vmatprep.subr.mxu0 0.0
  %1678 = vmatpush1.msra.mxu0 0.0
  %1679 = vmatprep.mubr.f32.mxu0 0.0
  %1680 = vmatmul.mubr.f32.gmra.mrb[0].mxu0 %v1613
  %v1681 = vpop.f32.mrb[0].mxu0
  %v1682 = vadd.f32 0.0, %v1681
  %v1683 = vpop.f32.mrb[0].mxu0
  %1684 = vdwg.mxu0
  %1685 = vrot.lane.b32.xlu0 %v276, 104
  %v1686 = vpop.permute.xlu0 %1685
  %1687 = vrot.lane.b32.xlu0 %v276, 72
  %v1688 = vpop.permute.xlu0 %1687
  %v1689 = vsel %vm282, %v1686, 0
  %v1691 = vsel %vm282, %v1688, 0
  %1693 = vmatprep.subr.mxu0 0.0
  %1694 = vmatpush1.xpose.msra.mxu0 %v1691
  %1695 = vmatprep.subr.mxu0 0.0
  %1696 = vmatpush1.xpose.msra.mxu0 0.0
  %1697 = vmatprep.subr.mxu0 0.0
  %1698 = vmatpush1.xpose.msra.mxu0 0.0
  %1699 = vmatprep.subr.mxu0 0.0
  %1700 = vmatpush1.xpose.msra.mxu0 0.0
  %1701 = vmatprep.subr.mxu0 0.0
  %1702 = vmatpush1.xpose.msra.mxu0 0.0
  %1703 = vmatprep.subr.mxu0 0.0
  %1704 = vmatpush1.xpose.msra.mxu0 0.0
  %1705 = vmatprep.subr.mxu0 0.0
  %1706 = vmatpush1.xpose.msra.mxu0 0.0
  %1707 = vmatprep.subr.mxu0 0.0
  %1708 = vmatpush1.xpose.msra.mxu0 0.0
  %1709 = vmatprep.subr.mxu0 0.0
  %1710 = vmatpush1.xpose.msra.mxu0 0.0
  %1711 = vmatprep.subr.mxu0 0.0
  %1712 = vmatpush1.xpose.msra.mxu0 0.0
  %1713 = vmatprep.subr.mxu0 0.0
  %1714 = vmatpush1.xpose.msra.mxu0 0.0
  %1715 = vmatprep.subr.mxu0 0.0
  %1716 = vmatpush1.xpose.msra.mxu0 0.0
  %1717 = vmatprep.subr.mxu0 0.0
  %1718 = vmatpush1.xpose.msra.mxu0 0.0
  %1719 = vmatprep.subr.mxu0 0.0
  %1720 = vmatpush1.xpose.msra.mxu0 0.0
  %1721 = vmatprep.subr.mxu0 0.0
  %1722 = vmatpush1.xpose.msra.mxu0 0.0
  %1723 = vmatprep.subr.mxu0 0.0
  %1724 = vmatpush1.xpose.msra.mxu0 0.0
  %1725 = vmatprep.subr.mxu0 0.0
  %1726 = vmatpush1.xpose.msra.mxu0 0.0
  %1727 = vmatprep.subr.mxu0 0.0
  %1728 = vmatpush1.xpose.msra.mxu0 0.0
  %1729 = vmatprep.subr.mxu0 0.0
  %1730 = vmatpush1.xpose.msra.mxu0 0.0
  %1731 = vmatprep.subr.mxu0 0.0
  %1732 = vmatpush1.xpose.msra.mxu0 0.0
  %1733 = vmatprep.subr.mxu0 0.0
  %1734 = vmatpush1.xpose.msra.mxu0 0.0
  %1735 = vmatprep.subr.mxu0 0.0
  %1736 = vmatpush1.xpose.msra.mxu0 0.0
  %1737 = vmatprep.subr.mxu0 0.0
  %1738 = vmatpush1.xpose.msra.mxu0 0.0
  %1739 = vmatprep.subr.mxu0 0.0
  %1740 = vmatpush1.xpose.msra.mxu0 0.0
  %1741 = vmatprep.subr.mxu0 0.0
  %1742 = vmatpush1.xpose.msra.mxu0 0.0
  %1743 = vmatprep.subr.mxu0 0.0
  %1744 = vmatpush1.xpose.msra.mxu0 0.0
  %1745 = vmatprep.subr.mxu0 0.0
  %1746 = vmatpush1.xpose.msra.mxu0 0.0
  %1747 = vmatprep.subr.mxu0 0.0
  %1748 = vmatpush1.xpose.msra.mxu0 0.0
  %1749 = vmatprep.subr.mxu0 0.0
  %1750 = vmatpush1.xpose.msra.mxu0 0.0
  %1751 = vmatprep.subr.mxu0 0.0
  %1752 = vmatpush1.xpose.msra.mxu0 0.0
  %1753 = vmatprep.subr.mxu0 0.0
  %1754 = vmatpush1.xpose.msra.mxu0 0.0
  %1755 = vmatprep.subr.mxu0 0.0
  %1756 = vmatpush1.xpose.msra.mxu0 0.0
  %1757 = vmatprep.mubr.f32.mxu0 0.0
  %1758 = vmatmul.mubr.f32.gmra.mrb[0].mxu0 %v1689
  %v1759 = vpop.f32.mrb[0].mxu0
  %v1760 = vadd.f32 0.0, %v1759
  %v1761 = vpop.f32.mrb[0].mxu0
  %1762 = vdwg.mxu0
  %v1763 = vmul.f32 %v1760, 0.35355338
  %v1764 = vsel %vm282, %v1763, -inf
  %1765 = vmax.xlane.f32.xlu0 %v1764
  %v1766 = vpop.xlane.xlu0 %1765
  %v1767 = vsub.f32 %v1763, %v1766
  %v1768 = vmul.f32 %v1767, 1.442695
  %v1769 = vpow.pop %v1768
  %v1770 = vsel %vm282, %v1769, 0.0
  %1771 = vadd.xlane.f32.xlu0 %v1770
  %v1772 = vpop.xlane.xlu0 %1771
  %v1773 = vrcp.pop %v1772
  %v1774 = vmul.f32 %v1769, %v1773
  %1775 = vrot.lane.b32.xlu0 %v276, 40
  %v1776 = vpop.permute.xlu0 %1775
  %v1779 = vsel %vm282, %v1774, 0
  %1781 = vmatprep.subr.mxu0 0.0
  %1782 = vmatpush1.msra.mxu0 %v1776
  %1783 = vmatprep.subr.mxu0 0.0
  %1784 = vmatpush1.msra.mxu0 0.0
  %1785 = vmatprep.subr.mxu0 0.0
  %1786 = vmatpush1.msra.mxu0 0.0
  %1787 = vmatprep.subr.mxu0 0.0
  %1788 = vmatpush1.msra.mxu0 0.0
  %1789 = vmatprep.subr.mxu0 0.0
  %1790 = vmatpush1.msra.mxu0 0.0
  %1791 = vmatprep.subr.mxu0 0.0
  %1792 = vmatpush1.msra.mxu0 0.0
  %1793 = vmatprep.subr.mxu0 0.0
  %1794 = vmatpush1.msra.mxu0 0.0
  %1795 = vmatprep.subr.mxu0 0.0
  %1796 = vmatpush1.msra.mxu0 0.0
  %1797 = vmatprep.subr.mxu0 0.0
  %1798 = vmatpush1.msra.mxu0 0.0
  %1799 = vmatprep.subr.mxu0 0.0
  %1800 = vmatpush1.msra.mxu0 0.0
  %1801 = vmatprep.subr.mxu0 0.0
  %1802 = vmatpush1.msra.mxu0 0.0
  %1803 = vmatprep.subr.mxu0 0.0
  %1804 = vmatpush1.msra.mxu0 0.0
  %1805 = vmatprep.subr.mxu0 0.0
  %1806 = vmatpush1.msra.mxu0 0.0
  %1807 = vmatprep.subr.mxu0 0.0
  %1808 = vmatpush1.msra.mxu0 0.0
  %1809 = vmatprep.subr.mxu0 0.0
  %1810 = vmatpush1.msra.mxu0 0.0
  %1811 = vmatprep.subr.mxu0 0.0
  %1812 = vmatpush1.msra.mxu0 0.0
  %1813 = vmatprep.subr.mxu0 0.0
  %1814 = vmatpush1.msra.mxu0 0.0
  %1815 = vmatprep.subr.mxu0 0.0
  %1816 = vmatpush1.msra.mxu0 0.0
  %1817 = vmatprep.subr.mxu0 0.0
  %1818 = vmatpush1.msra.mxu0 0.0
  %1819 = vmatprep.subr.mxu0 0.0
  %1820 = vmatpush1.msra.mxu0 0.0
  %1821 = vmatprep.subr.mxu0 0.0
  %1822 = vmatpush1.msra.mxu0 0.0
  %1823 = vmatprep.subr.mxu0 0.0
  %1824 = vmatpush1.msra.mxu0 0.0
  %1825 = vmatprep.subr.mxu0 0.0
  %1826 = vmatpush1.msra.mxu0 0.0
  %1827 = vmatprep.subr.mxu0 0.0
  %1828 = vmatpush1.msra.mxu0 0.0
  %1829 = vmatprep.subr.mxu0 0.0
  %1830 = vmatpush1.msra.mxu0 0.0
  %1831 = vmatprep.subr.mxu0 0.0
  %1832 = vmatpush1.msra.mxu0 0.0
  %1833 = vmatprep.subr.mxu0 0.0
  %1834 = vmatpush1.msra.mxu0 0.0
  %1835 = vmatprep.subr.mxu0 0.0
  %1836 = vmatpush1.msra.mxu0 0.0
  %1837 = vmatprep.subr.mxu0 0.0
  %1838 = vmatpush1.msra.mxu0 0.0
  %1839 = vmatprep.subr.mxu0 0.0
  %1840 = vmatpush1.msra.mxu0 0.0
  %1841 = vmatprep.subr.mxu0 0.0
  %1842 = vmatpush1.msra.mxu0 0.0
  %1843 = vmatprep.subr.mxu0 0.0
  %1844 = vmatpush1.msra.mxu0 0.0
  %1845 = vmatprep.mubr.f32.mxu0 0.0
  %1846 = vmatmul.mubr.f32.gmra.mrb[0].mxu0 %v1779
  %v1847 = vpop.f32.mrb[0].mxu0
  %v1848 = vadd.f32 0.0, %v1847
  %v1849 = vpop.f32.mrb[0].mxu0
  %1850 = vdwg.mxu0
  %v1852 = vsel %vm282, %v1682, 0
  %v1855 = vsel %vm282, %v1848, 0
  %1857 = vmatprep.subr.mxu0 0.0
  %1858 = vmatpush1.msra.mxu0 %v171
  %1859 = vmatprep.subr.mxu0 0.0
  %1860 = vmatpush1.msra.mxu0 0.0
  %1861 = vmatprep.subr.mxu0 0.0
  %1862 = vmatpush1.msra.mxu0 0.0
  %1863 = vmatprep.subr.mxu0 0.0
  %1864 = vmatpush1.msra.mxu0 0.0
  %1865 = vmatprep.subr.mxu0 0.0
  %1866 = vmatpush1.msra.mxu0 0.0
  %1867 = vmatprep.subr.mxu0 0.0
  %1868 = vmatpush1.msra.mxu0 0.0
  %1869 = vmatprep.subr.mxu0 0.0
  %1870 = vmatpush1.msra.mxu0 0.0
  %1871 = vmatprep.subr.mxu0 0.0
  %1872 = vmatpush1.msra.mxu0 0.0
  %1873 = vmatprep.subr.mxu0 0.0
  %1874 = vmatpush1.msra.mxu0 0.0
  %1875 = vmatprep.subr.mxu0 0.0
  %1876 = vmatpush1.msra.mxu0 0.0
  %1877 = vmatprep.subr.mxu0 0.0
  %1878 = vmatpush1.msra.mxu0 0.0
  %1879 = vmatprep.subr.mxu0 0.0
  %1880 = vmatpush1.msra.mxu0 0.0
  %1881 = vmatprep.subr.mxu0 0.0
  %1882 = vmatpush1.msra.mxu0 0.0
  %1883 = vmatprep.subr.mxu0 0.0
  %1884 = vmatpush1.msra.mxu0 0.0
  %1885 = vmatprep.subr.mxu0 0.0
  %1886 = vmatpush1.msra.mxu0 0.0
  %1887 = vmatprep.subr.mxu0 0.0
  %1888 = vmatpush1.msra.mxu0 0.0
  %1889 = vmatprep.subr.mxu0 0.0
  %1890 = vmatpush1.msra.mxu0 0.0
  %1891 = vmatprep.subr.mxu0 0.0
  %1892 = vmatpush1.msra.mxu0 0.0
  %1893 = vmatprep.subr.mxu0 0.0
  %1894 = vmatpush1.msra.mxu0 0.0
  %1895 = vmatprep.subr.mxu0 0.0
  %1896 = vmatpush1.msra.mxu0 0.0
  %1897 = vmatprep.subr.mxu0 0.0
  %1898 = vmatpush1.msra.mxu0 0.0
  %1899 = vmatprep.subr.mxu0 0.0
  %1900 = vmatpush1.msra.mxu0 0.0
  %1901 = vmatprep.subr.mxu0 0.0
  %1902 = vmatpush1.msra.mxu0 0.0
  %1903 = vmatprep.subr.mxu0 0.0
  %1904 = vmatpush1.msra.mxu0 0.0
  %1905 = vmatprep.subr.mxu0 0.0
  %1906 = vmatpush1.msra.mxu0 0.0
  %1907 = vmatprep.subr.mxu0 0.0
  %1908 = vmatpush1.msra.mxu0 0.0
  %1909 = vmatprep.subr.mxu0 0.0
  %1910 = vmatpush1.msra.mxu0 0.0
  %1911 = vmatprep.subr.mxu0 0.0
  %1912 = vmatpush1.msra.mxu0 0.0
  %1913 = vmatprep.subr.mxu0 0.0
  %1914 = vmatpush1.msra.mxu0 0.0
  %1915 = vmatprep.subr.mxu0 0.0
  %1916 = vmatpush1.msra.mxu0 0.0
  %1917 = vmatprep.subr.mxu0 0.0
  %1918 = vmatpush1.msra.mxu0 0.0
  %1919 = vmatprep.subr.mxu0 0.0
  %1920 = vmatpush1.msra.mxu0 0.0
  %1921 = vmatprep.mubr.f32.mxu0 0.0
  %1922 = vmatmul.mubr.f32.gmra.mrb[0].mxu0 %v1852
  %v1923 = vpop.f32.mrb[0].mxu0
  %v1924 = vadd.f32 0.0, %v1923
  %v1925 = vpop.f32.mrb[0].mxu0
  %1926 = vmatprep.mubr.f32.mxu0 0.0
  %1927 = vmatmul.mubr.f32.gmra.mrb[0].mxu0 %v1855
  %v1928 = vpop.f32.mrb[0].mxu0
  %v1929 = vadd.f32 0.0, %v1928
  %v1930 = vpop.f32.mrb[0].mxu0
  %1931 = vdwg.mxu0
  %v1932 = vadd.f32 %v1517, %v1924
  %v1933 = vadd.f32 %v1518, %v1929
  %v1935 = vlaneseq
  %v1936 = vshrl.u32 %v1935, 7
  %v1937 = vsub.s32 0, %v1936
  %v1938 = vrot.slane %v172, %v1937
  %v1940 = vadd.f32 %v1932, %v1938
  %v1941 = vadd.f32 %v1933, %v1938
  %v1942 = vadd.f32 %v155, %v1940
  %v1943 = vadd.f32 %v160, %v1941
  %v1944 = vsel %vm197, %v1942, 0.0
  %1945 = vadd.xlane.f32.xlu0 %v1944
  %v1946 = vpop.xlane.xlu0 %1945
  %v1947 = vsel %vm197, %v1943, 0.0
  %1948 = vadd.xlane.f32.xlu0 %v1947
  %v1949 = vpop.xlane.xlu0 %1948
  %v1950 = vrcp.pop 32.0
  %v1951 = vmul.f32 %v1946, %v1950
  %v1952 = vmul.f32 %v1949, %v1950
  %v1953 = vsub.f32 %v1942, %v1951
  %v1954 = vsub.f32 %v1943, %v1952
  %v1955 = vmul.f32 %v1953, %v1953
  %v1956 = vmul.f32 %v1954, %v1954
  %v1957 = vsel %vm197, %v1955, 0.0
  %1958 = vadd.xlane.f32.xlu0 %v1957
  %v1959 = vpop.xlane.xlu0 %1958
  %v1960 = vsel %vm197, %v1956, 0.0
  %1961 = vadd.xlane.f32.xlu0 %v1960
  %v1962 = vpop.xlane.xlu0 %1961
  %v1963 = vmul.f32 %v1959, %v1950
  %v1964 = vmul.f32 %v1962, %v1950
  %v1965 = vadd.f32 %v1963, 1e-05
  %v1966 = vadd.f32 %v1964, 1e-05
  %v1967 = vrsqrt.pop %v1965
  %v1968 = vrsqrt.pop %v1966
  %v1969 = vmul.f32 %v1953, %v1967
  %v1970 = vmul.f32 %v1954, %v1968
  %v1972 = vlaneseq
  %v1973 = vshrl.u32 %v1972, 7
  %v1974 = vsub.s32 0, %v1973
  %v1975 = vrot.slane %v173, %v1974
  %v1977 = vmul.f32 %v1969, %v1975
  %v1978 = vmul.f32 %v1970, %v1975
  %v1980 = vlaneseq
  %v1981 = vshrl.u32 %v1980, 7
  %v1982 = vsub.s32 0, %v1981
  %v1983 = vrot.slane %v174, %v1982
  %v1985 = vadd.f32 %v1977, %v1983
  %v1986 = vadd.f32 %v1978, %v1983
  %v1988 = vlaneseq
  %v1989 = vshrl.u32 %v1988, 7
  %v1990 = vsub.s32 0, %v1989
  %v1991 = vrot.slane %v179, %v1990
  %v1994 = vsel %vm197, %v1985, 0
  %v1997 = vsel %vm197, %v1986, 0
  %1999 = vmatprep.subr.mxu0 0.0
  %2000 = vmatpush1.msra.mxu0 %v175
  %2001 = vmatprep.subr.mxu0 0.0
  %2002 = vmatpush1.msra.mxu0 %v176
  %2003 = vmatprep.subr.mxu0 0.0
  %2004 = vmatpush1.msra.mxu0 %v177
  %2005 = vmatprep.subr.mxu0 0.0
  %2006 = vmatpush1.msra.mxu0 %v178
  %2007 = vmatprep.subr.mxu0 0.0
  %2008 = vmatpush1.msra.mxu0 0.0
  %2009 = vmatprep.subr.mxu0 0.0
  %2010 = vmatpush1.msra.mxu0 0.0
  %2011 = vmatprep.subr.mxu0 0.0
  %2012 = vmatpush1.msra.mxu0 0.0
  %2013 = vmatprep.subr.mxu0 0.0
  %2014 = vmatpush1.msra.mxu0 0.0
  %2015 = vmatprep.subr.mxu0 0.0
  %2016 = vmatpush1.msra.mxu0 0.0
  %2017 = vmatprep.subr.mxu0 0.0
  %2018 = vmatpush1.msra.mxu0 0.0
  %2019 = vmatprep.subr.mxu0 0.0
  %2020 = vmatpush1.msra.mxu0 0.0
  %2021 = vmatprep.subr.mxu0 0.0
  %2022 = vmatpush1.msra.mxu0 0.0
  %2023 = vmatprep.subr.mxu0 0.0
  %2024 = vmatpush1.msra.mxu0 0.0
  %2025 = vmatprep.subr.mxu0 0.0
  %2026 = vmatpush1.msra.mxu0 0.0
  %2027 = vmatprep.subr.mxu0 0.0
  %2028 = vmatpush1.msra.mxu0 0.0
  %2029 = vmatprep.subr.mxu0 0.0
  %2030 = vmatpush1.msra.mxu0 0.0
  %2031 = vmatprep.subr.mxu0 0.0
  %2032 = vmatpush1.msra.mxu0 0.0
  %2033 = vmatprep.subr.mxu0 0.0
  %2034 = vmatpush1.msra.mxu0 0.0
  %2035 = vmatprep.subr.mxu0 0.0
  %2036 = vmatpush1.msra.mxu0 0.0
  %2037 = vmatprep.subr.mxu0 0.0
  %2038 = vmatpush1.msra.mxu0 0.0
  %2039 = vmatprep.subr.mxu0 0.0
  %2040 = vmatpush1.msra.mxu0 0.0
  %2041 = vmatprep.subr.mxu0 0.0
  %2042 = vmatpush1.msra.mxu0 0.0
  %2043 = vmatprep.subr.mxu0 0.0
  %2044 = vmatpush1.msra.mxu0 0.0
  %2045 = vmatprep.subr.mxu0 0.0
  %2046 = vmatpush1.msra.mxu0 0.0
  %2047 = vmatprep.subr.mxu0 0.0
  %2048 = vmatpush1.msra.mxu0 0.0
  %2049 = vmatprep.subr.mxu0 0.0
  %2050 = vmatpush1.msra.mxu0 0.0
  %2051 = vmatprep.subr.mxu0 0.0
  %2052 = vmatpush1.msra.mxu0 0.0
  %2053 = vmatprep.subr.mxu0 0.0
  %2054 = vmatpush1.msra.mxu0 0.0
  %2055 = vmatprep.subr.mxu0 0.0
  %2056 = vmatpush1.msra.mxu0 0.0
  %2057 = vmatprep.subr.mxu0 0.0
  %2058 = vmatpush1.msra.mxu0 0.0
  %2059 = vmatprep.subr.mxu0 0.0
  %2060 = vmatpush1.msra.mxu0 0.0
  %2061 = vmatprep.subr.mxu0 0.0
  %2062 = vmatpush1.msra.mxu0 0.0
  %2063 = vmatprep.mubr.f32.mxu0 0.0
  %2064 = vmatmul.mubr.f32.gmra.mrb[0].mxu0 %v1994
  %v2065 = vpop.f32.mrb[0].mxu0
  %v2066 = vadd.f32 %v1991, %v2065
  %v2067 = vpop.f32.mrb[0].mxu0
  %2068 = vmatprep.mubr.f32.mxu0 0.0
  %2069 = vmatmul.mubr.f32.gmra.mrb[0].mxu0 %v1997
  %v2070 = vpop.f32.mrb[0].mxu0
  %v2071 = vadd.f32 %v1991, %v2070
  %v2072 = vpop.f32.mrb[0].mxu0
  %2073 = vdwg.mxu0
  %v2074 = vmax.f32 %v2066, 0.0
  %v2075 = vmax.f32 %v2071, 0.0
  %v2077 = vlaneseq
  %v2078 = vshrl.u32 %v2077, 7
  %v2079 = vsub.s32 0, %v2078
  %v2080 = vrot.slane %v188, %v2079
  %v2083 = vsel %vm81, %v2074, 0
  %v2086 = vsel %vm81, %v2075, 0
  %2088 = vmatprep.subr.mxu0 0.0
  %2089 = vmatpush1.msra.mxu0 %v180
  %2090 = vmatprep.subr.mxu0 0.0
  %2091 = vmatpush1.msra.mxu0 %v181
  %2092 = vmatprep.subr.mxu0 0.0
  %2093 = vmatpush1.msra.mxu0 %v182
  %2094 = vmatprep.subr.mxu0 0.0
  %2095 = vmatpush1.msra.mxu0 %v183
  %2096 = vmatprep.subr.mxu0 0.0
  %2097 = vmatpush1.msra.mxu0 %v184
  %2098 = vmatprep.subr.mxu0 0.0
  %2099 = vmatpush1.msra.mxu0 %v185
  %2100 = vmatprep.subr.mxu0 0.0
  %2101 = vmatpush1.msra.mxu0 %v186
  %2102 = vmatprep.subr.mxu0 0.0
  %2103 = vmatpush1.msra.mxu0 %v187
  %2104 = vmatprep.subr.mxu0 0.0
  %2105 = vmatpush1.msra.mxu0 0.0
  %2106 = vmatprep.subr.mxu0 0.0
  %2107 = vmatpush1.msra.mxu0 0.0
  %2108 = vmatprep.subr.mxu0 0.0
  %2109 = vmatpush1.msra.mxu0 0.0
  %2110 = vmatprep.subr.mxu0 0.0
  %2111 = vmatpush1.msra.mxu0 0.0
  %2112 = vmatprep.subr.mxu0 0.0
  %2113 = vmatpush1.msra.mxu0 0.0
  %2114 = vmatprep.subr.mxu0 0.0
  %2115 = vmatpush1.msra.mxu0 0.0
  %2116 = vmatprep.subr.mxu0 0.0
  %2117 = vmatpush1.msra.mxu0 0.0
  %2118 = vmatprep.subr.mxu0 0.0
  %2119 = vmatpush1.msra.mxu0 0.0
  %2120 = vmatprep.subr.mxu0 0.0
  %2121 = vmatpush1.msra.mxu0 0.0
  %2122 = vmatprep.subr.mxu0 0.0
  %2123 = vmatpush1.msra.mxu0 0.0
  %2124 = vmatprep.subr.mxu0 0.0
  %2125 = vmatpush1.msra.mxu0 0.0
  %2126 = vmatprep.subr.mxu0 0.0
  %2127 = vmatpush1.msra.mxu0 0.0
  %2128 = vmatprep.subr.mxu0 0.0
  %2129 = vmatpush1.msra.mxu0 0.0
  %2130 = vmatprep.subr.mxu0 0.0
  %2131 = vmatpush1.msra.mxu0 0.0
  %2132 = vmatprep.subr.mxu0 0.0
  %2133 = vmatpush1.msra.mxu0 0.0
  %2134 = vmatprep.subr.mxu0 0.0
  %2135 = vmatpush1.msra.mxu0 0.0
  %2136 = vmatprep.subr.mxu0 0.0
  %2137 = vmatpush1.msra.mxu0 0.0
  %2138 = vmatprep.subr.mxu0 0.0
  %2139 = vmatpush1.msra.mxu0 0.0
  %2140 = vmatprep.subr.mxu0 0.0
  %2141 = vmatpush1.msra.mxu0 0.0
  %2142 = vmatprep.subr.mxu0 0.0
  %2143 = vmatpush1.msra.mxu0 0.0
  %2144 = vmatprep.subr.mxu0 0.0
  %2145 = vmatpush1.msra.mxu0 0.0
  %2146 = vmatprep.subr.mxu0 0.0
  %2147 = vmatpush1.msra.mxu0 0.0
  %2148 = vmatprep.subr.mxu0 0.0
  %2149 = vmatpush1.msra.mxu0 0.0
  %2150 = vmatprep.subr.mxu0 0.0
  %2151 = vmatpush1.msra.mxu0 0.0
  %2152 = vmatprep.mubr.f32.mxu0 0.0
  %2153 = vmatmul.mubr.f32.gmra.mrb[0].mxu0 %v2083
  %v2154 = vpop.f32.mrb[0].mxu0
  %v2155 = vadd.f32 %v2080, %v2154
  %v2156 = vpop.f32.mrb[0].mxu0
  %2157 = vmatprep.mubr.f32.mxu0 0.0
  %2158 = vmatmul.mubr.f32.gmra.mrb[0].mxu0 %v2086
  %v2159 = vpop.f32.mrb[0].mxu0
  %v2160 = vadd.f32 %v2080, %v2159
  %v2161 = vpop.f32.mrb[0].mxu0
  %2162 = vdwg.mxu0
  %v2163 = vadd.f32 %v1985, %v2155
  %v2164 = vadd.f32 %v1986, %v2160
  %v2165 = vsel %vm197, %v2163, 0.0
  %2166 = vadd.xlane.f32.xlu0 %v2165
  %v2167 = vpop.xlane.xlu0 %2166
  %v2168 = vsel %vm197, %v2164, 0.0
  %2169 = vadd.xlane.f32.xlu0 %v2168
  %v2170 = vpop.xlane.xlu0 %2169
  %v2171 = vmul.f32 %v2167, %v1950
  %v2172 = vmul.f32 %v2170, %v1950
  %v2173 = vsub.f32 %v2163, %v2171
  %v2174 = vsub.f32 %v2164, %v2172
  %v2175 = vmul.f32 %v2173, %v2173
  %v2176 = vmul.f32 %v2174, %v2174
  %v2177 = vsel %vm197, %v2175, 0.0
  %2178 = vadd.xlane.f32.xlu0 %v2177
  %v2179 = vpop.xlane.xlu0 %2178
  %v2180 = vsel %vm197, %v2176, 0.0
  %2181 = vadd.xlane.f32.xlu0 %v2180
  %v2182 = vpop.xlane.xlu0 %2181
  %v2183 = vmul.f32 %v2179, %v1950
  %v2184 = vmul.f32 %v2182, %v1950
  %v2185 = vadd.f32 %v2183, 1e-05
  %v2186 = vadd.f32 %v2184, 1e-05
  %v2187 = vrsqrt.pop %v2185
  %v2188 = vrsqrt.pop %v2186
  %v2189 = vmul.f32 %v2173, %v2187
  %v2190 = vmul.f32 %v2174, %v2188
  %v2192 = vlaneseq
  %v2193 = vshrl.u32 %v2192, 7
  %v2194 = vsub.s32 0, %v2193
  %v2195 = vrot.slane %v189, %v2194
  %v2197 = vmul.f32 %v2189, %v2195
  %v2198 = vmul.f32 %v2190, %v2195
  %v2200 = vlaneseq
  %v2201 = vshrl.u32 %v2200, 7
  %v2202 = vsub.s32 0, %v2201
  %v2203 = vrot.slane %v190, %v2202
  %v2205 = vadd.f32 %v2197, %v2203
  %v2206 = vadd.f32 %v2198, %v2203
  %s2207 = scalar_lea.vmem %s3, 32
  %v2208 = vld [vmem:[%s2207] sm:$0xff]
  %v2209 = vld [vmem:[%s2207 + $0x8] sm:$0xff]
  %v2210 = vld [vmem:[%s2207 + $0x10] sm:$0xff]
  %v2211 = vld [vmem:[%s2207 + $0x18] sm:$0xff]
  %s2212 = scalar_lea.vmem %s4, 1
  %v2213 = vld [vmem:[%s2212] sm:$0x1]
  %s2214 = scalar_lea.vmem %s5, 32
  %v2215 = vld [vmem:[%s2214] sm:$0xff]
  %v2216 = vld [vmem:[%s2214 + $0x8] sm:$0xff]
  %v2217 = vld [vmem:[%s2214 + $0x10] sm:$0xff]
  %v2218 = vld [vmem:[%s2214 + $0x18] sm:$0xff]
  %s2219 = scalar_lea.vmem %s6, 1
  %v2220 = vld [vmem:[%s2219] sm:$0x1]
  %s2221 = scalar_lea.vmem %s7, 1
  %v2222 = vld [vmem:[%s2221] sm:$0x1]
  %s2223 = scalar_lea.vmem %s8, 1
  %v2224 = vld [vmem:[%s2223] sm:$0x1]
  %s2225 = scalar_lea.vmem %s9, 32
  %v2226 = vld [vmem:[%s2225] sm:$0xff]
  %v2227 = vld [vmem:[%s2225 + $0x8] sm:$0xff]
  %v2228 = vld [vmem:[%s2225 + $0x10] sm:$0xff]
  %v2229 = vld [vmem:[%s2225 + $0x18] sm:$0xff]
  %s2230 = scalar_lea.vmem %s10, 1
  %v2231 = vld [vmem:[%s2230] sm:$0x1]
  %s2232 = scalar_lea.vmem %s11, 64
  %v2233 = vld [vmem:[%s2232] sm:$0xff]
  %v2234 = vld [vmem:[%s2232 + $0x8] sm:$0xff]
  %v2235 = vld [vmem:[%s2232 + $0x10] sm:$0xff]
  %v2236 = vld [vmem:[%s2232 + $0x18] sm:$0xff]
  %v2237 = vld [vmem:[%s2232 + $0x20] sm:$0xff]
  %v2238 = vld [vmem:[%s2232 + $0x28] sm:$0xff]
  %v2239 = vld [vmem:[%s2232 + $0x30] sm:$0xff]
  %v2240 = vld [vmem:[%s2232 + $0x38] sm:$0xff]
  %s2241 = scalar_lea.vmem %s12, 1
  %v2242 = vld [vmem:[%s2241] sm:$0x1]
  %s2243 = scalar_lea.vmem %s13, 1
  %v2244 = vld [vmem:[%s2243] sm:$0x1]
  %s2245 = scalar_lea.vmem %s14, 1
  %v2246 = vld [vmem:[%s2245] sm:$0x1]
  %v2248 = vlaneseq
  %v2249 = vshrl.u32 %v2248, 7
  %v2250 = vsub.s32 0, %v2249
  %v2251 = vrot.slane %v2213, %v2250
  %v2254 = vsel %vm197, %v2205, 0
  %v2257 = vsel %vm197, %v2206, 0
  %2259 = vmatprep.subr.mxu0 0.0
  %2260 = vmatpush1.msra.mxu0 %v2208
  %2261 = vmatprep.subr.mxu0 0.0
  %2262 = vmatpush1.msra.mxu0 %v2209
  %2263 = vmatprep.subr.mxu0 0.0
  %2264 = vmatpush1.msra.mxu0 %v2210
  %2265 = vmatprep.subr.mxu0 0.0
  %2266 = vmatpush1.msra.mxu0 %v2211
  %2267 = vmatprep.subr.mxu0 0.0
  %2268 = vmatpush1.msra.mxu0 0.0
  %2269 = vmatprep.subr.mxu0 0.0
  %2270 = vmatpush1.msra.mxu0 0.0
  %2271 = vmatprep.subr.mxu0 0.0
  %2272 = vmatpush1.msra.mxu0 0.0
  %2273 = vmatprep.subr.mxu0 0.0
  %2274 = vmatpush1.msra.mxu0 0.0
  %2275 = vmatprep.subr.mxu0 0.0
  %2276 = vmatpush1.msra.mxu0 0.0
  %2277 = vmatprep.subr.mxu0 0.0
  %2278 = vmatpush1.msra.mxu0 0.0
  %2279 = vmatprep.subr.mxu0 0.0
  %2280 = vmatpush1.msra.mxu0 0.0
  %2281 = vmatprep.subr.mxu0 0.0
  %2282 = vmatpush1.msra.mxu0 0.0
  %2283 = vmatprep.subr.mxu0 0.0
  %2284 = vmatpush1.msra.mxu0 0.0
  %2285 = vmatprep.subr.mxu0 0.0
  %2286 = vmatpush1.msra.mxu0 0.0
  %2287 = vmatprep.subr.mxu0 0.0
  %2288 = vmatpush1.msra.mxu0 0.0
  %2289 = vmatprep.subr.mxu0 0.0
  %2290 = vmatpush1.msra.mxu0 0.0
  %2291 = vmatprep.subr.mxu0 0.0
  %2292 = vmatpush1.msra.mxu0 0.0
  %2293 = vmatprep.subr.mxu0 0.0
  %2294 = vmatpush1.msra.mxu0 0.0
  %2295 = vmatprep.subr.mxu0 0.0
  %2296 = vmatpush1.msra.mxu0 0.0
  %2297 = vmatprep.subr.mxu0 0.0
  %2298 = vmatpush1.msra.mxu0 0.0
  %2299 = vmatprep.subr.mxu0 0.0
  %2300 = vmatpush1.msra.mxu0 0.0
  %2301 = vmatprep.subr.mxu0 0.0
  %2302 = vmatpush1.msra.mxu0 0.0
  %2303 = vmatprep.subr.mxu0 0.0
  %2304 = vmatpush1.msra.mxu0 0.0
  %2305 = vmatprep.subr.mxu0 0.0
  %2306 = vmatpush1.msra.mxu0 0.0
  %2307 = vmatprep.subr.mxu0 0.0
  %2308 = vmatpush1.msra.mxu0 0.0
  %2309 = vmatprep.subr.mxu0 0.0
  %2310 = vmatpush1.msra.mxu0 0.0
  %2311 = vmatprep.subr.mxu0 0.0
  %2312 = vmatpush1.msra.mxu0 0.0
  %2313 = vmatprep.subr.mxu0 0.0
  %2314 = vmatpush1.msra.mxu0 0.0
  %2315 = vmatprep.subr.mxu0 0.0
  %2316 = vmatpush1.msra.mxu0 0.0
  %2317 = vmatprep.subr.mxu0 0.0
  %2318 = vmatpush1.msra.mxu0 0.0
  %2319 = vmatprep.subr.mxu0 0.0
  %2320 = vmatpush1.msra.mxu0 0.0
  %2321 = vmatprep.subr.mxu0 0.0
  %2322 = vmatpush1.msra.mxu0 0.0
  %2323 = vmatprep.mubr.f32.mxu0 0.0
  %2324 = vmatmul.mubr.f32.gmra.mrb[0].mxu0 %v2254
  %v2325 = vpop.f32.mrb[0].mxu0
  %v2326 = vadd.f32 %v2251, %v2325
  %v2327 = vpop.f32.mrb[0].mxu0
  %2328 = vmatprep.mubr.f32.mxu0 0.0
  %2329 = vmatmul.mubr.f32.gmra.mrb[0].mxu0 %v2257
  %v2330 = vpop.f32.mrb[0].mxu0
  %v2331 = vadd.f32 %v2251, %v2330
  %v2332 = vpop.f32.mrb[0].mxu0
  %2333 = vdwg.mxu0
  %2335 = vrot.lane.b32.xlu0 %v2326, 96
  %v2336 = vpop.permute.xlu0 %2335
  %v2337 = vsel %vm282, %v2326, 0
  %v2339 = vsel %vm282, %v2336, 0
  %2341 = vmatprep.subr.mxu0 0.0
  %2342 = vmatpush1.xpose.msra.mxu0 %v2339
  %2343 = vmatprep.subr.mxu0 0.0
  %2344 = vmatpush1.xpose.msra.mxu0 0.0
  %2345 = vmatprep.subr.mxu0 0.0
  %2346 = vmatpush1.xpose.msra.mxu0 0.0
  %2347 = vmatprep.subr.mxu0 0.0
  %2348 = vmatpush1.xpose.msra.mxu0 0.0
  %2349 = vmatprep.subr.mxu0 0.0
  %2350 = vmatpush1.xpose.msra.mxu0 0.0
  %2351 = vmatprep.subr.mxu0 0.0
  %2352 = vmatpush1.xpose.msra.mxu0 0.0
  %2353 = vmatprep.subr.mxu0 0.0
  %2354 = vmatpush1.xpose.msra.mxu0 0.0
  %2355 = vmatprep.subr.mxu0 0.0
  %2356 = vmatpush1.xpose.msra.mxu0 0.0
  %2357 = vmatprep.subr.mxu0 0.0
  %2358 = vmatpush1.xpose.msra.mxu0 0.0
  %2359 = vmatprep.subr.mxu0 0.0
  %2360 = vmatpush1.xpose.msra.mxu0 0.0
  %2361 = vmatprep.subr.mxu0 0.0
  %2362 = vmatpush1.xpose.msra.mxu0 0.0
  %2363 = vmatprep.subr.mxu0 0.0
  %2364 = vmatpush1.xpose.msra.mxu0 0.0
  %2365 = vmatprep.subr.mxu0 0.0
  %2366 = vmatpush1.xpose.msra.mxu0 0.0
  %2367 = vmatprep.subr.mxu0 0.0
  %2368 = vmatpush1.xpose.msra.mxu0 0.0
  %2369 = vmatprep.subr.mxu0 0.0
  %2370 = vmatpush1.xpose.msra.mxu0 0.0
  %2371 = vmatprep.subr.mxu0 0.0
  %2372 = vmatpush1.xpose.msra.mxu0 0.0
  %2373 = vmatprep.subr.mxu0 0.0
  %2374 = vmatpush1.xpose.msra.mxu0 0.0
  %2375 = vmatprep.subr.mxu0 0.0
  %2376 = vmatpush1.xpose.msra.mxu0 0.0
  %2377 = vmatprep.subr.mxu0 0.0
  %2378 = vmatpush1.xpose.msra.mxu0 0.0
  %2379 = vmatprep.subr.mxu0 0.0
  %2380 = vmatpush1.xpose.msra.mxu0 0.0
  %2381 = vmatprep.subr.mxu0 0.0
  %2382 = vmatpush1.xpose.msra.mxu0 0.0
  %2383 = vmatprep.subr.mxu0 0.0
  %2384 = vmatpush1.xpose.msra.mxu0 0.0
  %2385 = vmatprep.subr.mxu0 0.0
  %2386 = vmatpush1.xpose.msra.mxu0 0.0
  %2387 = vmatprep.subr.mxu0 0.0
  %2388 = vmatpush1.xpose.msra.mxu0 0.0
  %2389 = vmatprep.subr.mxu0 0.0
  %2390 = vmatpush1.xpose.msra.mxu0 0.0
  %2391 = vmatprep.subr.mxu0 0.0
  %2392 = vmatpush1.xpose.msra.mxu0 0.0
  %2393 = vmatprep.subr.mxu0 0.0
  %2394 = vmatpush1.xpose.msra.mxu0 0.0
  %2395 = vmatprep.subr.mxu0 0.0
  %2396 = vmatpush1.xpose.msra.mxu0 0.0
  %2397 = vmatprep.subr.mxu0 0.0
  %2398 = vmatpush1.xpose.msra.mxu0 0.0
  %2399 = vmatprep.subr.mxu0 0.0
  %2400 = vmatpush1.xpose.msra.mxu0 0.0
  %2401 = vmatprep.subr.mxu0 0.0
  %2402 = vmatpush1.xpose.msra.mxu0 0.0
  %2403 = vmatprep.subr.mxu0 0.0
  %2404 = vmatpush1.xpose.msra.mxu0 0.0
  %2405 = vmatprep.mubr.f32.mxu0 0.0
  %2406 = vmatmul.mubr.f32.gmra.mrb[0].mxu0 %v2337
  %v2407 = vpop.f32.mrb[0].mxu0
  %v2408 = vadd.f32 0.0, %v2407
  %v2409 = vpop.f32.mrb[0].mxu0
  %2410 = vdwg.mxu0
  %v2411 = vmul.f32 %v2408, 0.35355338
  %v2412 = vsel %vm282, %v2411, -inf
  %2413 = vmax.xlane.f32.xlu0 %v2412
  %v2414 = vpop.xlane.xlu0 %2413
  %v2415 = vsub.f32 %v2411, %v2414
  %v2416 = vmul.f32 %v2415, 1.442695
  %v2417 = vpow.pop %v2416
  %v2418 = vsel %vm282, %v2417, 0.0
  %2419 = vadd.xlane.f32.xlu0 %v2418
  %v2420 = vpop.xlane.xlu0 %2419
  %v2421 = vrcp.pop %v2420
  %v2422 = vmul.f32 %v2417, %v2421
  %2423 = vrot.lane.b32.xlu0 %v2326, 64
  %v2424 = vpop.permute.xlu0 %2423
  %v2427 = vsel %vm282, %v2422, 0
  %2429 = vmatprep.subr.mxu0 0.0
  %2430 = vmatpush1.msra.mxu0 %v2424
  %2431 = vmatprep.subr.mxu0 0.0
  %2432 = vmatpush1.msra.mxu0 0.0
  %2433 = vmatprep.subr.mxu0 0.0
  %2434 = vmatpush1.msra.mxu0 0.0
  %2435 = vmatprep.subr.mxu0 0.0
  %2436 = vmatpush1.msra.mxu0 0.0
  %2437 = vmatprep.subr.mxu0 0.0
  %2438 = vmatpush1.msra.mxu0 0.0
  %2439 = vmatprep.subr.mxu0 0.0
  %2440 = vmatpush1.msra.mxu0 0.0
  %2441 = vmatprep.subr.mxu0 0.0
  %2442 = vmatpush1.msra.mxu0 0.0
  %2443 = vmatprep.subr.mxu0 0.0
  %2444 = vmatpush1.msra.mxu0 0.0
  %2445 = vmatprep.subr.mxu0 0.0
  %2446 = vmatpush1.msra.mxu0 0.0
  %2447 = vmatprep.subr.mxu0 0.0
  %2448 = vmatpush1.msra.mxu0 0.0
  %2449 = vmatprep.subr.mxu0 0.0
  %2450 = vmatpush1.msra.mxu0 0.0
  %2451 = vmatprep.subr.mxu0 0.0
  %2452 = vmatpush1.msra.mxu0 0.0
  %2453 = vmatprep.subr.mxu0 0.0
  %2454 = vmatpush1.msra.mxu0 0.0
  %2455 = vmatprep.subr.mxu0 0.0
  %2456 = vmatpush1.msra.mxu0 0.0
  %2457 = vmatprep.subr.mxu0 0.0
  %2458 = vmatpush1.msra.mxu0 0.0
  %2459 = vmatprep.subr.mxu0 0.0
  %2460 = vmatpush1.msra.mxu0 0.0
  %2461 = vmatprep.subr.mxu0 0.0
  %2462 = vmatpush1.msra.mxu0 0.0
  %2463 = vmatprep.subr.mxu0 0.0
  %2464 = vmatpush1.msra.mxu0 0.0
  %2465 = vmatprep.subr.mxu0 0.0
  %2466 = vmatpush1.msra.mxu0 0.0
  %2467 = vmatprep.subr.mxu0 0.0
  %2468 = vmatpush1.msra.mxu0 0.0
  %2469 = vmatprep.subr.mxu0 0.0
  %2470 = vmatpush1.msra.mxu0 0.0
  %2471 = vmatprep.subr.mxu0 0.0
  %2472 = vmatpush1.msra.mxu0 0.0
  %2473 = vmatprep.subr.mxu0 0.0
  %2474 = vmatpush1.msra.mxu0 0.0
  %2475 = vmatprep.subr.mxu0 0.0
  %2476 = vmatpush1.msra.mxu0 0.0
  %2477 = vmatprep.subr.mxu0 0.0
  %2478 = vmatpush1.msra.mxu0 0.0
  %2479 = vmatprep.subr.mxu0 0.0
  %2480 = vmatpush1.msra.mxu0 0.0
  %2481 = vmatprep.subr.mxu0 0.0
  %2482 = vmatpush1.msra.mxu0 0.0
  %2483 = vmatprep.subr.mxu0 0.0
  %2484 = vmatpush1.msra.mxu0 0.0
  %2485 = vmatprep.subr.mxu0 0.0
  %2486 = vmatpush1.msra.mxu0 0.0
  %2487 = vmatprep.subr.mxu0 0.0
  %2488 = vmatpush1.msra.mxu0 0.0
  %2489 = vmatprep.subr.mxu0 0.0
  %2490 = vmatpush1.msra.mxu0 0.0
  %2491 = vmatprep.subr.mxu0 0.0
  %2492 = vmatpush1.msra.mxu0 0.0
  %2493 = vmatprep.mubr.f32.mxu0 0.0
  %2494 = vmatmul.mubr.f32.gmra.mrb[0].mxu0 %v2427
  %v2495 = vpop.f32.mrb[0].mxu0
  %v2496 = vadd.f32 0.0, %v2495
  %v2497 = vpop.f32.mrb[0].mxu0
  %2498 = vdwg.mxu0
  %2500 = vrot.lane.b32.xlu0 %v2331, 96
  %v2501 = vpop.permute.xlu0 %2500
  %v2502 = vsel %vm282, %v2331, 0
  %v2504 = vsel %vm282, %v2501, 0
  %2506 = vmatprep.subr.mxu0 0.0
  %2507 = vmatpush1.xpose.msra.mxu0 %v2504
  %2508 = vmatprep.subr.mxu0 0.0
  %2509 = vmatpush1.xpose.msra.mxu0 0.0
  %2510 = vmatprep.subr.mxu0 0.0
  %2511 = vmatpush1.xpose.msra.mxu0 0.0
  %2512 = vmatprep.subr.mxu0 0.0
  %2513 = vmatpush1.xpose.msra.mxu0 0.0
  %2514 = vmatprep.subr.mxu0 0.0
  %2515 = vmatpush1.xpose.msra.mxu0 0.0
  %2516 = vmatprep.subr.mxu0 0.0
  %2517 = vmatpush1.xpose.msra.mxu0 0.0
  %2518 = vmatprep.subr.mxu0 0.0
  %2519 = vmatpush1.xpose.msra.mxu0 0.0
  %2520 = vmatprep.subr.mxu0 0.0
  %2521 = vmatpush1.xpose.msra.mxu0 0.0
  %2522 = vmatprep.subr.mxu0 0.0
  %2523 = vmatpush1.xpose.msra.mxu0 0.0
  %2524 = vmatprep.subr.mxu0 0.0
  %2525 = vmatpush1.xpose.msra.mxu0 0.0
  %2526 = vmatprep.subr.mxu0 0.0
  %2527 = vmatpush1.xpose.msra.mxu0 0.0
  %2528 = vmatprep.subr.mxu0 0.0
  %2529 = vmatpush1.xpose.msra.mxu0 0.0
  %2530 = vmatprep.subr.mxu0 0.0
  %2531 = vmatpush1.xpose.msra.mxu0 0.0
  %2532 = vmatprep.subr.mxu0 0.0
  %2533 = vmatpush1.xpose.msra.mxu0 0.0
  %2534 = vmatprep.subr.mxu0 0.0
  %2535 = vmatpush1.xpose.msra.mxu0 0.0
  %2536 = vmatprep.subr.mxu0 0.0
  %2537 = vmatpush1.xpose.msra.mxu0 0.0
  %2538 = vmatprep.subr.mxu0 0.0
  %2539 = vmatpush1.xpose.msra.mxu0 0.0
  %2540 = vmatprep.subr.mxu0 0.0
  %2541 = vmatpush1.xpose.msra.mxu0 0.0
  %2542 = vmatprep.subr.mxu0 0.0
  %2543 = vmatpush1.xpose.msra.mxu0 0.0
  %2544 = vmatprep.subr.mxu0 0.0
  %2545 = vmatpush1.xpose.msra.mxu0 0.0
  %2546 = vmatprep.subr.mxu0 0.0
  %2547 = vmatpush1.xpose.msra.mxu0 0.0
  %2548 = vmatprep.subr.mxu0 0.0
  %2549 = vmatpush1.xpose.msra.mxu0 0.0
  %2550 = vmatprep.subr.mxu0 0.0
  %2551 = vmatpush1.xpose.msra.mxu0 0.0
  %2552 = vmatprep.subr.mxu0 0.0
  %2553 = vmatpush1.xpose.msra.mxu0 0.0
  %2554 = vmatprep.subr.mxu0 0.0
  %2555 = vmatpush1.xpose.msra.mxu0 0.0
  %2556 = vmatprep.subr.mxu0 0.0
  %2557 = vmatpush1.xpose.msra.mxu0 0.0
  %2558 = vmatprep.subr.mxu0 0.0
  %2559 = vmatpush1.xpose.msra.mxu0 0.0
  %2560 = vmatprep.subr.mxu0 0.0
  %2561 = vmatpush1.xpose.msra.mxu0 0.0
  %2562 = vmatprep.subr.mxu0 0.0
  %2563 = vmatpush1.xpose.msra.mxu0 0.0
  %2564 = vmatprep.subr.mxu0 0.0
  %2565 = vmatpush1.xpose.msra.mxu0 0.0
  %2566 = vmatprep.subr.mxu0 0.0
  %2567 = vmatpush1.xpose.msra.mxu0 0.0
  %2568 = vmatprep.subr.mxu0 0.0
  %2569 = vmatpush1.xpose.msra.mxu0 0.0
  %2570 = vmatprep.mubr.f32.mxu0 0.0
  %2571 = vmatmul.mubr.f32.gmra.mrb[0].mxu0 %v2502
  %v2572 = vpop.f32.mrb[0].mxu0
  %v2573 = vadd.f32 0.0, %v2572
  %v2574 = vpop.f32.mrb[0].mxu0
  %2575 = vdwg.mxu0
  %v2576 = vmul.f32 %v2573, 0.35355338
  %v2577 = vsel %vm282, %v2576, -inf
  %2578 = vmax.xlane.f32.xlu0 %v2577
  %v2579 = vpop.xlane.xlu0 %2578
  %v2580 = vsub.f32 %v2576, %v2579
  %v2581 = vmul.f32 %v2580, 1.442695
  %v2582 = vpow.pop %v2581
  %v2583 = vsel %vm282, %v2582, 0.0
  %2584 = vadd.xlane.f32.xlu0 %v2583
  %v2585 = vpop.xlane.xlu0 %2584
  %v2586 = vrcp.pop %v2585
  %v2587 = vmul.f32 %v2582, %v2586
  %2588 = vrot.lane.b32.xlu0 %v2331, 64
  %v2589 = vpop.permute.xlu0 %2588
  %v2592 = vsel %vm282, %v2587, 0
  %2594 = vmatprep.subr.mxu0 0.0
  %2595 = vmatpush1.msra.mxu0 %v2589
  %2596 = vmatprep.subr.mxu0 0.0
  %2597 = vmatpush1.msra.mxu0 0.0
  %2598 = vmatprep.subr.mxu0 0.0
  %2599 = vmatpush1.msra.mxu0 0.0
  %2600 = vmatprep.subr.mxu0 0.0
  %2601 = vmatpush1.msra.mxu0 0.0
  %2602 = vmatprep.subr.mxu0 0.0
  %2603 = vmatpush1.msra.mxu0 0.0
  %2604 = vmatprep.subr.mxu0 0.0
  %2605 = vmatpush1.msra.mxu0 0.0
  %2606 = vmatprep.subr.mxu0 0.0
  %2607 = vmatpush1.msra.mxu0 0.0
  %2608 = vmatprep.subr.mxu0 0.0
  %2609 = vmatpush1.msra.mxu0 0.0
  %2610 = vmatprep.subr.mxu0 0.0
  %2611 = vmatpush1.msra.mxu0 0.0
  %2612 = vmatprep.subr.mxu0 0.0
  %2613 = vmatpush1.msra.mxu0 0.0
  %2614 = vmatprep.subr.mxu0 0.0
  %2615 = vmatpush1.msra.mxu0 0.0
  %2616 = vmatprep.subr.mxu0 0.0
  %2617 = vmatpush1.msra.mxu0 0.0
  %2618 = vmatprep.subr.mxu0 0.0
  %2619 = vmatpush1.msra.mxu0 0.0
  %2620 = vmatprep.subr.mxu0 0.0
  %2621 = vmatpush1.msra.mxu0 0.0
  %2622 = vmatprep.subr.mxu0 0.0
  %2623 = vmatpush1.msra.mxu0 0.0
  %2624 = vmatprep.subr.mxu0 0.0
  %2625 = vmatpush1.msra.mxu0 0.0
  %2626 = vmatprep.subr.mxu0 0.0
  %2627 = vmatpush1.msra.mxu0 0.0
  %2628 = vmatprep.subr.mxu0 0.0
  %2629 = vmatpush1.msra.mxu0 0.0
  %2630 = vmatprep.subr.mxu0 0.0
  %2631 = vmatpush1.msra.mxu0 0.0
  %2632 = vmatprep.subr.mxu0 0.0
  %2633 = vmatpush1.msra.mxu0 0.0
  %2634 = vmatprep.subr.mxu0 0.0
  %2635 = vmatpush1.msra.mxu0 0.0
  %2636 = vmatprep.subr.mxu0 0.0
  %2637 = vmatpush1.msra.mxu0 0.0
  %2638 = vmatprep.subr.mxu0 0.0
  %2639 = vmatpush1.msra.mxu0 0.0
  %2640 = vmatprep.subr.mxu0 0.0
  %2641 = vmatpush1.msra.mxu0 0.0
  %2642 = vmatprep.subr.mxu0 0.0
  %2643 = vmatpush1.msra.mxu0 0.0
  %2644 = vmatprep.subr.mxu0 0.0
  %2645 = vmatpush1.msra.mxu0 0.0
  %2646 = vmatprep.subr.mxu0 0.0
  %2647 = vmatpush1.msra.mxu0 0.0
  %2648 = vmatprep.subr.mxu0 0.0
  %2649 = vmatpush1.msra.mxu0 0.0
  %2650 = vmatprep.subr.mxu0 0.0
  %2651 = vmatpush1.msra.mxu0 0.0
  %2652 = vmatprep.subr.mxu0 0.0
  %2653 = vmatpush1.msra.mxu0 0.0
  %2654 = vmatprep.subr.mxu0 0.0
  %2655 = vmatpush1.msra.mxu0 0.0
  %2656 = vmatprep.subr.mxu0 0.0
  %2657 = vmatpush1.msra.mxu0 0.0
  %2658 = vmatprep.mubr.f32.mxu0 0.0
  %2659 = vmatmul.mubr.f32.gmra.mrb[0].mxu0 %v2592
  %v2660 = vpop.f32.mrb[0].mxu0
  %v2661 = vadd.f32 0.0, %v2660
  %v2662 = vpop.f32.mrb[0].mxu0
  %2663 = vdwg.mxu0
  %2664 = vrot.lane.b32.xlu0 %v2326, 120
  %v2665 = vpop.permute.xlu0 %2664
  %2666 = vrot.lane.b32.xlu0 %v2326, 88
  %v2667 = vpop.permute.xlu0 %2666
  %v2668 = vsel %vm282, %v2665, 0
  %v2670 = vsel %vm282, %v2667, 0
  %2672 = vmatprep.subr.mxu0 0.0
  %2673 = vmatpush1.xpose.msra.mxu0 %v2670
  %2674 = vmatprep.subr.mxu0 0.0
  %2675 = vmatpush1.xpose.msra.mxu0 0.0
  %2676 = vmatprep.subr.mxu0 0.0
  %2677 = vmatpush1.xpose.msra.mxu0 0.0
  %2678 = vmatprep.subr.mxu0 0.0
  %2679 = vmatpush1.xpose.msra.mxu0 0.0
  %2680 = vmatprep.subr.mxu0 0.0
  %2681 = vmatpush1.xpose.msra.mxu0 0.0
  %2682 = vmatprep.subr.mxu0 0.0
  %2683 = vmatpush1.xpose.msra.mxu0 0.0
  %2684 = vmatprep.subr.mxu0 0.0
  %2685 = vmatpush1.xpose.msra.mxu0 0.0
  %2686 = vmatprep.subr.mxu0 0.0
  %2687 = vmatpush1.xpose.msra.mxu0 0.0
  %2688 = vmatprep.subr.mxu0 0.0
  %2689 = vmatpush1.xpose.msra.mxu0 0.0
  %2690 = vmatprep.subr.mxu0 0.0
  %2691 = vmatpush1.xpose.msra.mxu0 0.0
  %2692 = vmatprep.subr.mxu0 0.0
  %2693 = vmatpush1.xpose.msra.mxu0 0.0
  %2694 = vmatprep.subr.mxu0 0.0
  %2695 = vmatpush1.xpose.msra.mxu0 0.0
  %2696 = vmatprep.subr.mxu0 0.0
  %2697 = vmatpush1.xpose.msra.mxu0 0.0
  %2698 = vmatprep.subr.mxu0 0.0
  %2699 = vmatpush1.xpose.msra.mxu0 0.0
  %2700 = vmatprep.subr.mxu0 0.0
  %2701 = vmatpush1.xpose.msra.mxu0 0.0
  %2702 = vmatprep.subr.mxu0 0.0
  %2703 = vmatpush1.xpose.msra.mxu0 0.0
  %2704 = vmatprep.subr.mxu0 0.0
  %2705 = vmatpush1.xpose.msra.mxu0 0.0
  %2706 = vmatprep.subr.mxu0 0.0
  %2707 = vmatpush1.xpose.msra.mxu0 0.0
  %2708 = vmatprep.subr.mxu0 0.0
  %2709 = vmatpush1.xpose.msra.mxu0 0.0
  %2710 = vmatprep.subr.mxu0 0.0
  %2711 = vmatpush1.xpose.msra.mxu0 0.0
  %2712 = vmatprep.subr.mxu0 0.0
  %2713 = vmatpush1.xpose.msra.mxu0 0.0
  %2714 = vmatprep.subr.mxu0 0.0
  %2715 = vmatpush1.xpose.msra.mxu0 0.0
  %2716 = vmatprep.subr.mxu0 0.0
  %2717 = vmatpush1.xpose.msra.mxu0 0.0
  %2718 = vmatprep.subr.mxu0 0.0
  %2719 = vmatpush1.xpose.msra.mxu0 0.0
  %2720 = vmatprep.subr.mxu0 0.0
  %2721 = vmatpush1.xpose.msra.mxu0 0.0
  %2722 = vmatprep.subr.mxu0 0.0
  %2723 = vmatpush1.xpose.msra.mxu0 0.0
  %2724 = vmatprep.subr.mxu0 0.0
  %2725 = vmatpush1.xpose.msra.mxu0 0.0
  %2726 = vmatprep.subr.mxu0 0.0
  %2727 = vmatpush1.xpose.msra.mxu0 0.0
  %2728 = vmatprep.subr.mxu0 0.0
  %2729 = vmatpush1.xpose.msra.mxu0 0.0
  %2730 = vmatprep.subr.mxu0 0.0
  %2731 = vmatpush1.xpose.msra.mxu0 0.0
  %2732 = vmatprep.subr.mxu0 0.0
  %2733 = vmatpush1.xpose.msra.mxu0 0.0
  %2734 = vmatprep.subr.mxu0 0.0
  %2735 = vmatpush1.xpose.msra.mxu0 0.0
  %2736 = vmatprep.mubr.f32.mxu0 0.0
  %2737 = vmatmul.mubr.f32.gmra.mrb[0].mxu0 %v2668
  %v2738 = vpop.f32.mrb[0].mxu0
  %v2739 = vadd.f32 0.0, %v2738
  %v2740 = vpop.f32.mrb[0].mxu0
  %2741 = vdwg.mxu0
  %v2742 = vmul.f32 %v2739, 0.35355338
  %v2743 = vsel %vm282, %v2742, -inf
  %2744 = vmax.xlane.f32.xlu0 %v2743
  %v2745 = vpop.xlane.xlu0 %2744
  %v2746 = vsub.f32 %v2742, %v2745
  %v2747 = vmul.f32 %v2746, 1.442695
  %v2748 = vpow.pop %v2747
  %v2749 = vsel %vm282, %v2748, 0.0
  %2750 = vadd.xlane.f32.xlu0 %v2749
  %v2751 = vpop.xlane.xlu0 %2750
  %v2752 = vrcp.pop %v2751
  %v2753 = vmul.f32 %v2748, %v2752
  %2754 = vrot.lane.b32.xlu0 %v2326, 56
  %v2755 = vpop.permute.xlu0 %2754
  %v2758 = vsel %vm282, %v2753, 0
  %2760 = vmatprep.subr.mxu0 0.0
  %2761 = vmatpush1.msra.mxu0 %v2755
  %2762 = vmatprep.subr.mxu0 0.0
  %2763 = vmatpush1.msra.mxu0 0.0
  %2764 = vmatprep.subr.mxu0 0.0
  %2765 = vmatpush1.msra.mxu0 0.0
  %2766 = vmatprep.subr.mxu0 0.0
  %2767 = vmatpush1.msra.mxu0 0.0
  %2768 = vmatprep.subr.mxu0 0.0
  %2769 = vmatpush1.msra.mxu0 0.0
  %2770 = vmatprep.subr.mxu0 0.0
  %2771 = vmatpush1.msra.mxu0 0.0
  %2772 = vmatprep.subr.mxu0 0.0
  %2773 = vmatpush1.msra.mxu0 0.0
  %2774 = vmatprep.subr.mxu0 0.0
  %2775 = vmatpush1.msra.mxu0 0.0
  %2776 = vmatprep.subr.mxu0 0.0
  %2777 = vmatpush1.msra.mxu0 0.0
  %2778 = vmatprep.subr.mxu0 0.0
  %2779 = vmatpush1.msra.mxu0 0.0
  %2780 = vmatprep.subr.mxu0 0.0
  %2781 = vmatpush1.msra.mxu0 0.0
  %2782 = vmatprep.subr.mxu0 0.0
  %2783 = vmatpush1.msra.mxu0 0.0
  %2784 = vmatprep.subr.mxu0 0.0
  %2785 = vmatpush1.msra.mxu0 0.0
  %2786 = vmatprep.subr.mxu0 0.0
  %2787 = vmatpush1.msra.mxu0 0.0
  %2788 = vmatprep.subr.mxu0 0.0
  %2789 = vmatpush1.msra.mxu0 0.0
  %2790 = vmatprep.subr.mxu0 0.0
  %2791 = vmatpush1.msra.mxu0 0.0
  %2792 = vmatprep.subr.mxu0 0.0
  %2793 = vmatpush1.msra.mxu0 0.0
  %2794 = vmatprep.subr.mxu0 0.0
  %2795 = vmatpush1.msra.mxu0 0.0
  %2796 = vmatprep.subr.mxu0 0.0
  %2797 = vmatpush1.msra.mxu0 0.0
  %2798 = vmatprep.subr.mxu0 0.0
  %2799 = vmatpush1.msra.mxu0 0.0
  %2800 = vmatprep.subr.mxu0 0.0
  %2801 = vmatpush1.msra.mxu0 0.0
  %2802 = vmatprep.subr.mxu0 0.0
  %2803 = vmatpush1.msra.mxu0 0.0
  %2804 = vmatprep.subr.mxu0 0.0
  %2805 = vmatpush1.msra.mxu0 0.0
  %2806 = vmatprep.subr.mxu0 0.0
  %2807 = vmatpush1.msra.mxu0 0.0
  %2808 = vmatprep.subr.mxu0 0.0
  %2809 = vmatpush1.msra.mxu0 0.0
  %2810 = vmatprep.subr.mxu0 0.0
  %2811 = vmatpush1.msra.mxu0 0.0
  %2812 = vmatprep.subr.mxu0 0.0
  %2813 = vmatpush1.msra.mxu0 0.0
  %2814 = vmatprep.subr.mxu0 0.0
  %2815 = vmatpush1.msra.mxu0 0.0
  %2816 = vmatprep.subr.mxu0 0.0
  %2817 = vmatpush1.msra.mxu0 0.0
  %2818 = vmatprep.subr.mxu0 0.0
  %2819 = vmatpush1.msra.mxu0 0.0
  %2820 = vmatprep.subr.mxu0 0.0
  %2821 = vmatpush1.msra.mxu0 0.0
  %2822 = vmatprep.subr.mxu0 0.0
  %2823 = vmatpush1.msra.mxu0 0.0
  %2824 = vmatprep.mubr.f32.mxu0 0.0
  %2825 = vmatmul.mubr.f32.gmra.mrb[0].mxu0 %v2758
  %v2826 = vpop.f32.mrb[0].mxu0
  %v2827 = vadd.f32 0.0, %v2826
  %v2828 = vpop.f32.mrb[0].mxu0
  %2829 = vdwg.mxu0
  %2830 = vrot.lane.b32.xlu0 %v2331, 120
  %v2831 = vpop.permute.xlu0 %2830
  %2832 = vrot.lane.b32.xlu0 %v2331, 88
  %v2833 = vpop.permute.xlu0 %2832
  %v2834 = vsel %vm282, %v2831, 0
  %v2836 = vsel %vm282, %v2833, 0
  %2838 = vmatprep.subr.mxu0 0.0
  %2839 = vmatpush1.xpose.msra.mxu0 %v2836
  %2840 = vmatprep.subr.mxu0 0.0
  %2841 = vmatpush1.xpose.msra.mxu0 0.0
  %2842 = vmatprep.subr.mxu0 0.0
  %2843 = vmatpush1.xpose.msra.mxu0 0.0
  %2844 = vmatprep.subr.mxu0 0.0
  %2845 = vmatpush1.xpose.msra.mxu0 0.0
  %2846 = vmatprep.subr.mxu0 0.0
  %2847 = vmatpush1.xpose.msra.mxu0 0.0
  %2848 = vmatprep.subr.mxu0 0.0
  %2849 = vmatpush1.xpose.msra.mxu0 0.0
  %2850 = vmatprep.subr.mxu0 0.0
  %2851 = vmatpush1.xpose.msra.mxu0 0.0
  %2852 = vmatprep.subr.mxu0 0.0
  %2853 = vmatpush1.xpose.msra.mxu0 0.0
  %2854 = vmatprep.subr.mxu0 0.0
  %2855 = vmatpush1.xpose.msra.mxu0 0.0
  %2856 = vmatprep.subr.mxu0 0.0
  %2857 = vmatpush1.xpose.msra.mxu0 0.0
  %2858 = vmatprep.subr.mxu0 0.0
  %2859 = vmatpush1.xpose.msra.mxu0 0.0
  %2860 = vmatprep.subr.mxu0 0.0
  %2861 = vmatpush1.xpose.msra.mxu0 0.0
  %2862 = vmatprep.subr.mxu0 0.0
  %2863 = vmatpush1.xpose.msra.mxu0 0.0
  %2864 = vmatprep.subr.mxu0 0.0
  %2865 = vmatpush1.xpose.msra.mxu0 0.0
  %2866 = vmatprep.subr.mxu0 0.0
  %2867 = vmatpush1.xpose.msra.mxu0 0.0
  %2868 = vmatprep.subr.mxu0 0.0
  %2869 = vmatpush1.xpose.msra.mxu0 0.0
  %2870 = vmatprep.subr.mxu0 0.0
  %2871 = vmatpush1.xpose.msra.mxu0 0.0
  %2872 = vmatprep.subr.mxu0 0.0
  %2873 = vmatpush1.xpose.msra.mxu0 0.0
  %2874 = vmatprep.subr.mxu0 0.0
  %2875 = vmatpush1.xpose.msra.mxu0 0.0
  %2876 = vmatprep.subr.mxu0 0.0
  %2877 = vmatpush1.xpose.msra.mxu0 0.0
  %2878 = vmatprep.subr.mxu0 0.0
  %2879 = vmatpush1.xpose.msra.mxu0 0.0
  %2880 = vmatprep.subr.mxu0 0.0
  %2881 = vmatpush1.xpose.msra.mxu0 0.0
  %2882 = vmatprep.subr.mxu0 0.0
  %2883 = vmatpush1.xpose.msra.mxu0 0.0
  %2884 = vmatprep.subr.mxu0 0.0
  %2885 = vmatpush1.xpose.msra.mxu0 0.0
  %2886 = vmatprep.subr.mxu0 0.0
  %2887 = vmatpush1.xpose.msra.mxu0 0.0
  %2888 = vmatprep.subr.mxu0 0.0
  %2889 = vmatpush1.xpose.msra.mxu0 0.0
  %2890 = vmatprep.subr.mxu0 0.0
  %2891 = vmatpush1.xpose.msra.mxu0 0.0
  %2892 = vmatprep.subr.mxu0 0.0
  %2893 = vmatpush1.xpose.msra.mxu0 0.0
  %2894 = vmatprep.subr.mxu0 0.0
  %2895 = vmatpush1.xpose.msra.mxu0 0.0
  %2896 = vmatprep.subr.mxu0 0.0
  %2897 = vmatpush1.xpose.msra.mxu0 0.0
  %2898 = vmatprep.subr.mxu0 0.0
  %2899 = vmatpush1.xpose.msra.mxu0 0.0
  %2900 = vmatprep.subr.mxu0 0.0
  %2901 = vmatpush1.xpose.msra.mxu0 0.0
  %2902 = vmatprep.mubr.f32.mxu0 0.0
  %2903 = vmatmul.mubr.f32.gmra.mrb[0].mxu0 %v2834
  %v2904 = vpop.f32.mrb[0].mxu0
  %v2905 = vadd.f32 0.0, %v2904
  %v2906 = vpop.f32.mrb[0].mxu0
  %2907 = vdwg.mxu0
  %v2908 = vmul.f32 %v2905, 0.35355338
  %v2909 = vsel %vm282, %v2908, -inf
  %2910 = vmax.xlane.f32.xlu0 %v2909
  %v2911 = vpop.xlane.xlu0 %2910
  %v2912 = vsub.f32 %v2908, %v2911
  %v2913 = vmul.f32 %v2912, 1.442695
  %v2914 = vpow.pop %v2913
  %v2915 = vsel %vm282, %v2914, 0.0
  %2916 = vadd.xlane.f32.xlu0 %v2915
  %v2917 = vpop.xlane.xlu0 %2916
  %v2918 = vrcp.pop %v2917
  %v2919 = vmul.f32 %v2914, %v2918
  %2920 = vrot.lane.b32.xlu0 %v2331, 56
  %v2921 = vpop.permute.xlu0 %2920
  %v2924 = vsel %vm282, %v2919, 0
  %2926 = vmatprep.subr.mxu0 0.0
  %2927 = vmatpush1.msra.mxu0 %v2921
  %2928 = vmatprep.subr.mxu0 0.0
  %2929 = vmatpush1.msra.mxu0 0.0
  %2930 = vmatprep.subr.mxu0 0.0
  %2931 = vmatpush1.msra.mxu0 0.0
  %2932 = vmatprep.subr.mxu0 0.0
  %2933 = vmatpush1.msra.mxu0 0.0
  %2934 = vmatprep.subr.mxu0 0.0
  %2935 = vmatpush1.msra.mxu0 0.0
  %2936 = vmatprep.subr.mxu0 0.0
  %2937 = vmatpush1.msra.mxu0 0.0
  %2938 = vmatprep.subr.mxu0 0.0
  %2939 = vmatpush1.msra.mxu0 0.0
  %2940 = vmatprep.subr.mxu0 0.0
  %2941 = vmatpush1.msra.mxu0 0.0
  %2942 = vmatprep.subr.mxu0 0.0
  %2943 = vmatpush1.msra.mxu0 0.0
  %2944 = vmatprep.subr.mxu0 0.0
  %2945 = vmatpush1.msra.mxu0 0.0
  %2946 = vmatprep.subr.mxu0 0.0
  %2947 = vmatpush1.msra.mxu0 0.0
  %2948 = vmatprep.subr.mxu0 0.0
  %2949 = vmatpush1.msra.mxu0 0.0
  %2950 = vmatprep.subr.mxu0 0.0
  %2951 = vmatpush1.msra.mxu0 0.0
  %2952 = vmatprep.subr.mxu0 0.0
  %2953 = vmatpush1.msra.mxu0 0.0
  %2954 = vmatprep.subr.mxu0 0.0
  %2955 = vmatpush1.msra.mxu0 0.0
  %2956 = vmatprep.subr.mxu0 0.0
  %2957 = vmatpush1.msra.mxu0 0.0
  %2958 = vmatprep.subr.mxu0 0.0
  %2959 = vmatpush1.msra.mxu0 0.0
  %2960 = vmatprep.subr.mxu0 0.0
  %2961 = vmatpush1.msra.mxu0 0.0
  %2962 = vmatprep.subr.mxu0 0.0
  %2963 = vmatpush1.msra.mxu0 0.0
  %2964 = vmatprep.subr.mxu0 0.0
  %2965 = vmatpush1.msra.mxu0 0.0
  %2966 = vmatprep.subr.mxu0 0.0
  %2967 = vmatpush1.msra.mxu0 0.0
  %2968 = vmatprep.subr.mxu0 0.0
  %2969 = vmatpush1.msra.mxu0 0.0
  %2970 = vmatprep.subr.mxu0 0.0
  %2971 = vmatpush1.msra.mxu0 0.0
  %2972 = vmatprep.subr.mxu0 0.0
  %2973 = vmatpush1.msra.mxu0 0.0
  %2974 = vmatprep.subr.mxu0 0.0
  %2975 = vmatpush1.msra.mxu0 0.0
  %2976 = vmatprep.subr.mxu0 0.0
  %2977 = vmatpush1.msra.mxu0 0.0
  %2978 = vmatprep.subr.mxu0 0.0
  %2979 = vmatpush1.msra.mxu0 0.0
  %2980 = vmatprep.subr.mxu0 0.0
  %2981 = vmatpush1.msra.mxu0 0.0
  %2982 = vmatprep.subr.mxu0 0.0
  %2983 = vmatpush1.msra.mxu0 0.0
  %2984 = vmatprep.subr.mxu0 0.0
  %2985 = vmatpush1.msra.mxu0 0.0
  %2986 = vmatprep.subr.mxu0 0.0
  %2987 = vmatpush1.msra.mxu0 0.0
  %2988 = vmatprep.subr.mxu0 0.0
  %2989 = vmatpush1.msra.mxu0 0.0
  %2990 = vmatprep.mubr.f32.mxu0 0.0
  %2991 = vmatmul.mubr.f32.gmra.mrb[0].mxu0 %v2924
  %v2992 = vpop.f32.mrb[0].mxu0
  %v2993 = vadd.f32 0.0, %v2992
  %v2994 = vpop.f32.mrb[0].mxu0
  %2995 = vdwg.mxu0
  %v2997 = vsel %vm282, %v2827, 0
  %v3000 = vsel %vm282, %v2993, 0
  %3002 = vmatprep.subr.mxu0 0.0
  %3003 = vmatpush1.msra.mxu0 %v2216
  %3004 = vmatprep.subr.mxu0 0.0
  %3005 = vmatpush1.msra.mxu0 0.0
  %3006 = vmatprep.subr.mxu0 0.0
  %3007 = vmatpush1.msra.mxu0 0.0
  %3008 = vmatprep.subr.mxu0 0.0
  %3009 = vmatpush1.msra.mxu0 0.0
  %3010 = vmatprep.subr.mxu0 0.0
  %3011 = vmatpush1.msra.mxu0 0.0
  %3012 = vmatprep.subr.mxu0 0.0
  %3013 = vmatpush1.msra.mxu0 0.0
  %3014 = vmatprep.subr.mxu0 0.0
  %3015 = vmatpush1.msra.mxu0 0.0
  %3016 = vmatprep.subr.mxu0 0.0
  %3017 = vmatpush1.msra.mxu0 0.0
  %3018 = vmatprep.subr.mxu0 0.0
  %3019 = vmatpush1.msra.mxu0 0.0
  %3020 = vmatprep.subr.mxu0 0.0
  %3021 = vmatpush1.msra.mxu0 0.0
  %3022 = vmatprep.subr.mxu0 0.0
  %3023 = vmatpush1.msra.mxu0 0.0
  %3024 = vmatprep.subr.mxu0 0.0
  %3025 = vmatpush1.msra.mxu0 0.0
  %3026 = vmatprep.subr.mxu0 0.0
  %3027 = vmatpush1.msra.mxu0 0.0
  %3028 = vmatprep.subr.mxu0 0.0
  %3029 = vmatpush1.msra.mxu0 0.0
  %3030 = vmatprep.subr.mxu0 0.0
  %3031 = vmatpush1.msra.mxu0 0.0
  %3032 = vmatprep.subr.mxu0 0.0
  %3033 = vmatpush1.msra.mxu0 0.0
  %3034 = vmatprep.subr.mxu0 0.0
  %3035 = vmatpush1.msra.mxu0 0.0
  %3036 = vmatprep.subr.mxu0 0.0
  %3037 = vmatpush1.msra.mxu0 0.0
  %3038 = vmatprep.subr.mxu0 0.0
  %3039 = vmatpush1.msra.mxu0 0.0
  %3040 = vmatprep.subr.mxu0 0.0
  %3041 = vmatpush1.msra.mxu0 0.0
  %3042 = vmatprep.subr.mxu0 0.0
  %3043 = vmatpush1.msra.mxu0 0.0
  %3044 = vmatprep.subr.mxu0 0.0
  %3045 = vmatpush1.msra.mxu0 0.0
  %3046 = vmatprep.subr.mxu0 0.0
  %3047 = vmatpush1.msra.mxu0 0.0
  %3048 = vmatprep.subr.mxu0 0.0
  %3049 = vmatpush1.msra.mxu0 0.0
  %3050 = vmatprep.subr.mxu0 0.0
  %3051 = vmatpush1.msra.mxu0 0.0
  %3052 = vmatprep.subr.mxu0 0.0
  %3053 = vmatpush1.msra.mxu0 0.0
  %3054 = vmatprep.subr.mxu0 0.0
  %3055 = vmatpush1.msra.mxu0 0.0
  %3056 = vmatprep.subr.mxu0 0.0
  %3057 = vmatpush1.msra.mxu0 0.0
  %3058 = vmatprep.subr.mxu0 0.0
  %3059 = vmatpush1.msra.mxu0 0.0
  %3060 = vmatprep.subr.mxu0 0.0
  %3061 = vmatpush1.msra.mxu0 0.0
  %3062 = vmatprep.subr.mxu0 0.0
  %3063 = vmatpush1.msra.mxu0 0.0
  %3064 = vmatprep.subr.mxu0 0.0
  %3065 = vmatpush1.msra.mxu0 0.0
  %3066 = vmatprep.mubr.f32.mxu0 0.0
  %3067 = vmatmul.mubr.f32.gmra.mrb[0].mxu0 %v2997
  %v3068 = vpop.f32.mrb[0].mxu0
  %v3069 = vadd.f32 0.0, %v3068
  %v3070 = vpop.f32.mrb[0].mxu0
  %3071 = vmatprep.mubr.f32.mxu0 0.0
  %3072 = vmatmul.mubr.f32.gmra.mrb[0].mxu0 %v3000
  %v3073 = vpop.f32.mrb[0].mxu0
  %v3074 = vadd.f32 0.0, %v3073
  %v3075 = vpop.f32.mrb[0].mxu0
  %3076 = vdwg.mxu0
  %v3078 = vsel %vm282, %v2496, 0
  %v3081 = vsel %vm282, %v2661, 0
  %3083 = vmatprep.subr.mxu0 0.0
  %3084 = vmatpush1.msra.mxu0 %v2215
  %3085 = vmatprep.subr.mxu0 0.0
  %3086 = vmatpush1.msra.mxu0 0.0
  %3087 = vmatprep.subr.mxu0 0.0
  %3088 = vmatpush1.msra.mxu0 0.0
  %3089 = vmatprep.subr.mxu0 0.0
  %3090 = vmatpush1.msra.mxu0 0.0
  %3091 = vmatprep.subr.mxu0 0.0
  %3092 = vmatpush1.msra.mxu0 0.0
  %3093 = vmatprep.subr.mxu0 0.0
  %3094 = vmatpush1.msra.mxu0 0.0
  %3095 = vmatprep.subr.mxu0 0.0
  %3096 = vmatpush1.msra.mxu0 0.0
  %3097 = vmatprep.subr.mxu0 0.0
  %3098 = vmatpush1.msra.mxu0 0.0
  %3099 = vmatprep.subr.mxu0 0.0
  %3100 = vmatpush1.msra.mxu0 0.0
  %3101 = vmatprep.subr.mxu0 0.0
  %3102 = vmatpush1.msra.mxu0 0.0
  %3103 = vmatprep.subr.mxu0 0.0
  %3104 = vmatpush1.msra.mxu0 0.0
  %3105 = vmatprep.subr.mxu0 0.0
  %3106 = vmatpush1.msra.mxu0 0.0
  %3107 = vmatprep.subr.mxu0 0.0
  %3108 = vmatpush1.msra.mxu0 0.0
  %3109 = vmatprep.subr.mxu0 0.0
  %3110 = vmatpush1.msra.mxu0 0.0
  %3111 = vmatprep.subr.mxu0 0.0
  %3112 = vmatpush1.msra.mxu0 0.0
  %3113 = vmatprep.subr.mxu0 0.0
  %3114 = vmatpush1.msra.mxu0 0.0
  %3115 = vmatprep.subr.mxu0 0.0
  %3116 = vmatpush1.msra.mxu0 0.0
  %3117 = vmatprep.subr.mxu0 0.0
  %3118 = vmatpush1.msra.mxu0 0.0
  %3119 = vmatprep.subr.mxu0 0.0
  %3120 = vmatpush1.msra.mxu0 0.0
  %3121 = vmatprep.subr.mxu0 0.0
  %3122 = vmatpush1.msra.mxu0 0.0
  %3123 = vmatprep.subr.mxu0 0.0
  %3124 = vmatpush1.msra.mxu0 0.0
  %3125 = vmatprep.subr.mxu0 0.0
  %3126 = vmatpush1.msra.mxu0 0.0
  %3127 = vmatprep.subr.mxu0 0.0
  %3128 = vmatpush1.msra.mxu0 0.0
  %3129 = vmatprep.subr.mxu0 0.0
  %3130 = vmatpush1.msra.mxu0 0.0
  %3131 = vmatprep.subr.mxu0 0.0
  %3132 = vmatpush1.msra.mxu0 0.0
  %3133 = vmatprep.subr.mxu0 0.0
  %3134 = vmatpush1.msra.mxu0 0.0
  %3135 = vmatprep.subr.mxu0 0.0
  %3136 = vmatpush1.msra.mxu0 0.0
  %3137 = vmatprep.subr.mxu0 0.0
  %3138 = vmatpush1.msra.mxu0 0.0
  %3139 = vmatprep.subr.mxu0 0.0
  %3140 = vmatpush1.msra.mxu0 0.0
  %3141 = vmatprep.subr.mxu0 0.0
  %3142 = vmatpush1.msra.mxu0 0.0
  %3143 = vmatprep.subr.mxu0 0.0
  %3144 = vmatpush1.msra.mxu0 0.0
  %3145 = vmatprep.subr.mxu0 0.0
  %3146 = vmatpush1.msra.mxu0 0.0
  %3147 = vmatprep.mubr.f32.mxu0 0.0
  %3148 = vmatmul.mubr.f32.gmra.mrb[0].mxu0 %v3078
  %v3149 = vpop.f32.mrb[0].mxu0
  %v3150 = vadd.f32 %v3069, %v3149
  %v3151 = vpop.f32.mrb[0].mxu0
  %3152 = vmatprep.mubr.f32.mxu0 0.0
  %3153 = vmatmul.mubr.f32.gmra.mrb[0].mxu0 %v3081
  %v3154 = vpop.f32.mrb[0].mxu0
  %v3155 = vadd.f32 %v3074, %v3154
  %v3156 = vpop.f32.mrb[0].mxu0
  %3157 = vdwg.mxu0
  %3158 = vrot.lane.b32.xlu0 %v2326, 112
  %v3159 = vpop.permute.xlu0 %3158
  %3160 = vrot.lane.b32.xlu0 %v2326, 80
  %v3161 = vpop.permute.xlu0 %3160
  %v3162 = vsel %vm282, %v3159, 0
  %v3164 = vsel %vm282, %v3161, 0
  %3166 = vmatprep.subr.mxu0 0.0
  %3167 = vmatpush1.xpose.msra.mxu0 %v3164
  %3168 = vmatprep.subr.mxu0 0.0
  %3169 = vmatpush1.xpose.msra.mxu0 0.0
  %3170 = vmatprep.subr.mxu0 0.0
  %3171 = vmatpush1.xpose.msra.mxu0 0.0
  %3172 = vmatprep.subr.mxu0 0.0
  %3173 = vmatpush1.xpose.msra.mxu0 0.0
  %3174 = vmatprep.subr.mxu0 0.0
  %3175 = vmatpush1.xpose.msra.mxu0 0.0
  %3176 = vmatprep.subr.mxu0 0.0
  %3177 = vmatpush1.xpose.msra.mxu0 0.0
  %3178 = vmatprep.subr.mxu0 0.0
  %3179 = vmatpush1.xpose.msra.mxu0 0.0
  %3180 = vmatprep.subr.mxu0 0.0
  %3181 = vmatpush1.xpose.msra.mxu0 0.0
  %3182 = vmatprep.subr.mxu0 0.0
  %3183 = vmatpush1.xpose.msra.mxu0 0.0
  %3184 = vmatprep.subr.mxu0 0.0
  %3185 = vmatpush1.xpose.msra.mxu0 0.0
  %3186 = vmatprep.subr.mxu0 0.0
  %3187 = vmatpush1.xpose.msra.mxu0 0.0
  %3188 = vmatprep.subr.mxu0 0.0
  %3189 = vmatpush1.xpose.msra.mxu0 0.0
  %3190 = vmatprep.subr.mxu0 0.0
  %3191 = vmatpush1.xpose.msra.mxu0 0.0
  %3192 = vmatprep.subr.mxu0 0.0
  %3193 = vmatpush1.xpose.msra.mxu0 0.0
  %3194 = vmatprep.subr.mxu0 0.0
  %3195 = vmatpush1.xpose.msra.mxu0 0.0
  %3196 = vmatprep.subr.mxu0 0.0
  %3197 = vmatpush1.xpose.msra.mxu0 0.0
  %3198 = vmatprep.subr.mxu0 0.0
  %3199 = vmatpush1.xpose.msra.mxu0 0.0
  %3200 = vmatprep.subr.mxu0 0.0
  %3201 = vmatpush1.xpose.msra.mxu0 0.0
  %3202 = vmatprep.subr.mxu0 0.0
  %3203 = vmatpush1.xpose.msra.mxu0 0.0
  %3204 = vmatprep.subr.mxu0 0.0
  %3205 = vmatpush1.xpose.msra.mxu0 0.0
  %3206 = vmatprep.subr.mxu0 0.0
  %3207 = vmatpush1.xpose.msra.mxu0 0.0
  %3208 = vmatprep.subr.mxu0 0.0
  %3209 = vmatpush1.xpose.msra.mxu0 0.0
  %3210 = vmatprep.subr.mxu0 0.0
  %3211 = vmatpush1.xpose.msra.mxu0 0.0
  %3212 = vmatprep.subr.mxu0 0.0
  %3213 = vmatpush1.xpose.msra.mxu0 0.0
  %3214 = vmatprep.subr.mxu0 0.0
  %3215 = vmatpush1.xpose.msra.mxu0 0.0
  %3216 = vmatprep.subr.mxu0 0.0
  %3217 = vmatpush1.xpose.msra.mxu0 0.0
  %3218 = vmatprep.subr.mxu0 0.0
  %3219 = vmatpush1.xpose.msra.mxu0 0.0
  %3220 = vmatprep.subr.mxu0 0.0
  %3221 = vmatpush1.xpose.msra.mxu0 0.0
  %3222 = vmatprep.subr.mxu0 0.0
  %3223 = vmatpush1.xpose.msra.mxu0 0.0
  %3224 = vmatprep.subr.mxu0 0.0
  %3225 = vmatpush1.xpose.msra.mxu0 0.0
  %3226 = vmatprep.subr.mxu0 0.0
  %3227 = vmatpush1.xpose.msra.mxu0 0.0
  %3228 = vmatprep.subr.mxu0 0.0
  %3229 = vmatpush1.xpose.msra.mxu0 0.0
  %3230 = vmatprep.mubr.f32.mxu0 0.0
  %3231 = vmatmul.mubr.f32.gmra.mrb[0].mxu0 %v3162
  %v3232 = vpop.f32.mrb[0].mxu0
  %v3233 = vadd.f32 0.0, %v3232
  %v3234 = vpop.f32.mrb[0].mxu0
  %3235 = vdwg.mxu0
  %v3236 = vmul.f32 %v3233, 0.35355338
  %v3237 = vsel %vm282, %v3236, -inf
  %3238 = vmax.xlane.f32.xlu0 %v3237
  %v3239 = vpop.xlane.xlu0 %3238
  %v3240 = vsub.f32 %v3236, %v3239
  %v3241 = vmul.f32 %v3240, 1.442695
  %v3242 = vpow.pop %v3241
  %v3243 = vsel %vm282, %v3242, 0.0
  %3244 = vadd.xlane.f32.xlu0 %v3243
  %v3245 = vpop.xlane.xlu0 %3244
  %v3246 = vrcp.pop %v3245
  %v3247 = vmul.f32 %v3242, %v3246
  %3248 = vrot.lane.b32.xlu0 %v2326, 48
  %v3249 = vpop.permute.xlu0 %3248
  %v3252 = vsel %vm282, %v3247, 0
  %3254 = vmatprep.subr.mxu0 0.0
  %3255 = vmatpush1.msra.mxu0 %v3249
  %3256 = vmatprep.subr.mxu0 0.0
  %3257 = vmatpush1.msra.mxu0 0.0
  %3258 = vmatprep.subr.mxu0 0.0
  %3259 = vmatpush1.msra.mxu0 0.0
  %3260 = vmatprep.subr.mxu0 0.0
  %3261 = vmatpush1.msra.mxu0 0.0
  %3262 = vmatprep.subr.mxu0 0.0
  %3263 = vmatpush1.msra.mxu0 0.0
  %3264 = vmatprep.subr.mxu0 0.0
  %3265 = vmatpush1.msra.mxu0 0.0
  %3266 = vmatprep.subr.mxu0 0.0
  %3267 = vmatpush1.msra.mxu0 0.0
  %3268 = vmatprep.subr.mxu0 0.0
  %3269 = vmatpush1.msra.mxu0 0.0
  %3270 = vmatprep.subr.mxu0 0.0
  %3271 = vmatpush1.msra.mxu0 0.0
  %3272 = vmatprep.subr.mxu0 0.0
  %3273 = vmatpush1.msra.mxu0 0.0
  %3274 = vmatprep.subr.mxu0 0.0
  %3275 = vmatpush1.msra.mxu0 0.0
  %3276 = vmatprep.subr.mxu0 0.0
  %3277 = vmatpush1.msra.mxu0 0.0
  %3278 = vmatprep.subr.mxu0 0.0
  %3279 = vmatpush1.msra.mxu0 0.0
  %3280 = vmatprep.subr.mxu0 0.0
  %3281 = vmatpush1.msra.mxu0 0.0
  %3282 = vmatprep.subr.mxu0 0.0
  %3283 = vmatpush1.msra.mxu0 0.0
  %3284 = vmatprep.subr.mxu0 0.0
  %3285 = vmatpush1.msra.mxu0 0.0
  %3286 = vmatprep.subr.mxu0 0.0
  %3287 = vmatpush1.msra.mxu0 0.0
  %3288 = vmatprep.subr.mxu0 0.0
  %3289 = vmatpush1.msra.mxu0 0.0
  %3290 = vmatprep.subr.mxu0 0.0
  %3291 = vmatpush1.msra.mxu0 0.0
  %3292 = vmatprep.subr.mxu0 0.0
  %3293 = vmatpush1.msra.mxu0 0.0
  %3294 = vmatprep.subr.mxu0 0.0
  %3295 = vmatpush1.msra.mxu0 0.0
  %3296 = vmatprep.subr.mxu0 0.0
  %3297 = vmatpush1.msra.mxu0 0.0
  %3298 = vmatprep.subr.mxu0 0.0
  %3299 = vmatpush1.msra.mxu0 0.0
  %3300 = vmatprep.subr.mxu0 0.0
  %3301 = vmatpush1.msra.mxu0 0.0
  %3302 = vmatprep.subr.mxu0 0.0
  %3303 = vmatpush1.msra.mxu0 0.0
  %3304 = vmatprep.subr.mxu0 0.0
  %3305 = vmatpush1.msra.mxu0 0.0
  %3306 = vmatprep.subr.mxu0 0.0
  %3307 = vmatpush1.msra.mxu0 0.0
  %3308 = vmatprep.subr.mxu0 0.0
  %3309 = vmatpush1.msra.mxu0 0.0
  %3310 = vmatprep.subr.mxu0 0.0
  %3311 = vmatpush1.msra.mxu0 0.0
  %3312 = vmatprep.subr.mxu0 0.0
  %3313 = vmatpush1.msra.mxu0 0.0
  %3314 = vmatprep.subr.mxu0 0.0
  %3315 = vmatpush1.msra.mxu0 0.0
  %3316 = vmatprep.subr.mxu0 0.0
  %3317 = vmatpush1.msra.mxu0 0.0
  %3318 = vmatprep.mubr.f32.mxu0 0.0
  %3319 = vmatmul.mubr.f32.gmra.mrb[0].mxu0 %v3252
  %v3320 = vpop.f32.mrb[0].mxu0
  %v3321 = vadd.f32 0.0, %v3320
  %v3322 = vpop.f32.mrb[0].mxu0
  %3323 = vdwg.mxu0
  %3324 = vrot.lane.b32.xlu0 %v2331, 112
  %v3325 = vpop.permute.xlu0 %3324
  %3326 = vrot.lane.b32.xlu0 %v2331, 80
  %v3327 = vpop.permute.xlu0 %3326
  %v3328 = vsel %vm282, %v3325, 0
  %v3330 = vsel %vm282, %v3327, 0
  %3332 = vmatprep.subr.mxu0 0.0
  %3333 = vmatpush1.xpose.msra.mxu0 %v3330
  %3334 = vmatprep.subr.mxu0 0.0
  %3335 = vmatpush1.xpose.msra.mxu0 0.0
  %3336 = vmatprep.subr.mxu0 0.0
  %3337 = vmatpush1.xpose.msra.mxu0 0.0
  %3338 = vmatprep.subr.mxu0 0.0
  %3339 = vmatpush1.xpose.msra.mxu0 0.0
  %3340 = vmatprep.subr.mxu0 0.0
  %3341 = vmatpush1.xpose.msra.mxu0 0.0
  %3342 = vmatprep.subr.mxu0 0.0
  %3343 = vmatpush1.xpose.msra.mxu0 0.0
  %3344 = vmatprep.subr.mxu0 0.0
  %3345 = vmatpush1.xpose.msra.mxu0 0.0
  %3346 = vmatprep.subr.mxu0 0.0
  %3347 = vmatpush1.xpose.msra.mxu0 0.0
  %3348 = vmatprep.subr.mxu0 0.0
  %3349 = vmatpush1.xpose.msra.mxu0 0.0
  %3350 = vmatprep.subr.mxu0 0.0
  %3351 = vmatpush1.xpose.msra.mxu0 0.0
  %3352 = vmatprep.subr.mxu0 0.0
  %3353 = vmatpush1.xpose.msra.mxu0 0.0
  %3354 = vmatprep.subr.mxu0 0.0
  %3355 = vmatpush1.xpose.msra.mxu0 0.0
  %3356 = vmatprep.subr.mxu0 0.0
  %3357 = vmatpush1.xpose.msra.mxu0 0.0
  %3358 = vmatprep.subr.mxu0 0.0
  %3359 = vmatpush1.xpose.msra.mxu0 0.0
  %3360 = vmatprep.subr.mxu0 0.0
  %3361 = vmatpush1.xpose.msra.mxu0 0.0
  %3362 = vmatprep.subr.mxu0 0.0
  %3363 = vmatpush1.xpose.msra.mxu0 0.0
  %3364 = vmatprep.subr.mxu0 0.0
  %3365 = vmatpush1.xpose.msra.mxu0 0.0
  %3366 = vmatprep.subr.mxu0 0.0
  %3367 = vmatpush1.xpose.msra.mxu0 0.0
  %3368 = vmatprep.subr.mxu0 0.0
  %3369 = vmatpush1.xpose.msra.mxu0 0.0
  %3370 = vmatprep.subr.mxu0 0.0
  %3371 = vmatpush1.xpose.msra.mxu0 0.0
  %3372 = vmatprep.subr.mxu0 0.0
  %3373 = vmatpush1.xpose.msra.mxu0 0.0
  %3374 = vmatprep.subr.mxu0 0.0
  %3375 = vmatpush1.xpose.msra.mxu0 0.0
  %3376 = vmatprep.subr.mxu0 0.0
  %3377 = vmatpush1.xpose.msra.mxu0 0.0
  %3378 = vmatprep.subr.mxu0 0.0
  %3379 = vmatpush1.xpose.msra.mxu0 0.0
  %3380 = vmatprep.subr.mxu0 0.0
  %3381 = vmatpush1.xpose.msra.mxu0 0.0
  %3382 = vmatprep.subr.mxu0 0.0
  %3383 = vmatpush1.xpose.msra.mxu0 0.0
  %3384 = vmatprep.subr.mxu0 0.0
  %3385 = vmatpush1.xpose.msra.mxu0 0.0
  %3386 = vmatprep.subr.mxu0 0.0
  %3387 = vmatpush1.xpose.msra.mxu0 0.0
  %3388 = vmatprep.subr.mxu0 0.0
  %3389 = vmatpush1.xpose.msra.mxu0 0.0
  %3390 = vmatprep.subr.mxu0 0.0
  %3391 = vmatpush1.xpose.msra.mxu0 0.0
  %3392 = vmatprep.subr.mxu0 0.0
  %3393 = vmatpush1.xpose.msra.mxu0 0.0
  %3394 = vmatprep.subr.mxu0 0.0
  %3395 = vmatpush1.xpose.msra.mxu0 0.0
  %3396 = vmatprep.mubr.f32.mxu0 0.0
  %3397 = vmatmul.mubr.f32.gmra.mrb[0].mxu0 %v3328
  %v3398 = vpop.f32.mrb[0].mxu0
  %v3399 = vadd.f32 0.0, %v3398
  %v3400 = vpop.f32.mrb[0].mxu0
  %3401 = vdwg.mxu0
  %v3402 = vmul.f32 %v3399, 0.35355338
  %v3403 = vsel %vm282, %v3402, -inf
  %3404 = vmax.xlane.f32.xlu0 %v3403
  %v3405 = vpop.xlane.xlu0 %3404
  %v3406 = vsub.f32 %v3402, %v3405
  %v3407 = vmul.f32 %v3406, 1.442695
  %v3408 = vpow.pop %v3407
  %v3409 = vsel %vm282, %v3408, 0.0
  %3410 = vadd.xlane.f32.xlu0 %v3409
  %v3411 = vpop.xlane.xlu0 %3410
  %v3412 = vrcp.pop %v3411
  %v3413 = vmul.f32 %v3408, %v3412
  %3414 = vrot.lane.b32.xlu0 %v2331, 48
  %v3415 = vpop.permute.xlu0 %3414
  %v3418 = vsel %vm282, %v3413, 0
  %3420 = vmatprep.subr.mxu0 0.0
  %3421 = vmatpush1.msra.mxu0 %v3415
  %3422 = vmatprep.subr.mxu0 0.0
  %3423 = vmatpush1.msra.mxu0 0.0
  %3424 = vmatprep.subr.mxu0 0.0
  %3425 = vmatpush1.msra.mxu0 0.0
  %3426 = vmatprep.subr.mxu0 0.0
  %3427 = vmatpush1.msra.mxu0 0.0
  %3428 = vmatprep.subr.mxu0 0.0
  %3429 = vmatpush1.msra.mxu0 0.0
  %3430 = vmatprep.subr.mxu0 0.0
  %3431 = vmatpush1.msra.mxu0 0.0
  %3432 = vmatprep.subr.mxu0 0.0
  %3433 = vmatpush1.msra.mxu0 0.0
  %3434 = vmatprep.subr.mxu0 0.0
  %3435 = vmatpush1.msra.mxu0 0.0
  %3436 = vmatprep.subr.mxu0 0.0
  %3437 = vmatpush1.msra.mxu0 0.0
  %3438 = vmatprep.subr.mxu0 0.0
  %3439 = vmatpush1.msra.mxu0 0.0
  %3440 = vmatprep.subr.mxu0 0.0
  %3441 = vmatpush1.msra.mxu0 0.0
  %3442 = vmatprep.subr.mxu0 0.0
  %3443 = vmatpush1.msra.mxu0 0.0
  %3444 = vmatprep.subr.mxu0 0.0
  %3445 = vmatpush1.msra.mxu0 0.0
  %3446 = vmatprep.subr.mxu0 0.0
  %3447 = vmatpush1.msra.mxu0 0.0
  %3448 = vmatprep.subr.mxu0 0.0
  %3449 = vmatpush1.msra.mxu0 0.0
  %3450 = vmatprep.subr.mxu0 0.0
  %3451 = vmatpush1.msra.mxu0 0.0
  %3452 = vmatprep.subr.mxu0 0.0
  %3453 = vmatpush1.msra.mxu0 0.0
  %3454 = vmatprep.subr.mxu0 0.0
  %3455 = vmatpush1.msra.mxu0 0.0
  %3456 = vmatprep.subr.mxu0 0.0
  %3457 = vmatpush1.msra.mxu0 0.0
  %3458 = vmatprep.subr.mxu0 0.0
  %3459 = vmatpush1.msra.mxu0 0.0
  %3460 = vmatprep.subr.mxu0 0.0
  %3461 = vmatpush1.msra.mxu0 0.0
  %3462 = vmatprep.subr.mxu0 0.0
  %3463 = vmatpush1.msra.mxu0 0.0
  %3464 = vmatprep.subr.mxu0 0.0
  %3465 = vmatpush1.msra.mxu0 0.0
  %3466 = vmatprep.subr.mxu0 0.0
  %3467 = vmatpush1.msra.mxu0 0.0
  %3468 = vmatprep.subr.mxu0 0.0
  %3469 = vmatpush1.msra.mxu0 0.0
  %3470 = vmatprep.subr.mxu0 0.0
  %3471 = vmatpush1.msra.mxu0 0.0
  %3472 = vmatprep.subr.mxu0 0.0
  %3473 = vmatpush1.msra.mxu0 0.0
  %3474 = vmatprep.subr.mxu0 0.0
  %3475 = vmatpush1.msra.mxu0 0.0
  %3476 = vmatprep.subr.mxu0 0.0
  %3477 = vmatpush1.msra.mxu0 0.0
  %3478 = vmatprep.subr.mxu0 0.0
  %3479 = vmatpush1.msra.mxu0 0.0
  %3480 = vmatprep.subr.mxu0 0.0
  %3481 = vmatpush1.msra.mxu0 0.0
  %3482 = vmatprep.subr.mxu0 0.0
  %3483 = vmatpush1.msra.mxu0 0.0
  %3484 = vmatprep.mubr.f32.mxu0 0.0
  %3485 = vmatmul.mubr.f32.gmra.mrb[0].mxu0 %v3418
  %v3486 = vpop.f32.mrb[0].mxu0
  %v3487 = vadd.f32 0.0, %v3486
  %v3488 = vpop.f32.mrb[0].mxu0
  %3489 = vdwg.mxu0
  %v3491 = vsel %vm282, %v3321, 0
  %v3494 = vsel %vm282, %v3487, 0
  %3496 = vmatprep.subr.mxu0 0.0
  %3497 = vmatpush1.msra.mxu0 %v2217
  %3498 = vmatprep.subr.mxu0 0.0
  %3499 = vmatpush1.msra.mxu0 0.0
  %3500 = vmatprep.subr.mxu0 0.0
  %3501 = vmatpush1.msra.mxu0 0.0
  %3502 = vmatprep.subr.mxu0 0.0
  %3503 = vmatpush1.msra.mxu0 0.0
  %3504 = vmatprep.subr.mxu0 0.0
  %3505 = vmatpush1.msra.mxu0 0.0
  %3506 = vmatprep.subr.mxu0 0.0
  %3507 = vmatpush1.msra.mxu0 0.0
  %3508 = vmatprep.subr.mxu0 0.0
  %3509 = vmatpush1.msra.mxu0 0.0
  %3510 = vmatprep.subr.mxu0 0.0
  %3511 = vmatpush1.msra.mxu0 0.0
  %3512 = vmatprep.subr.mxu0 0.0
  %3513 = vmatpush1.msra.mxu0 0.0
  %3514 = vmatprep.subr.mxu0 0.0
  %3515 = vmatpush1.msra.mxu0 0.0
  %3516 = vmatprep.subr.mxu0 0.0
  %3517 = vmatpush1.msra.mxu0 0.0
  %3518 = vmatprep.subr.mxu0 0.0
  %3519 = vmatpush1.msra.mxu0 0.0
  %3520 = vmatprep.subr.mxu0 0.0
  %3521 = vmatpush1.msra.mxu0 0.0
  %3522 = vmatprep.subr.mxu0 0.0
  %3523 = vmatpush1.msra.mxu0 0.0
  %3524 = vmatprep.subr.mxu0 0.0
  %3525 = vmatpush1.msra.mxu0 0.0
  %3526 = vmatprep.subr.mxu0 0.0
  %3527 = vmatpush1.msra.mxu0 0.0
  %3528 = vmatprep.subr.mxu0 0.0
  %3529 = vmatpush1.msra.mxu0 0.0
  %3530 = vmatprep.subr.mxu0 0.0
  %3531 = vmatpush1.msra.mxu0 0.0
  %3532 = vmatprep.subr.mxu0 0.0
  %3533 = vmatpush1.msra.mxu0 0.0
  %3534 = vmatprep.subr.mxu0 0.0
  %3535 = vmatpush1.msra.mxu0 0.0
  %3536 = vmatprep.subr.mxu0 0.0
  %3537 = vmatpush1.msra.mxu0 0.0
  %3538 = vmatprep.subr.mxu0 0.0
  %3539 = vmatpush1.msra.mxu0 0.0
  %3540 = vmatprep.subr.mxu0 0.0
  %3541 = vmatpush1.msra.mxu0 0.0
  %3542 = vmatprep.subr.mxu0 0.0
  %3543 = vmatpush1.msra.mxu0 0.0
  %3544 = vmatprep.subr.mxu0 0.0
  %3545 = vmatpush1.msra.mxu0 0.0
  %3546 = vmatprep.subr.mxu0 0.0
  %3547 = vmatpush1.msra.mxu0 0.0
  %3548 = vmatprep.subr.mxu0 0.0
  %3549 = vmatpush1.msra.mxu0 0.0
  %3550 = vmatprep.subr.mxu0 0.0
  %3551 = vmatpush1.msra.mxu0 0.0
  %3552 = vmatprep.subr.mxu0 0.0
  %3553 = vmatpush1.msra.mxu0 0.0
  %3554 = vmatprep.subr.mxu0 0.0
  %3555 = vmatpush1.msra.mxu0 0.0
  %3556 = vmatprep.subr.mxu0 0.0
  %3557 = vmatpush1.msra.mxu0 0.0
  %3558 = vmatprep.subr.mxu0 0.0
  %3559 = vmatpush1.msra.mxu0 0.0
  %3560 = vmatprep.mubr.f32.mxu0 0.0
  %3561 = vmatmul.mubr.f32.gmra.mrb[0].mxu0 %v3491
  %v3562 = vpop.f32.mrb[0].mxu0
  %v3563 = vadd.f32 0.0, %v3562
  %v3564 = vpop.f32.mrb[0].mxu0
  %3565 = vmatprep.mubr.f32.mxu0 0.0
  %3566 = vmatmul.mubr.f32.gmra.mrb[0].mxu0 %v3494
  %v3567 = vpop.f32.mrb[0].mxu0
  %v3568 = vadd.f32 0.0, %v3567
  %v3569 = vpop.f32.mrb[0].mxu0
  %3570 = vdwg.mxu0
  %v3571 = vadd.f32 %v3150, %v3563
  %v3572 = vadd.f32 %v3155, %v3568
  %3573 = vrot.lane.b32.xlu0 %v2326, 104
  %v3574 = vpop.permute.xlu0 %3573
  %3575 = vrot.lane.b32.xlu0 %v2326, 72
  %v3576 = vpop.permute.xlu0 %3575
  %v3577 = vsel %vm282, %v3574, 0
  %v3579 = vsel %vm282, %v3576, 0
  %3581 = vmatprep.subr.mxu0 0.0
  %3582 = vmatpush1.xpose.msra.mxu0 %v3579
  %3583 = vmatprep.subr.mxu0 0.0
  %3584 = vmatpush1.xpose.msra.mxu0 0.0
  %3585 = vmatprep.subr.mxu0 0.0
  %3586 = vmatpush1.xpose.msra.mxu0 0.0
  %3587 = vmatprep.subr.mxu0 0.0
  %3588 = vmatpush1.xpose.msra.mxu0 0.0
  %3589 = vmatprep.subr.mxu0 0.0
  %3590 = vmatpush1.xpose.msra.mxu0 0.0
  %3591 = vmatprep.subr.mxu0 0.0
  %3592 = vmatpush1.xpose.msra.mxu0 0.0
  %3593 = vmatprep.subr.mxu0 0.0
  %3594 = vmatpush1.xpose.msra.mxu0 0.0
  %3595 = vmatprep.subr.mxu0 0.0
  %3596 = vmatpush1.xpose.msra.mxu0 0.0
  %3597 = vmatprep.subr.mxu0 0.0
  %3598 = vmatpush1.xpose.msra.mxu0 0.0
  %3599 = vmatprep.subr.mxu0 0.0
  %3600 = vmatpush1.xpose.msra.mxu0 0.0
  %3601 = vmatprep.subr.mxu0 0.0
  %3602 = vmatpush1.xpose.msra.mxu0 0.0
  %3603 = vmatprep.subr.mxu0 0.0
  %3604 = vmatpush1.xpose.msra.mxu0 0.0
  %3605 = vmatprep.subr.mxu0 0.0
  %3606 = vmatpush1.xpose.msra.mxu0 0.0
  %3607 = vmatprep.subr.mxu0 0.0
  %3608 = vmatpush1.xpose.msra.mxu0 0.0
  %3609 = vmatprep.subr.mxu0 0.0
  %3610 = vmatpush1.xpose.msra.mxu0 0.0
  %3611 = vmatprep.subr.mxu0 0.0
  %3612 = vmatpush1.xpose.msra.mxu0 0.0
  %3613 = vmatprep.subr.mxu0 0.0
  %3614 = vmatpush1.xpose.msra.mxu0 0.0
  %3615 = vmatprep.subr.mxu0 0.0
  %3616 = vmatpush1.xpose.msra.mxu0 0.0
  %3617 = vmatprep.subr.mxu0 0.0
  %3618 = vmatpush1.xpose.msra.mxu0 0.0
  %3619 = vmatprep.subr.mxu0 0.0
  %3620 = vmatpush1.xpose.msra.mxu0 0.0
  %3621 = vmatprep.subr.mxu0 0.0
  %3622 = vmatpush1.xpose.msra.mxu0 0.0
  %3623 = vmatprep.subr.mxu0 0.0
  %3624 = vmatpush1.xpose.msra.mxu0 0.0
  %3625 = vmatprep.subr.mxu0 0.0
  %3626 = vmatpush1.xpose.msra.mxu0 0.0
  %3627 = vmatprep.subr.mxu0 0.0
  %3628 = vmatpush1.xpose.msra.mxu0 0.0
  %3629 = vmatprep.subr.mxu0 0.0
  %3630 = vmatpush1.xpose.msra.mxu0 0.0
  %3631 = vmatprep.subr.mxu0 0.0
  %3632 = vmatpush1.xpose.msra.mxu0 0.0
  %3633 = vmatprep.subr.mxu0 0.0
  %3634 = vmatpush1.xpose.msra.mxu0 0.0
  %3635 = vmatprep.subr.mxu0 0.0
  %3636 = vmatpush1.xpose.msra.mxu0 0.0
  %3637 = vmatprep.subr.mxu0 0.0
  %3638 = vmatpush1.xpose.msra.mxu0 0.0
  %3639 = vmatprep.subr.mxu0 0.0
  %3640 = vmatpush1.xpose.msra.mxu0 0.0
  %3641 = vmatprep.subr.mxu0 0.0
  %3642 = vmatpush1.xpose.msra.mxu0 0.0
  %3643 = vmatprep.subr.mxu0 0.0
  %3644 = vmatpush1.xpose.msra.mxu0 0.0
  %3645 = vmatprep.mubr.f32.mxu0 0.0
  %3646 = vmatmul.mubr.f32.gmra.mrb[0].mxu0 %v3577
  %v3647 = vpop.f32.mrb[0].mxu0
  %v3648 = vadd.f32 0.0, %v3647
  %v3649 = vpop.f32.mrb[0].mxu0
  %3650 = vdwg.mxu0
  %v3651 = vmul.f32 %v3648, 0.35355338
  %v3652 = vsel %vm282, %v3651, -inf
  %3653 = vmax.xlane.f32.xlu0 %v3652
  %v3654 = vpop.xlane.xlu0 %3653
  %v3655 = vsub.f32 %v3651, %v3654
  %v3656 = vmul.f32 %v3655, 1.442695
  %v3657 = vpow.pop %v3656
  %v3658 = vsel %vm282, %v3657, 0.0
  %3659 = vadd.xlane.f32.xlu0 %v3658
  %v3660 = vpop.xlane.xlu0 %3659
  %v3661 = vrcp.pop %v3660
  %v3662 = vmul.f32 %v3657, %v3661
  %3663 = vrot.lane.b32.xlu0 %v2326, 40
  %v3664 = vpop.permute.xlu0 %3663
  %v3667 = vsel %vm282, %v3662, 0
  %3669 = vmatprep.subr.mxu0 0.0
  %3670 = vmatpush1.msra.mxu0 %v3664
  %3671 = vmatprep.subr.mxu0 0.0
  %3672 = vmatpush1.msra.mxu0 0.0
  %3673 = vmatprep.subr.mxu0 0.0
  %3674 = vmatpush1.msra.mxu0 0.0
  %3675 = vmatprep.subr.mxu0 0.0
  %3676 = vmatpush1.msra.mxu0 0.0
  %3677 = vmatprep.subr.mxu0 0.0
  %3678 = vmatpush1.msra.mxu0 0.0
  %3679 = vmatprep.subr.mxu0 0.0
  %3680 = vmatpush1.msra.mxu0 0.0
  %3681 = vmatprep.subr.mxu0 0.0
  %3682 = vmatpush1.msra.mxu0 0.0
  %3683 = vmatprep.subr.mxu0 0.0
  %3684 = vmatpush1.msra.mxu0 0.0
  %3685 = vmatprep.subr.mxu0 0.0
  %3686 = vmatpush1.msra.mxu0 0.0
  %3687 = vmatprep.subr.mxu0 0.0
  %3688 = vmatpush1.msra.mxu0 0.0
  %3689 = vmatprep.subr.mxu0 0.0
  %3690 = vmatpush1.msra.mxu0 0.0
  %3691 = vmatprep.subr.mxu0 0.0
  %3692 = vmatpush1.msra.mxu0 0.0
  %3693 = vmatprep.subr.mxu0 0.0
  %3694 = vmatpush1.msra.mxu0 0.0
  %3695 = vmatprep.subr.mxu0 0.0
  %3696 = vmatpush1.msra.mxu0 0.0
  %3697 = vmatprep.subr.mxu0 0.0
  %3698 = vmatpush1.msra.mxu0 0.0
  %3699 = vmatprep.subr.mxu0 0.0
  %3700 = vmatpush1.msra.mxu0 0.0
  %3701 = vmatprep.subr.mxu0 0.0
  %3702 = vmatpush1.msra.mxu0 0.0
  %3703 = vmatprep.subr.mxu0 0.0
  %3704 = vmatpush1.msra.mxu0 0.0
  %3705 = vmatprep.subr.mxu0 0.0
  %3706 = vmatpush1.msra.mxu0 0.0
  %3707 = vmatprep.subr.mxu0 0.0
  %3708 = vmatpush1.msra.mxu0 0.0
  %3709 = vmatprep.subr.mxu0 0.0
  %3710 = vmatpush1.msra.mxu0 0.0
  %3711 = vmatprep.subr.mxu0 0.0
  %3712 = vmatpush1.msra.mxu0 0.0
  %3713 = vmatprep.subr.mxu0 0.0
  %3714 = vmatpush1.msra.mxu0 0.0
  %3715 = vmatprep.subr.mxu0 0.0
  %3716 = vmatpush1.msra.mxu0 0.0
  %3717 = vmatprep.subr.mxu0 0.0
  %3718 = vmatpush1.msra.mxu0 0.0
  %3719 = vmatprep.subr.mxu0 0.0
  %3720 = vmatpush1.msra.mxu0 0.0
  %3721 = vmatprep.subr.mxu0 0.0
  %3722 = vmatpush1.msra.mxu0 0.0
  %3723 = vmatprep.subr.mxu0 0.0
  %3724 = vmatpush1.msra.mxu0 0.0
  %3725 = vmatprep.subr.mxu0 0.0
  %3726 = vmatpush1.msra.mxu0 0.0
  %3727 = vmatprep.subr.mxu0 0.0
  %3728 = vmatpush1.msra.mxu0 0.0
  %3729 = vmatprep.subr.mxu0 0.0
  %3730 = vmatpush1.msra.mxu0 0.0
  %3731 = vmatprep.subr.mxu0 0.0
  %3732 = vmatpush1.msra.mxu0 0.0
  %3733 = vmatprep.mubr.f32.mxu0 0.0
  %3734 = vmatmul.mubr.f32.gmra.mrb[0].mxu0 %v3667
  %v3735 = vpop.f32.mrb[0].mxu0
  %v3736 = vadd.f32 0.0, %v3735
  %v3737 = vpop.f32.mrb[0].mxu0
  %3738 = vdwg.mxu0
  %3739 = vrot.lane.b32.xlu0 %v2331, 104
  %v3740 = vpop.permute.xlu0 %3739
  %3741 = vrot.lane.b32.xlu0 %v2331, 72
  %v3742 = vpop.permute.xlu0 %3741
  %v3743 = vsel %vm282, %v3740, 0
  %v3745 = vsel %vm282, %v3742, 0
  %3747 = vmatprep.subr.mxu0 0.0
  %3748 = vmatpush1.xpose.msra.mxu0 %v3745
  %3749 = vmatprep.subr.mxu0 0.0
  %3750 = vmatpush1.xpose.msra.mxu0 0.0
  %3751 = vmatprep.subr.mxu0 0.0
  %3752 = vmatpush1.xpose.msra.mxu0 0.0
  %3753 = vmatprep.subr.mxu0 0.0
  %3754 = vmatpush1.xpose.msra.mxu0 0.0
  %3755 = vmatprep.subr.mxu0 0.0
  %3756 = vmatpush1.xpose.msra.mxu0 0.0
  %3757 = vmatprep.subr.mxu0 0.0
  %3758 = vmatpush1.xpose.msra.mxu0 0.0
  %3759 = vmatprep.subr.mxu0 0.0
  %3760 = vmatpush1.xpose.msra.mxu0 0.0
  %3761 = vmatprep.subr.mxu0 0.0
  %3762 = vmatpush1.xpose.msra.mxu0 0.0
  %3763 = vmatprep.subr.mxu0 0.0
  %3764 = vmatpush1.xpose.msra.mxu0 0.0
  %3765 = vmatprep.subr.mxu0 0.0
  %3766 = vmatpush1.xpose.msra.mxu0 0.0
  %3767 = vmatprep.subr.mxu0 0.0
  %3768 = vmatpush1.xpose.msra.mxu0 0.0
  %3769 = vmatprep.subr.mxu0 0.0
  %3770 = vmatpush1.xpose.msra.mxu0 0.0
  %3771 = vmatprep.subr.mxu0 0.0
  %3772 = vmatpush1.xpose.msra.mxu0 0.0
  %3773 = vmatprep.subr.mxu0 0.0
  %3774 = vmatpush1.xpose.msra.mxu0 0.0
  %3775 = vmatprep.subr.mxu0 0.0
  %3776 = vmatpush1.xpose.msra.mxu0 0.0
  %3777 = vmatprep.subr.mxu0 0.0
  %3778 = vmatpush1.xpose.msra.mxu0 0.0
  %3779 = vmatprep.subr.mxu0 0.0
  %3780 = vmatpush1.xpose.msra.mxu0 0.0
  %3781 = vmatprep.subr.mxu0 0.0
  %3782 = vmatpush1.xpose.msra.mxu0 0.0
  %3783 = vmatprep.subr.mxu0 0.0
  %3784 = vmatpush1.xpose.msra.mxu0 0.0
  %3785 = vmatprep.subr.mxu0 0.0
  %3786 = vmatpush1.xpose.msra.mxu0 0.0
  %3787 = vmatprep.subr.mxu0 0.0
  %3788 = vmatpush1.xpose.msra.mxu0 0.0
  %3789 = vmatprep.subr.mxu0 0.0
  %3790 = vmatpush1.xpose.msra.mxu0 0.0
  %3791 = vmatprep.subr.mxu0 0.0
  %3792 = vmatpush1.xpose.msra.mxu0 0.0
  %3793 = vmatprep.subr.mxu0 0.0
  %3794 = vmatpush1.xpose.msra.mxu0 0.0
  %3795 = vmatprep.subr.mxu0 0.0
  %3796 = vmatpush1.xpose.msra.mxu0 0.0
  %3797 = vmatprep.subr.mxu0 0.0
  %3798 = vmatpush1.xpose.msra.mxu0 0.0
  %3799 = vmatprep.subr.mxu0 0.0
  %3800 = vmatpush1.xpose.msra.mxu0 0.0
  %3801 = vmatprep.subr.mxu0 0.0
  %3802 = vmatpush1.xpose.msra.mxu0 0.0
  %3803 = vmatprep.subr.mxu0 0.0
  %3804 = vmatpush1.xpose.msra.mxu0 0.0
  %3805 = vmatprep.subr.mxu0 0.0
  %3806 = vmatpush1.xpose.msra.mxu0 0.0
  %3807 = vmatprep.subr.mxu0 0.0
  %3808 = vmatpush1.xpose.msra.mxu0 0.0
  %3809 = vmatprep.subr.mxu0 0.0
  %3810 = vmatpush1.xpose.msra.mxu0 0.0
  %3811 = vmatprep.mubr.f32.mxu0 0.0
  %3812 = vmatmul.mubr.f32.gmra.mrb[0].mxu0 %v3743
  %v3813 = vpop.f32.mrb[0].mxu0
  %v3814 = vadd.f32 0.0, %v3813
  %v3815 = vpop.f32.mrb[0].mxu0
  %3816 = vdwg.mxu0
  %v3817 = vmul.f32 %v3814, 0.35355338
  %v3818 = vsel %vm282, %v3817, -inf
  %3819 = vmax.xlane.f32.xlu0 %v3818
  %v3820 = vpop.xlane.xlu0 %3819
  %v3821 = vsub.f32 %v3817, %v3820
  %v3822 = vmul.f32 %v3821, 1.442695
  %v3823 = vpow.pop %v3822
  %v3824 = vsel %vm282, %v3823, 0.0
  %3825 = vadd.xlane.f32.xlu0 %v3824
  %v3826 = vpop.xlane.xlu0 %3825
  %v3827 = vrcp.pop %v3826
  %v3828 = vmul.f32 %v3823, %v3827
  %3829 = vrot.lane.b32.xlu0 %v2331, 40
  %v3830 = vpop.permute.xlu0 %3829
  %v3833 = vsel %vm282, %v3828, 0
  %3835 = vmatprep.subr.mxu0 0.0
  %3836 = vmatpush1.msra.mxu0 %v3830
  %3837 = vmatprep.subr.mxu0 0.0
  %3838 = vmatpush1.msra.mxu0 0.0
  %3839 = vmatprep.subr.mxu0 0.0
  %3840 = vmatpush1.msra.mxu0 0.0
  %3841 = vmatprep.subr.mxu0 0.0
  %3842 = vmatpush1.msra.mxu0 0.0
  %3843 = vmatprep.subr.mxu0 0.0
  %3844 = vmatpush1.msra.mxu0 0.0
  %3845 = vmatprep.subr.mxu0 0.0
  %3846 = vmatpush1.msra.mxu0 0.0
  %3847 = vmatprep.subr.mxu0 0.0
  %3848 = vmatpush1.msra.mxu0 0.0
  %3849 = vmatprep.subr.mxu0 0.0
  %3850 = vmatpush1.msra.mxu0 0.0
  %3851 = vmatprep.subr.mxu0 0.0
  %3852 = vmatpush1.msra.mxu0 0.0
  %3853 = vmatprep.subr.mxu0 0.0
  %3854 = vmatpush1.msra.mxu0 0.0
  %3855 = vmatprep.subr.mxu0 0.0
  %3856 = vmatpush1.msra.mxu0 0.0
  %3857 = vmatprep.subr.mxu0 0.0
  %3858 = vmatpush1.msra.mxu0 0.0
  %3859 = vmatprep.subr.mxu0 0.0
  %3860 = vmatpush1.msra.mxu0 0.0
  %3861 = vmatprep.subr.mxu0 0.0
  %3862 = vmatpush1.msra.mxu0 0.0
  %3863 = vmatprep.subr.mxu0 0.0
  %3864 = vmatpush1.msra.mxu0 0.0
  %3865 = vmatprep.subr.mxu0 0.0
  %3866 = vmatpush1.msra.mxu0 0.0
  %3867 = vmatprep.subr.mxu0 0.0
  %3868 = vmatpush1.msra.mxu0 0.0
  %3869 = vmatprep.subr.mxu0 0.0
  %3870 = vmatpush1.msra.mxu0 0.0
  %3871 = vmatprep.subr.mxu0 0.0
  %3872 = vmatpush1.msra.mxu0 0.0
  %3873 = vmatprep.subr.mxu0 0.0
  %3874 = vmatpush1.msra.mxu0 0.0
  %3875 = vmatprep.subr.mxu0 0.0
  %3876 = vmatpush1.msra.mxu0 0.0
  %3877 = vmatprep.subr.mxu0 0.0
  %3878 = vmatpush1.msra.mxu0 0.0
  %3879 = vmatprep.subr.mxu0 0.0
  %3880 = vmatpush1.msra.mxu0 0.0
  %3881 = vmatprep.subr.mxu0 0.0
  %3882 = vmatpush1.msra.mxu0 0.0
  %3883 = vmatprep.subr.mxu0 0.0
  %3884 = vmatpush1.msra.mxu0 0.0
  %3885 = vmatprep.subr.mxu0 0.0
  %3886 = vmatpush1.msra.mxu0 0.0
  %3887 = vmatprep.subr.mxu0 0.0
  %3888 = vmatpush1.msra.mxu0 0.0
  %3889 = vmatprep.subr.mxu0 0.0
  %3890 = vmatpush1.msra.mxu0 0.0
  %3891 = vmatprep.subr.mxu0 0.0
  %3892 = vmatpush1.msra.mxu0 0.0
  %3893 = vmatprep.subr.mxu0 0.0
  %3894 = vmatpush1.msra.mxu0 0.0
  %3895 = vmatprep.subr.mxu0 0.0
  %3896 = vmatpush1.msra.mxu0 0.0
  %3897 = vmatprep.subr.mxu0 0.0
  %3898 = vmatpush1.msra.mxu0 0.0
  %3899 = vmatprep.mubr.f32.mxu0 0.0
  %3900 = vmatmul.mubr.f32.gmra.mrb[0].mxu0 %v3833
  %v3901 = vpop.f32.mrb[0].mxu0
  %v3902 = vadd.f32 0.0, %v3901
  %v3903 = vpop.f32.mrb[0].mxu0
  %3904 = vdwg.mxu0
  %v3906 = vsel %vm282, %v3736, 0
  %v3909 = vsel %vm282, %v3902, 0
  %3911 = vmatprep.subr.mxu0 0.0
  %3912 = vmatpush1.msra.mxu0 %v2218
  %3913 = vmatprep.subr.mxu0 0.0
  %3914 = vmatpush1.msra.mxu0 0.0
  %3915 = vmatprep.subr.mxu0 0.0
  %3916 = vmatpush1.msra.mxu0 0.0
  %3917 = vmatprep.subr.mxu0 0.0
  %3918 = vmatpush1.msra.mxu0 0.0
  %3919 = vmatprep.subr.mxu0 0.0
  %3920 = vmatpush1.msra.mxu0 0.0
  %3921 = vmatprep.subr.mxu0 0.0
  %3922 = vmatpush1.msra.mxu0 0.0
  %3923 = vmatprep.subr.mxu0 0.0
  %3924 = vmatpush1.msra.mxu0 0.0
  %3925 = vmatprep.subr.mxu0 0.0
  %3926 = vmatpush1.msra.mxu0 0.0
  %3927 = vmatprep.subr.mxu0 0.0
  %3928 = vmatpush1.msra.mxu0 0.0
  %3929 = vmatprep.subr.mxu0 0.0
  %3930 = vmatpush1.msra.mxu0 0.0
  %3931 = vmatprep.subr.mxu0 0.0
  %3932 = vmatpush1.msra.mxu0 0.0
  %3933 = vmatprep.subr.mxu0 0.0
  %3934 = vmatpush1.msra.mxu0 0.0
  %3935 = vmatprep.subr.mxu0 0.0
  %3936 = vmatpush1.msra.mxu0 0.0
  %3937 = vmatprep.subr.mxu0 0.0
  %3938 = vmatpush1.msra.mxu0 0.0
  %3939 = vmatprep.subr.mxu0 0.0
  %3940 = vmatpush1.msra.mxu0 0.0
  %3941 = vmatprep.subr.mxu0 0.0
  %3942 = vmatpush1.msra.mxu0 0.0
  %3943 = vmatprep.subr.mxu0 0.0
  %3944 = vmatpush1.msra.mxu0 0.0
  %3945 = vmatprep.subr.mxu0 0.0
  %3946 = vmatpush1.msra.mxu0 0.0
  %3947 = vmatprep.subr.mxu0 0.0
  %3948 = vmatpush1.msra.mxu0 0.0
  %3949 = vmatprep.subr.mxu0 0.0
  %3950 = vmatpush1.msra.mxu0 0.0
  %3951 = vmatprep.subr.mxu0 0.0
  %3952 = vmatpush1.msra.mxu0 0.0
  %3953 = vmatprep.subr.mxu0 0.0
  %3954 = vmatpush1.msra.mxu0 0.0
  %3955 = vmatprep.subr.mxu0 0.0
  %3956 = vmatpush1.msra.mxu0 0.0
  %3957 = vmatprep.subr.mxu0 0.0
  %3958 = vmatpush1.msra.mxu0 0.0
  %3959 = vmatprep.subr.mxu0 0.0
  %3960 = vmatpush1.msra.mxu0 0.0
  %3961 = vmatprep.subr.mxu0 0.0
  %3962 = vmatpush1.msra.mxu0 0.0
  %3963 = vmatprep.subr.mxu0 0.0
  %3964 = vmatpush1.msra.mxu0 0.0
  %3965 = vmatprep.subr.mxu0 0.0
  %3966 = vmatpush1.msra.mxu0 0.0
  %3967 = vmatprep.subr.mxu0 0.0
  %3968 = vmatpush1.msra.mxu0 0.0
  %3969 = vmatprep.subr.mxu0 0.0
  %3970 = vmatpush1.msra.mxu0 0.0
  %3971 = vmatprep.subr.mxu0 0.0
  %3972 = vmatpush1.msra.mxu0 0.0
  %3973 = vmatprep.subr.mxu0 0.0
  %3974 = vmatpush1.msra.mxu0 0.0
  %3975 = vmatprep.mubr.f32.mxu0 0.0
  %3976 = vmatmul.mubr.f32.gmra.mrb[0].mxu0 %v3906
  %v3977 = vpop.f32.mrb[0].mxu0
  %v3978 = vadd.f32 0.0, %v3977
  %v3979 = vpop.f32.mrb[0].mxu0
  %3980 = vmatprep.mubr.f32.mxu0 0.0
  %3981 = vmatmul.mubr.f32.gmra.mrb[0].mxu0 %v3909
  %v3982 = vpop.f32.mrb[0].mxu0
  %v3983 = vadd.f32 0.0, %v3982
  %v3984 = vpop.f32.mrb[0].mxu0
  %3985 = vdwg.mxu0
  %v3986 = vadd.f32 %v3571, %v3978
  %v3987 = vadd.f32 %v3572, %v3983
  %v3989 = vlaneseq
  %v3990 = vshrl.u32 %v3989, 7
  %v3991 = vsub.s32 0, %v3990
  %v3992 = vrot.slane %v2220, %v3991
  %v3994 = vadd.f32 %v3986, %v3992
  %v3995 = vadd.f32 %v3987, %v3992
  %v3996 = vadd.f32 %v2205, %v3994
  %v3997 = vadd.f32 %v2206, %v3995
  %v3998 = vsel %vm197, %v3996, 0.0
  %3999 = vadd.xlane.f32.xlu0 %v3998
  %v4000 = vpop.xlane.xlu0 %3999
  %v4001 = vsel %vm197, %v3997, 0.0
  %4002 = vadd.xlane.f32.xlu0 %v4001
  %v4003 = vpop.xlane.xlu0 %4002
  %v4004 = vmul.f32 %v4000, %v1950
  %v4005 = vmul.f32 %v4003, %v1950
  %v4006 = vsub.f32 %v3996, %v4004
  %v4007 = vsub.f32 %v3997, %v4005
  %v4008 = vmul.f32 %v4006, %v4006
  %v4009 = vmul.f32 %v4007, %v4007
  %v4010 = vsel %vm197, %v4008, 0.0
  %4011 = vadd.xlane.f32.xlu0 %v4010
  %v4012 = vpop.xlane.xlu0 %4011
  %v4013 = vsel %vm197, %v4009, 0.0
  %4014 = vadd.xlane.f32.xlu0 %v4013
  %v4015 = vpop.xlane.xlu0 %4014
  %v4016 = vmul.f32 %v4012, %v1950
  %v4017 = vmul.f32 %v4015, %v1950
  %v4018 = vadd.f32 %v4016, 1e-05
  %v4019 = vadd.f32 %v4017, 1e-05
  %v4020 = vrsqrt.pop %v4018
  %v4021 = vrsqrt.pop %v4019
  %v4022 = vmul.f32 %v4006, %v4020
  %v4023 = vmul.f32 %v4007, %v4021
  %v4025 = vlaneseq
  %v4026 = vshrl.u32 %v4025, 7
  %v4027 = vsub.s32 0, %v4026
  %v4028 = vrot.slane %v2222, %v4027
  %v4030 = vmul.f32 %v4022, %v4028
  %v4031 = vmul.f32 %v4023, %v4028
  %v4033 = vlaneseq
  %v4034 = vshrl.u32 %v4033, 7
  %v4035 = vsub.s32 0, %v4034
  %v4036 = vrot.slane %v2224, %v4035
  %v4038 = vadd.f32 %v4030, %v4036
  %v4039 = vadd.f32 %v4031, %v4036
  %v4041 = vlaneseq
  %v4042 = vshrl.u32 %v4041, 7
  %v4043 = vsub.s32 0, %v4042
  %v4044 = vrot.slane %v2231, %v4043
  %v4047 = vsel %vm197, %v4038, 0
  %v4050 = vsel %vm197, %v4039, 0
  %4052 = vmatprep.subr.mxu0 0.0
  %4053 = vmatpush1.msra.mxu0 %v2226
  %4054 = vmatprep.subr.mxu0 0.0
  %4055 = vmatpush1.msra.mxu0 %v2227
  %4056 = vmatprep.subr.mxu0 0.0
  %4057 = vmatpush1.msra.mxu0 %v2228
  %4058 = vmatprep.subr.mxu0 0.0
  %4059 = vmatpush1.msra.mxu0 %v2229
  %4060 = vmatprep.subr.mxu0 0.0
  %4061 = vmatpush1.msra.mxu0 0.0
  %4062 = vmatprep.subr.mxu0 0.0
  %4063 = vmatpush1.msra.mxu0 0.0
  %4064 = vmatprep.subr.mxu0 0.0
  %4065 = vmatpush1.msra.mxu0 0.0
  %4066 = vmatprep.subr.mxu0 0.0
  %4067 = vmatpush1.msra.mxu0 0.0
  %4068 = vmatprep.subr.mxu0 0.0
  %4069 = vmatpush1.msra.mxu0 0.0
  %4070 = vmatprep.subr.mxu0 0.0
  %4071 = vmatpush1.msra.mxu0 0.0
  %4072 = vmatprep.subr.mxu0 0.0
  %4073 = vmatpush1.msra.mxu0 0.0
  %4074 = vmatprep.subr.mxu0 0.0
  %4075 = vmatpush1.msra.mxu0 0.0
  %4076 = vmatprep.subr.mxu0 0.0
  %4077 = vmatpush1.msra.mxu0 0.0
  %4078 = vmatprep.subr.mxu0 0.0
  %4079 = vmatpush1.msra.mxu0 0.0
  %4080 = vmatprep.subr.mxu0 0.0
  %4081 = vmatpush1.msra.mxu0 0.0
  %4082 = vmatprep.subr.mxu0 0.0
  %4083 = vmatpush1.msra.mxu0 0.0
  %4084 = vmatprep.subr.mxu0 0.0
  %4085 = vmatpush1.msra.mxu0 0.0
  %4086 = vmatprep.subr.mxu0 0.0
  %4087 = vmatpush1.msra.mxu0 0.0
  %4088 = vmatprep.subr.mxu0 0.0
  %4089 = vmatpush1.msra.mxu0 0.0
  %4090 = vmatprep.subr.mxu0 0.0
  %4091 = vmatpush1.msra.mxu0 0.0
  %4092 = vmatprep.subr.mxu0 0.0
  %4093 = vmatpush1.msra.mxu0 0.0
  %4094 = vmatprep.subr.mxu0 0.0
  %4095 = vmatpush1.msra.mxu0 0.0
  %4096 = vmatprep.subr.mxu0 0.0
  %4097 = vmatpush1.msra.mxu0 0.0
  %4098 = vmatprep.subr.mxu0 0.0
  %4099 = vmatpush1.msra.mxu0 0.0
  %4100 = vmatprep.subr.mxu0 0.0
  %4101 = vmatpush1.msra.mxu0 0.0
  %4102 = vmatprep.subr.mxu0 0.0
  %4103 = vmatpush1.msra.mxu0 0.0
  %4104 = vmatprep.subr.mxu0 0.0
  %4105 = vmatpush1.msra.mxu0 0.0
  %4106 = vmatprep.subr.mxu0 0.0
  %4107 = vmatpush1.msra.mxu0 0.0
  %4108 = vmatprep.subr.mxu0 0.0
  %4109 = vmatpush1.msra.mxu0 0.0
  %4110 = vmatprep.subr.mxu0 0.0
  %4111 = vmatpush1.msra.mxu0 0.0
  %4112 = vmatprep.subr.mxu0 0.0
  %4113 = vmatpush1.msra.mxu0 0.0
  %4114 = vmatprep.subr.mxu0 0.0
  %4115 = vmatpush1.msra.mxu0 0.0
  %4116 = vmatprep.mubr.f32.mxu0 0.0
  %4117 = vmatmul.mubr.f32.gmra.mrb[0].mxu0 %v4047
  %v4118 = vpop.f32.mrb[0].mxu0
  %v4119 = vadd.f32 %v4044, %v4118
  %v4120 = vpop.f32.mrb[0].mxu0
  %4121 = vmatprep.mubr.f32.mxu0 0.0
  %4122 = vmatmul.mubr.f32.gmra.mrb[0].mxu0 %v4050
  %v4123 = vpop.f32.mrb[0].mxu0
  %v4124 = vadd.f32 %v4044, %v4123
  %v4125 = vpop.f32.mrb[0].mxu0
  %4126 = vdwg.mxu0
  %v4127 = vmax.f32 %v4119, 0.0
  %v4128 = vmax.f32 %v4124, 0.0
  %v4130 = vlaneseq
  %v4131 = vshrl.u32 %v4130, 7
  %v4132 = vsub.s32 0, %v4131
  %v4133 = vrot.slane %v2242, %v4132
  %v4136 = vsel %vm81, %v4127, 0
  %v4139 = vsel %vm81, %v4128, 0
  %4141 = vmatprep.subr.mxu0 0.0
  %4142 = vmatpush1.msra.mxu0 %v2233
  %4143 = vmatprep.subr.mxu0 0.0
  %4144 = vmatpush1.msra.mxu0 %v2234
  %4145 = vmatprep.subr.mxu0 0.0
  %4146 = vmatpush1.msra.mxu0 %v2235
  %4147 = vmatprep.subr.mxu0 0.0
  %4148 = vmatpush1.msra.mxu0 %v2236
  %4149 = vmatprep.subr.mxu0 0.0
  %4150 = vmatpush1.msra.mxu0 %v2237
  %4151 = vmatprep.subr.mxu0 0.0
  %4152 = vmatpush1.msra.mxu0 %v2238
  %4153 = vmatprep.subr.mxu0 0.0
  %4154 = vmatpush1.msra.mxu0 %v2239
  %4155 = vmatprep.subr.mxu0 0.0
  %4156 = vmatpush1.msra.mxu0 %v2240
  %4157 = vmatprep.subr.mxu0 0.0
  %4158 = vmatpush1.msra.mxu0 0.0
  %4159 = vmatprep.subr.mxu0 0.0
  %4160 = vmatpush1.msra.mxu0 0.0
  %4161 = vmatprep.subr.mxu0 0.0
  %4162 = vmatpush1.msra.mxu0 0.0
  %4163 = vmatprep.subr.mxu0 0.0
  %4164 = vmatpush1.msra.mxu0 0.0
  %4165 = vmatprep.subr.mxu0 0.0
  %4166 = vmatpush1.msra.mxu0 0.0
  %4167 = vmatprep.subr.mxu0 0.0
  %4168 = vmatpush1.msra.mxu0 0.0
  %4169 = vmatprep.subr.mxu0 0.0
  %4170 = vmatpush1.msra.mxu0 0.0
  %4171 = vmatprep.subr.mxu0 0.0
  %4172 = vmatpush1.msra.mxu0 0.0
  %4173 = vmatprep.subr.mxu0 0.0
  %4174 = vmatpush1.msra.mxu0 0.0
  %4175 = vmatprep.subr.mxu0 0.0
  %4176 = vmatpush1.msra.mxu0 0.0
  %4177 = vmatprep.subr.mxu0 0.0
  %4178 = vmatpush1.msra.mxu0 0.0
  %4179 = vmatprep.subr.mxu0 0.0
  %4180 = vmatpush1.msra.mxu0 0.0
  %4181 = vmatprep.subr.mxu0 0.0
  %4182 = vmatpush1.msra.mxu0 0.0
  %4183 = vmatprep.subr.mxu0 0.0
  %4184 = vmatpush1.msra.mxu0 0.0
  %4185 = vmatprep.subr.mxu0 0.0
  %4186 = vmatpush1.msra.mxu0 0.0
  %4187 = vmatprep.subr.mxu0 0.0
  %4188 = vmatpush1.msra.mxu0 0.0
  %4189 = vmatprep.subr.mxu0 0.0
  %4190 = vmatpush1.msra.mxu0 0.0
  %4191 = vmatprep.subr.mxu0 0.0
  %4192 = vmatpush1.msra.mxu0 0.0
  %4193 = vmatprep.subr.mxu0 0.0
  %4194 = vmatpush1.msra.mxu0 0.0
  %4195 = vmatprep.subr.mxu0 0.0
  %4196 = vmatpush1.msra.mxu0 0.0
  %4197 = vmatprep.subr.mxu0 0.0
  %4198 = vmatpush1.msra.mxu0 0.0
  %4199 = vmatprep.subr.mxu0 0.0
  %4200 = vmatpush1.msra.mxu0 0.0
  %4201 = vmatprep.subr.mxu0 0.0
  %4202 = vmatpush1.msra.mxu0 0.0
  %4203 = vmatprep.subr.mxu0 0.0
  %4204 = vmatpush1.msra.mxu0 0.0
  %4205 = vmatprep.mubr.f32.mxu0 0.0
  %4206 = vmatmul.mubr.f32.gmra.mrb[0].mxu0 %v4136
  %v4207 = vpop.f32.mrb[0].mxu0
  %v4208 = vadd.f32 %v4133, %v4207
  %v4209 = vpop.f32.mrb[0].mxu0
  %4210 = vmatprep.mubr.f32.mxu0 0.0
  %4211 = vmatmul.mubr.f32.gmra.mrb[0].mxu0 %v4139
  %v4212 = vpop.f32.mrb[0].mxu0
  %v4213 = vadd.f32 %v4133, %v4212
  %v4214 = vpop.f32.mrb[0].mxu0
  %4215 = vdwg.mxu0
  %v4216 = vadd.f32 %v4038, %v4208
  %v4217 = vadd.f32 %v4039, %v4213
  %v4218 = vsel %vm197, %v4216, 0.0
  %4219 = vadd.xlane.f32.xlu0 %v4218
  %v4220 = vpop.xlane.xlu0 %4219
  %v4221 = vsel %vm197, %v4217, 0.0
  %4222 = vadd.xlane.f32.xlu0 %v4221
  %v4223 = vpop.xlane.xlu0 %4222
  %v4224 = vmul.f32 %v4220, %v1950
  %v4225 = vmul.f32 %v4223, %v1950
  %v4226 = vsub.f32 %v4216, %v4224
  %v4227 = vsub.f32 %v4217, %v4225
  %v4228 = vmul.f32 %v4226, %v4226
  %v4229 = vmul.f32 %v4227, %v4227
  %v4230 = vsel %vm197, %v4228, 0.0
  %4231 = vadd.xlane.f32.xlu0 %v4230
  %v4232 = vpop.xlane.xlu0 %4231
  %v4233 = vsel %vm197, %v4229, 0.0
  %4234 = vadd.xlane.f32.xlu0 %v4233
  %v4235 = vpop.xlane.xlu0 %4234
  %v4236 = vmul.f32 %v4232, %v1950
  %v4237 = vmul.f32 %v4235, %v1950
  %v4238 = vadd.f32 %v4236, 1e-05
  %v4239 = vadd.f32 %v4237, 1e-05
  %v4240 = vrsqrt.pop %v4238
  %v4241 = vrsqrt.pop %v4239
  %v4242 = vmul.f32 %v4226, %v4240
  %v4243 = vmul.f32 %v4227, %v4241
  %v4245 = vlaneseq
  %v4246 = vshrl.u32 %v4245, 7
  %v4247 = vsub.s32 0, %v4246
  %v4248 = vrot.slane %v2244, %v4247
  %v4250 = vmul.f32 %v4242, %v4248
  %v4251 = vmul.f32 %v4243, %v4248
  %v4253 = vlaneseq
  %v4254 = vshrl.u32 %v4253, 7
  %v4255 = vsub.s32 0, %v4254
  %v4256 = vrot.slane %v2246, %v4255
  %v4258 = vadd.f32 %v4250, %v4256
  %v4259 = vadd.f32 %v4251, %v4256
  %v4260 = vld [vmem:[%s15] sm:$0xff]
  %v4261 = vld [vmem:[%s15 + $0x8] sm:$0xff]
  %v4262 = vld [vmem:[%s15 + $0x10] sm:$0xff]
  %v4263 = vld [vmem:[%s15 + $0x18] sm:$0xff]
  %v4264 = vld [vmem:[%s16] sm:$0x1]
  %v4266 = vlaneseq
  %v4267 = vshrl.u32 %v4266, 7
  %v4268 = vsub.s32 0, %v4267
  %v4269 = vrot.slane %v4264, %v4268
  %v4272 = vsel %vm197, %v4258, 0
  %v4275 = vsel %vm197, %v4259, 0
  %4277 = vmatprep.subr.mxu0 0.0
  %4278 = vmatpush1.msra.mxu0 %v4260
  %4279 = vmatprep.subr.mxu0 0.0
  %4280 = vmatpush1.msra.mxu0 %v4261
  %4281 = vmatprep.subr.mxu0 0.0
  %4282 = vmatpush1.msra.mxu0 %v4262
  %4283 = vmatprep.subr.mxu0 0.0
  %4284 = vmatpush1.msra.mxu0 %v4263
  %4285 = vmatprep.subr.mxu0 0.0
  %4286 = vmatpush1.msra.mxu0 0.0
  %4287 = vmatprep.subr.mxu0 0.0
  %4288 = vmatpush1.msra.mxu0 0.0
  %4289 = vmatprep.subr.mxu0 0.0
  %4290 = vmatpush1.msra.mxu0 0.0
  %4291 = vmatprep.subr.mxu0 0.0
  %4292 = vmatpush1.msra.mxu0 0.0
  %4293 = vmatprep.subr.mxu0 0.0
  %4294 = vmatpush1.msra.mxu0 0.0
  %4295 = vmatprep.subr.mxu0 0.0
  %4296 = vmatpush1.msra.mxu0 0.0
  %4297 = vmatprep.subr.mxu0 0.0
  %4298 = vmatpush1.msra.mxu0 0.0
  %4299 = vmatprep.subr.mxu0 0.0
  %4300 = vmatpush1.msra.mxu0 0.0
  %4301 = vmatprep.subr.mxu0 0.0
  %4302 = vmatpush1.msra.mxu0 0.0
  %4303 = vmatprep.subr.mxu0 0.0
  %4304 = vmatpush1.msra.mxu0 0.0
  %4305 = vmatprep.subr.mxu0 0.0
  %4306 = vmatpush1.msra.mxu0 0.0
  %4307 = vmatprep.subr.mxu0 0.0
  %4308 = vmatpush1.msra.mxu0 0.0
  %4309 = vmatprep.subr.mxu0 0.0
  %4310 = vmatpush1.msra.mxu0 0.0
  %4311 = vmatprep.subr.mxu0 0.0
  %4312 = vmatpush1.msra.mxu0 0.0
  %4313 = vmatprep.subr.mxu0 0.0
  %4314 = vmatpush1.msra.mxu0 0.0
  %4315 = vmatprep.subr.mxu0 0.0
  %4316 = vmatpush1.msra.mxu0 0.0
  %4317 = vmatprep.subr.mxu0 0.0
  %4318 = vmatpush1.msra.mxu0 0.0
  %4319 = vmatprep.subr.mxu0 0.0
  %4320 = vmatpush1.msra.mxu0 0.0
  %4321 = vmatprep.subr.mxu0 0.0
  %4322 = vmatpush1.msra.mxu0 0.0
  %4323 = vmatprep.subr.mxu0 0.0
  %4324 = vmatpush1.msra.mxu0 0.0
  %4325 = vmatprep.subr.mxu0 0.0
  %4326 = vmatpush1.msra.mxu0 0.0
  %4327 = vmatprep.subr.mxu0 0.0
  %4328 = vmatpush1.msra.mxu0 0.0
  %4329 = vmatprep.subr.mxu0 0.0
  %4330 = vmatpush1.msra.mxu0 0.0
  %4331 = vmatprep.subr.mxu0 0.0
  %4332 = vmatpush1.msra.mxu0 0.0
  %4333 = vmatprep.subr.mxu0 0.0
  %4334 = vmatpush1.msra.mxu0 0.0
  %4335 = vmatprep.subr.mxu0 0.0
  %4336 = vmatpush1.msra.mxu0 0.0
  %4337 = vmatprep.subr.mxu0 0.0
  %4338 = vmatpush1.msra.mxu0 0.0
  %4339 = vmatprep.subr.mxu0 0.0
  %4340 = vmatpush1.msra.mxu0 0.0
  %4341 = vmatprep.mubr.f32.mxu0 0.0
  %4342 = vmatmul.mubr.f32.gmra.mrb[0].mxu0 %v4272
  %v4343 = vpop.f32.mrb[0].mxu0
  %v4344 = vadd.f32 %v4269, %v4343
  %v4345 = vpop.f32.mrb[0].mxu0
  %4346 = vmatprep.mubr.f32.mxu0 0.0
  %4347 = vmatmul.mubr.f32.gmra.mrb[0].mxu0 %v4275
  %v4348 = vpop.f32.mrb[0].mxu0
  %v4349 = vadd.f32 %v4269, %v4348
  %v4350 = vpop.f32.mrb[0].mxu0
  %4351 = vdwg.mxu0
  %4352 = vst [vmem:[%s17] sm:$0xff] %v4344
  %4353 = vst [vmem:[%s17 + $0x8] sm:$0xff] %v4349
  // Predicated region
  $region70: #{decoder_forward.1} parent=0 // pred_check
    _
  $region71: #{decoder_forward.1} parent=0 // pred_check_branch
    %4355 = sbr.rel (0) target = $region73
  $region72: #{decoder_forward.1} parent=0 // pred_region
    _
  $region73: #{decoder_forward.1} parent=0 // pred_fallthru
    _
  // Predicated region
  $region74: #{decoder_forward.1} parent=0 // pred_check
    _
  $region75: #{decoder_forward.1} parent=0 // pred_check_branch
    %4357 = sbr.rel (0) target = $region77
  $region76: #{decoder_forward.1} parent=0 // pred_region
    _
  $region77: #{decoder_forward.1} parent=0 // pred_fallthru
    _

</llo_original>
